<compile_context>
chip_gen: v7x
topology: tpu7x:2x2x1
jax: 0.10.0
libtpu: 0.0.40
codegen_flags: <defaults>
</compile_context>

<pallas_src>
import functools
import math

import jax
import jax.numpy as jnp
from jax.experimental import pallas as pl
from jax.experimental.pallas import tpu as pltpu

N_ACTIONS = 12   # len(COMPLEX_MOVEMENT) in gym_super_mario_bros
HEAD_PAD = 128   # lane-dense padded head width (adv cols 0..11, val col 12)


# --------------------------- fused Pallas kernel -----------------------------

def fused_dqn_kernel(xb_ref, w1_ref, b1_ref, w2_ref, b2_ref,
                     wf_ref, bf_ref, wav_ref, bav_ref, q_ref,
                     *, oh1, ow1, oh2, ow2, qk, n_actions):
    """conv1 -> conv2 -> noisy fc -> dueling head for ONE image, all in VMEM.

    xb_ref : (oh1+1, ow1+1, qk) bf16  stride-4 block relayout of the input,
                                      qk = 4*4*in_frames (quadrant patch K)
    w1_ref : (4*qk, 32)  bf16         conv1 weights, quadrant-major rows
    w2_ref : (9*32, 64)  bf16         conv2 weights, tap-major rows
    wf_ref : (oh2*ow2*64, 512) bf16   noisy fc weights, NHWC row order
    wav_ref: (512, 128) bf16          fused adv|val head (column 12 = value)
    q_ref  : (8, 128) f32             lane-dense padded output (row 0 is real)
    """
    f32 = jnp.float32
    bf16 = jnp.bfloat16
    cout1 = w1_ref.shape[1]            # 32
    cout2 = w2_ref.shape[1]            # 64
    hidden = wf_ref.shape[1]           # 512

    xb = xb_ref[...].astype(f32)       # (oh1+1, ow1+1, qk)
    b1 = b1_ref[...]                   # (1, 32) f32
    b2 = b2_ref[...]                   # (1, 64) f32

    # Hoist the small weight tiles out of the spatial loops (VMEM-resident).
    w1q = [w1_ref[pl.ds(q * qk, qk), :] for q in range(4)]          # (qk, 32)
    w2t = [w2_ref[pl.ds(t * cout1, cout1), :] for t in range(9)]    # (32, 64)

    # ---- conv1: 8x8 stride-4 conv as 4 quadrant GEMMs per output row -------
    quads = ((0, 0), (0, 1), (1, 0), (1, 1))
    y1_rows = []                                        # oh1 x (ow1, 32) f32
    for r in range(oh1):
        acc = jnp.zeros((ow1, cout1), f32)
        for q, (di, dj) in enumerate(quads):
            p = xb[r + di, dj:dj + ow1, :].astype(bf16)            # (ow1, qk)
            acc = acc + jnp.dot(p, w1q[q], preferred_element_type=f32)
        y1_rows.append(jnp.maximum(acc + b1, 0.0))

    # ---- conv2: 3x3 stride-1 conv as 9 tap GEMMs per output row ------------
    y2_rows = []                                        # oh2 x (ow2, 64) f32
    for r in range(oh2):
        acc = jnp.zeros((ow2, cout2), f32)
        for i in range(3):
            src = y1_rows[r + i]                                   # (ow1, 32)
            for j in range(3):
                p = src[j:j + ow2, :].astype(bf16)                 # (ow2, 32)
                acc = acc + jnp.dot(p, w2t[i * 3 + j],
                                    preferred_element_type=f32)
        y2_rows.append(jnp.maximum(acc + b2, 0.0))

    # ---- noisy fc: feat (NHWC flatten of y2) @ wf, accumulated row by row so
    # the flatten never needs a lane-crossing reshape inside the kernel ------
    hacc = jnp.zeros((1, hidden), f32)
    for r in range(oh2):
        row = y2_rows[r]                                           # (ow2, 64)
        for c in range(ow2):
            m = r * ow2 + c
            hacc = hacc + jnp.dot(row[c:c + 1, :].astype(bf16),
                                  wf_ref[pl.ds(m * cout2, cout2), :],
                                  preferred_element_type=f32)
    h = jnp.maximum(hacc + bf_ref[...], 0.0).astype(bf16)          # (1, 512)

    # ---- fused dueling head: one lane-dense (512,128) GEMM + masked combine
    av = jnp.dot(h, wav_ref[...], preferred_element_type=f32) + bav_ref[...]
    lane = jax.lax.broadcasted_iota(jnp.int32, av.shape, 1)
    adv_mean = jnp.sum(jnp.where(lane < n_actions, av, 0.0),
                       axis=1, keepdims=True) * (1.0 / n_actions)
    val = jnp.sum(jnp.where(lane == n_actions, av, 0.0),
                  axis=1, keepdims=True)
    qv = av + (val - adv_mean)       # lanes [0, n_actions) are the Q-values
    q_ref[...] = jnp.broadcast_to(qv, q_ref.shape)     # unmasked 128-wide vst


# --------------------------- pallas_call wrapper -----------------------------

def dueling_dqn_forward(x_nchw, kp, *, n_actions=N_ACTIONS):
    """x: (B, in_frames, H, W) float32 NCHW.  Returns (B, n_actions) f32."""
    B, C, H, W = x_nchw.shape
    oh1 = (H - 8) // 4 + 1
    ow1 = (W - 8) // 4 + 1
    oh2, ow2 = oh1 - 2, ow1 - 2
    qk = 16 * C

    # One same-size layout transform of the raw input (NOT an im2col blow-up):
    # (B,H,W,C) -> (B, oh1+1, ow1+1, 4*4*C) stride-4 block layout so the kernel
    # can build conv1 patches with contiguous slices only.
    x = jnp.transpose(x_nchw, (0, 2, 3, 1)).astype(jnp.bfloat16)
    xb = x[:, :4 * (oh1 + 1), :4 * (ow1 + 1), :]
    xb = (xb.reshape(B, oh1 + 1, 4, ow1 + 1, 4, C)
            .transpose(0, 1, 3, 2, 4, 5)
            .reshape(B, oh1 + 1, ow1 + 1, qk))

    kernel = functools.partial(fused_dqn_kernel, oh1=oh1, ow1=ow1,
                               oh2=oh2, ow2=ow2, qk=qk, n_actions=n_actions)

    operands = (xb, kp["w1"], kp["b1"], kp["w2"], kp["b2"],
                kp["wf"], kp["bf"], kp["wav"], kp["bav"])

    # Explicit VMEM budget: resident weights + double-buffered per-image I/O,
    # clamped to [16 MiB (v5e scoped default), 48 MiB (< v7x 64 MiB physical)].
    op_bytes = sum(int(o.size) * o.dtype.itemsize for o in operands)
    op_bytes += B * 8 * HEAD_PAD * 4
    vmem_limit = int(min(max(4 * op_bytes, 16 * 1024 * 1024),
                         48 * 1024 * 1024))

    def full_spec(a):
        nd = a.ndim
        return pl.BlockSpec(a.shape, lambda b: (0,) * nd)

    qpad = pl.pallas_call(
        kernel,
        grid=(B,),
        out_shape=jax.ShapeDtypeStruct((B, 8, HEAD_PAD), jnp.float32),
        in_specs=[
            pl.BlockSpec((None, oh1 + 1, ow1 + 1, qk),
                         lambda b: (b, 0, 0, 0)),
            full_spec(kp["w1"]), full_spec(kp["b1"]),
            full_spec(kp["w2"]), full_spec(kp["b2"]),
            full_spec(kp["wf"]), full_spec(kp["bf"]),
            full_spec(kp["wav"]), full_spec(kp["bav"]),
        ],
        out_specs=pl.BlockSpec((None, 8, HEAD_PAD), lambda b: (b, 0, 0)),
        compiler_params=pltpu.CompilerParams(
            dimension_semantics=("parallel",),
            vmem_limit_bytes=vmem_limit),
    )(*operands)
    return qpad[:, 0, :n_actions]


# --------------------------- parameter construction --------------------------

def _signed_sqrt_noise(key, n):
    x = jax.random.normal(key, (n,), dtype=jnp.float32)
    return jnp.sign(x) * jnp.sqrt(jnp.abs(x))


def make_noisy_linear(key, in_f, out_f, sigma_init=0.5):
    """Deterministic NoisyLinear params; returns effective (w^T, b) for x @ w."""
    k1, k2, k3, k4 = jax.random.split(key, 4)
    bound = 1.0 / math.sqrt(in_f)
    mu_w = jax.random.uniform(k1, (out_f, in_f), jnp.float32, -bound, bound)
    mu_b = jax.random.uniform(k2, (out_f,), jnp.float32, -bound, bound)
    sig_w = jnp.full((out_f, in_f), sigma_init / math.sqrt(in_f), jnp.float32)
    sig_b = jnp.full((out_f,), sigma_init / math.sqrt(out_f), jnp.float32)
    eps_in = _signed_sqrt_noise(k3, in_f)
    eps_out = _signed_sqrt_noise(k4, out_f)
    w = mu_w + sig_w * eps_out[:, None] * eps_in[None, :]   # (out, in)
    b = mu_b + sig_b * eps_out                               # (out,)
    return w.T, b.reshape(1, out_f)                          # (in, out), (1, out)


def make_conv(key, cin, cout, k):
    kw_, kb_ = jax.random.split(key)
    fan_in = cin * k * k
    bound = 1.0 / math.sqrt(fan_in)
    w = jax.random.uniform(kw_, (cout, cin, k, k), jnp.float32, -bound, bound)
    b = jax.random.uniform(kb_, (cout,), jnp.float32, -bound, bound)
    return w, b


def init_params(key, in_frames, spatial, n_actions):
    """PyTorch-convention parameters (NCHW conv weights, NCHW-flatten fc)."""
    o1 = (spatial - 8) // 4 + 1
    o2 = o1 - 3 + 1
    conv_out = 64 * o2 * o2
    k1, k2, k3, k4, k5 = jax.random.split(key, 5)
    w1, b1 = make_conv(k1, in_frames, 32, 8)
    w2, b2 = make_conv(k2, 32, 64, 3)
    fc = make_noisy_linear(k3, conv_out, 512)
    adv = make_noisy_linear(k4, 512, n_actions)
    val = make_noisy_linear(k5, 512, 1)
    return dict(w1=w1, b1=b1, w2=w2, b2=b2, fc=fc, adv=adv, val=val), o2


def prepare_params(params, oh2, ow2, n_actions, head_pad=HEAD_PAD):
    """One-time layout prep for the fused kernel (bf16 GEMM weights):
       conv1 rows regrouped into stride-4 quadrants (di,dj,ki,kj,cin),
       conv2 rows tap-major (kh,kw,cin), fc rows permuted NCHW->NHWC flatten,
       adv/val fused into one 128-wide lane-dense head matrix."""
    w1, w2 = params["w1"], params["w2"]
    cout1, cin1, k1, _ = w1.shape          # (32, C, 8, 8)
    cout2, cin2, k2, _ = w2.shape          # (64, 32, 3, 3)
    assert k1 == 8 and k2 == 3
    w1q = (w1.reshape(cout1, cin1, 2, 4, 2, 4)   # (co, ci, di, ki, dj, kj)
             .transpose(2, 4, 3, 5, 1, 0)        # (di, dj, ki, kj, ci, co)
             .reshape(4 * 16 * cin1, cout1))
    w2t = w2.transpose(2, 3, 1, 0).reshape(k2 * k2 * cin2, cout2)
    b1 = params["b1"].reshape(1, -1).astype(jnp.float32)
    b2 = params["b2"].reshape(1, -1).astype(jnp.float32)

    wf, bf = params["fc"]                  # wf rows are in NCHW-flatten order
    conv_out = wf.shape[0]
    r = jnp.arange(conv_out)               # NHWC row index = (h*ow2 + w)*C + c
    c = r % cout2
    hw = r // cout2
    h = hw // ow2
    w = hw % ow2
    nchw_idx = c * (oh2 * ow2) + h * ow2 + w
    wf_nhwc = wf[nchw_idx]                 # permute rows -> NHWC order

    wa, ba = params["adv"]                 # (512, n_actions), (1, n_actions)
    wv, bv = params["val"]                 # (512, 1), (1, 1)
    hdim = wa.shape[0]
    wav = jnp.zeros((hdim, head_pad), jnp.float32)
    wav = wav.at[:, :n_actions].set(wa).at[:, n_actions].set(wv[:, 0])
    bav = jnp.zeros((1, head_pad), jnp.float32)
    bav = bav.at[:, :n_actions].set(ba).at[:, n_actions].set(bv[:, 0])

    return dict(w1=w1q.astype(jnp.bfloat16), b1=b1,
                w2=w2t.astype(jnp.bfloat16), b2=b2,
                wf=wf_nhwc.astype(jnp.bfloat16), bf=bf.astype(jnp.float32),
                wav=wav.astype(jnp.bfloat16), bav=bav.astype(jnp.float32))


# --------------------------- pure-JAX reference ------------------------------

def _im2col_nhwc(x, kh, kw, stride):
    """Plain-JAX patch extraction (reference path only, never in the kernel)."""
    B, H, W, C = x.shape
    OH = (H - kh) // stride + 1
    OW = (W - kw) // stride + 1
    cols = []
    for i in range(kh):
        for j in range(kw):
            cols.append(x[:, i:i + stride * OH:stride,
                             j:j + stride * OW:stride, :])
    p = jnp.concatenate(cols, axis=-1)
    return p.reshape(B * OH * OW, kh * kw * C), OH, OW


def reference_forward(x_nchw, params, n_actions=N_ACTIONS):
    """Pure-JAX reference with the same bf16-operand / f32-accumulate policy."""
    bf16, f32 = jnp.bfloat16, jnp.float32

    def bdot(a, b):
        return jnp.dot(a.astype(bf16), b.astype(bf16),
                       preferred_element_type=f32)

    B = x_nchw.shape[0]
    x = jnp.transpose(x_nchw, (0, 2, 3, 1))
    p1, oh1, ow1 = _im2col_nhwc(x, 8, 8, 4)
    w1 = params["w1"].transpose(2, 3, 1, 0).reshape(-1, params["w1"].shape[0])
    y1 = jnp.maximum(bdot(p1, w1) + params["b1"][None, :], 0.0)
    y1 = y1.reshape(B, oh1, ow1, -1)
    p2, oh2, ow2 = _im2col_nhwc(y1, 3, 3, 1)
    w2 = params["w2"].transpose(2, 3, 1, 0).reshape(-1, params["w2"].shape[0])
    y2 = jnp.maximum(bdot(p2, w2) + params["b2"][None, :], 0.0)
    y2 = y2.reshape(B, oh2, ow2, -1)
    feat = jnp.transpose(y2, (0, 3, 1, 2)).reshape(B, -1)  # torch NCHW flatten
    wf, bf = params["fc"]
    h = jnp.maximum(bdot(feat, wf) + bf, 0.0)
    wa, ba = params["adv"]
    wv, bv = params["val"]
    adv = bdot(h, wa) + ba
    val = bdot(h, wv) + bv
    return val + adv - adv.mean(axis=1, keepdims=True)


# --------------------------- demo --------------------------------------------

if __name__ == "__main__":
    # Small shapes consistent with the module: batch=2, in_frames=4, spatial=20
    # (conv1 -> 4x4, conv2 -> 2x2, conv_out = 64*2*2 = 256).
    B, C, HW = 2, 4, 20
    key = jax.random.PRNGKey(0)
    kx, kparam = jax.random.split(key)
    x = jax.random.normal(kx, (B, C, HW, HW), dtype=jnp.float32)

    params, o2 = init_params(kparam, in_frames=C, spatial=HW,
                             n_actions=N_ACTIONS)
    kparams = prepare_params(params, oh2=o2, ow2=o2, n_actions=N_ACTIONS)

    fwd = jax.jit(lambda inp: dueling_dqn_forward(inp, kparams))
    q = jax.block_until_ready(fwd(x))

    assert q.shape == (B, N_ACTIONS) and q.dtype == jnp.float32
    assert bool(jnp.all(jnp.isfinite(q)))

    q_ref = reference_forward(x, params)
    assert bool(jnp.allclose(q, q_ref, atol=5e-2, rtol=5e-2)), (
        float(jnp.max(jnp.abs(q - q_ref))))
    print("KERNEL_OK")
</pallas_src>

<mosaic_0001>
module attributes {stable_mosaic.version = 11 : i64} {
  func.func @fused_dqn_kernel(%arg0: i32, %arg1: memref<1x5x5x64xbf16, #tpu.memory_space<vmem>>, %arg2: memref<256x32xbf16, #tpu.memory_space<vmem>>, %arg3: memref<1x32xf32, #tpu.memory_space<vmem>>, %arg4: memref<288x64xbf16, #tpu.memory_space<vmem>>, %arg5: memref<1x64xf32, #tpu.memory_space<vmem>>, %arg6: memref<256x512xbf16, #tpu.memory_space<vmem>>, %arg7: memref<1x512xf32, #tpu.memory_space<vmem>>, %arg8: memref<512x128xbf16, #tpu.memory_space<vmem>>, %arg9: memref<1x128xf32, #tpu.memory_space<vmem>>, %arg10: memref<1x8x128xf32, #tpu.memory_space<vmem>>) attributes {dimension_semantics = [#tpu.dimension_semantics<parallel>], iteration_bounds = array<i64: 2>, scalar_prefetch = 0 : i64, scratch_operands = 0 : i64, tpu.core_type = #tpu.core_type<tc>, window_params = [{transform_indices = @transform_0, window_bounds = array<i64: 1, 5, 5, 64>}, {pipeline_mode = #tpu.pipeline_mode<synchronous>, transform_indices = @transform_1, window_bounds = array<i64: 256, 32>}, {pipeline_mode = #tpu.pipeline_mode<synchronous>, transform_indices = @transform_2, window_bounds = array<i64: 1, 32>}, {pipeline_mode = #tpu.pipeline_mode<synchronous>, transform_indices = @transform_3, window_bounds = array<i64: 288, 64>}, {pipeline_mode = #tpu.pipeline_mode<synchronous>, transform_indices = @transform_4, window_bounds = array<i64: 1, 64>}, {pipeline_mode = #tpu.pipeline_mode<synchronous>, transform_indices = @transform_5, window_bounds = array<i64: 256, 512>}, {pipeline_mode = #tpu.pipeline_mode<synchronous>, transform_indices = @transform_6, window_bounds = array<i64: 1, 512>}, {pipeline_mode = #tpu.pipeline_mode<synchronous>, transform_indices = @transform_7, window_bounds = array<i64: 512, 128>}, {pipeline_mode = #tpu.pipeline_mode<synchronous>, transform_indices = @transform_8, window_bounds = array<i64: 1, 128>}, {transform_indices = @transform_9, window_bounds = array<i64: 1, 8, 128>}]} {
    %c0 = arith.constant 0 : index
    %c0_0 = arith.constant 0 : index
    %c0_1 = arith.constant 0 : index
    %c0_2 = arith.constant 0 : index
    %0 = vector.load %arg1[%c0, %c0_0, %c0_1, %c0_2] : memref<1x5x5x64xbf16, #tpu.memory_space<vmem>>, vector<1x5x5x64xbf16>
    %1 = vector.shape_cast %0 : vector<1x5x5x64xbf16> to vector<5x5x64xbf16>
    %2 = arith.extf %1 : vector<5x5x64xbf16> to vector<5x5x64xf32>
    %c0_3 = arith.constant 0 : index
    %c0_4 = arith.constant 0 : index
    %3 = vector.load %arg3[%c0_3, %c0_4] : memref<1x32xf32, #tpu.memory_space<vmem>>, vector<1x32xf32>
    %c0_5 = arith.constant 0 : index
    %c0_6 = arith.constant 0 : index
    %4 = vector.load %arg5[%c0_5, %c0_6] : memref<1x64xf32, #tpu.memory_space<vmem>>, vector<1x64xf32>
    %c0_7 = arith.constant 0 : index
    %c0_8 = arith.constant 0 : index
    %5 = vector.load %arg2[%c0_7, %c0_8] : memref<256x32xbf16, #tpu.memory_space<vmem>>, vector<64x32xbf16>
    %c64 = arith.constant 64 : index
    %c0_9 = arith.constant 0 : index
    %6 = vector.load %arg2[%c64, %c0_9] : memref<256x32xbf16, #tpu.memory_space<vmem>>, vector<64x32xbf16>
    %c128 = arith.constant 128 : index
    %c0_10 = arith.constant 0 : index
    %7 = vector.load %arg2[%c128, %c0_10] : memref<256x32xbf16, #tpu.memory_space<vmem>>, vector<64x32xbf16>
    %c192 = arith.constant 192 : index
    %c0_11 = arith.constant 0 : index
    %8 = vector.load %arg2[%c192, %c0_11] : memref<256x32xbf16, #tpu.memory_space<vmem>>, vector<64x32xbf16>
    %c0_12 = arith.constant 0 : index
    %c0_13 = arith.constant 0 : index
    %9 = vector.load %arg4[%c0_12, %c0_13] : memref<288x64xbf16, #tpu.memory_space<vmem>>, vector<32x64xbf16>
    %c32 = arith.constant 32 : index
    %c0_14 = arith.constant 0 : index
    %10 = vector.load %arg4[%c32, %c0_14] : memref<288x64xbf16, #tpu.memory_space<vmem>>, vector<32x64xbf16>
    %c64_15 = arith.constant 64 : index
    %c0_16 = arith.constant 0 : index
    %11 = vector.load %arg4[%c64_15, %c0_16] : memref<288x64xbf16, #tpu.memory_space<vmem>>, vector<32x64xbf16>
    %c96 = arith.constant 96 : index
    %c0_17 = arith.constant 0 : index
    %12 = vector.load %arg4[%c96, %c0_17] : memref<288x64xbf16, #tpu.memory_space<vmem>>, vector<32x64xbf16>
    %c128_18 = arith.constant 128 : index
    %c0_19 = arith.constant 0 : index
    %13 = vector.load %arg4[%c128_18, %c0_19] : memref<288x64xbf16, #tpu.memory_space<vmem>>, vector<32x64xbf16>
    %c160 = arith.constant 160 : index
    %c0_20 = arith.constant 0 : index
    %14 = vector.load %arg4[%c160, %c0_20] : memref<288x64xbf16, #tpu.memory_space<vmem>>, vector<32x64xbf16>
    %c192_21 = arith.constant 192 : index
    %c0_22 = arith.constant 0 : index
    %15 = vector.load %arg4[%c192_21, %c0_22] : memref<288x64xbf16, #tpu.memory_space<vmem>>, vector<32x64xbf16>
    %c224 = arith.constant 224 : index
    %c0_23 = arith.constant 0 : index
    %16 = vector.load %arg4[%c224, %c0_23] : memref<288x64xbf16, #tpu.memory_space<vmem>>, vector<32x64xbf16>
    %c256 = arith.constant 256 : index
    %c0_24 = arith.constant 0 : index
    %17 = vector.load %arg4[%c256, %c0_24] : memref<288x64xbf16, #tpu.memory_space<vmem>>, vector<32x64xbf16>
    %cst = arith.constant 0.000000e+00 : f32
    %18 = vector.broadcast %cst : f32 to vector<4x32xf32>
    %19 = vector.extract_strided_slice %2 {offsets = [0, 0, 0], sizes = [1, 4, 64], strides = [1, 1, 1]} : vector<5x5x64xf32> to vector<1x4x64xf32>
    %20 = vector.shape_cast %19 : vector<1x4x64xf32> to vector<4x64xf32>
    %21 = arith.truncf %20 : vector<4x64xf32> to vector<4x64xbf16>
    %cst_25 = arith.constant dense<0.000000e+00> : vector<4x32xf32>
    %22 = tpu.matmul %21, %5, %cst_25 {dimension_numbers = #tpu.dot_dimension_numbers<[1], [0], [0], [1], [0, 0, 1, 1], [], []>} : vector<4x64xbf16>, vector<64x32xbf16>, vector<4x32xf32> -> vector<4x32xf32>
    %23 = arith.addf %18, %22 : vector<4x32xf32>
    %24 = vector.extract_strided_slice %2 {offsets = [0, 1, 0], sizes = [1, 4, 64], strides = [1, 1, 1]} : vector<5x5x64xf32> to vector<1x4x64xf32>
    %25 = vector.shape_cast %24 : vector<1x4x64xf32> to vector<4x64xf32>
    %26 = arith.truncf %25 : vector<4x64xf32> to vector<4x64xbf16>
    %cst_26 = arith.constant dense<0.000000e+00> : vector<4x32xf32>
    %27 = tpu.matmul %26, %6, %cst_26 {dimension_numbers = #tpu.dot_dimension_numbers<[1], [0], [0], [1], [0, 0, 1, 1], [], []>} : vector<4x64xbf16>, vector<64x32xbf16>, vector<4x32xf32> -> vector<4x32xf32>
    %28 = arith.addf %23, %27 : vector<4x32xf32>
    %29 = vector.extract_strided_slice %2 {offsets = [1, 0, 0], sizes = [1, 4, 64], strides = [1, 1, 1]} : vector<5x5x64xf32> to vector<1x4x64xf32>
    %30 = vector.shape_cast %29 : vector<1x4x64xf32> to vector<4x64xf32>
    %31 = arith.truncf %30 : vector<4x64xf32> to vector<4x64xbf16>
    %cst_27 = arith.constant dense<0.000000e+00> : vector<4x32xf32>
    %32 = tpu.matmul %31, %7, %cst_27 {dimension_numbers = #tpu.dot_dimension_numbers<[1], [0], [0], [1], [0, 0, 1, 1], [], []>} : vector<4x64xbf16>, vector<64x32xbf16>, vector<4x32xf32> -> vector<4x32xf32>
    %33 = arith.addf %28, %32 : vector<4x32xf32>
    %34 = vector.extract_strided_slice %2 {offsets = [1, 1, 0], sizes = [1, 4, 64], strides = [1, 1, 1]} : vector<5x5x64xf32> to vector<1x4x64xf32>
    %35 = vector.shape_cast %34 : vector<1x4x64xf32> to vector<4x64xf32>
    %36 = arith.truncf %35 : vector<4x64xf32> to vector<4x64xbf16>
    %cst_28 = arith.constant dense<0.000000e+00> : vector<4x32xf32>
    %37 = tpu.matmul %36, %8, %cst_28 {dimension_numbers = #tpu.dot_dimension_numbers<[1], [0], [0], [1], [0, 0, 1, 1], [], []>} : vector<4x64xbf16>, vector<64x32xbf16>, vector<4x32xf32> -> vector<4x32xf32>
    %38 = arith.addf %33, %37 : vector<4x32xf32>
    %39 = vector.broadcast %3 : vector<1x32xf32> to vector<4x32xf32>
    %40 = arith.addf %38, %39 : vector<4x32xf32>
    %cst_29 = arith.constant 0.000000e+00 : f32
    %41 = vector.broadcast %cst_29 : f32 to vector<4x32xf32>
    %42 = arith.maximumf %40, %41 : vector<4x32xf32>
    %cst_30 = arith.constant 0.000000e+00 : f32
    %43 = vector.broadcast %cst_30 : f32 to vector<4x32xf32>
    %44 = vector.extract_strided_slice %2 {offsets = [1, 0, 0], sizes = [1, 4, 64], strides = [1, 1, 1]} : vector<5x5x64xf32> to vector<1x4x64xf32>
    %45 = vector.shape_cast %44 : vector<1x4x64xf32> to vector<4x64xf32>
    %46 = arith.truncf %45 : vector<4x64xf32> to vector<4x64xbf16>
    %cst_31 = arith.constant dense<0.000000e+00> : vector<4x32xf32>
    %47 = tpu.matmul %46, %5, %cst_31 {dimension_numbers = #tpu.dot_dimension_numbers<[1], [0], [0], [1], [0, 0, 1, 1], [], []>} : vector<4x64xbf16>, vector<64x32xbf16>, vector<4x32xf32> -> vector<4x32xf32>
    %48 = arith.addf %43, %47 : vector<4x32xf32>
    %49 = vector.extract_strided_slice %2 {offsets = [1, 1, 0], sizes = [1, 4, 64], strides = [1, 1, 1]} : vector<5x5x64xf32> to vector<1x4x64xf32>
    %50 = vector.shape_cast %49 : vector<1x4x64xf32> to vector<4x64xf32>
    %51 = arith.truncf %50 : vector<4x64xf32> to vector<4x64xbf16>
    %cst_32 = arith.constant dense<0.000000e+00> : vector<4x32xf32>
    %52 = tpu.matmul %51, %6, %cst_32 {dimension_numbers = #tpu.dot_dimension_numbers<[1], [0], [0], [1], [0, 0, 1, 1], [], []>} : vector<4x64xbf16>, vector<64x32xbf16>, vector<4x32xf32> -> vector<4x32xf32>
    %53 = arith.addf %48, %52 : vector<4x32xf32>
    %54 = vector.extract_strided_slice %2 {offsets = [2, 0, 0], sizes = [1, 4, 64], strides = [1, 1, 1]} : vector<5x5x64xf32> to vector<1x4x64xf32>
    %55 = vector.shape_cast %54 : vector<1x4x64xf32> to vector<4x64xf32>
    %56 = arith.truncf %55 : vector<4x64xf32> to vector<4x64xbf16>
    %cst_33 = arith.constant dense<0.000000e+00> : vector<4x32xf32>
    %57 = tpu.matmul %56, %7, %cst_33 {dimension_numbers = #tpu.dot_dimension_numbers<[1], [0], [0], [1], [0, 0, 1, 1], [], []>} : vector<4x64xbf16>, vector<64x32xbf16>, vector<4x32xf32> -> vector<4x32xf32>
    %58 = arith.addf %53, %57 : vector<4x32xf32>
    %59 = vector.extract_strided_slice %2 {offsets = [2, 1, 0], sizes = [1, 4, 64], strides = [1, 1, 1]} : vector<5x5x64xf32> to vector<1x4x64xf32>
    %60 = vector.shape_cast %59 : vector<1x4x64xf32> to vector<4x64xf32>
    %61 = arith.truncf %60 : vector<4x64xf32> to vector<4x64xbf16>
    %cst_34 = arith.constant dense<0.000000e+00> : vector<4x32xf32>
    %62 = tpu.matmul %61, %8, %cst_34 {dimension_numbers = #tpu.dot_dimension_numbers<[1], [0], [0], [1], [0, 0, 1, 1], [], []>} : vector<4x64xbf16>, vector<64x32xbf16>, vector<4x32xf32> -> vector<4x32xf32>
    %63 = arith.addf %58, %62 : vector<4x32xf32>
    %64 = vector.broadcast %3 : vector<1x32xf32> to vector<4x32xf32>
    %65 = arith.addf %63, %64 : vector<4x32xf32>
    %cst_35 = arith.constant 0.000000e+00 : f32
    %66 = vector.broadcast %cst_35 : f32 to vector<4x32xf32>
    %67 = arith.maximumf %65, %66 : vector<4x32xf32>
    %cst_36 = arith.constant 0.000000e+00 : f32
    %68 = vector.broadcast %cst_36 : f32 to vector<4x32xf32>
    %69 = vector.extract_strided_slice %2 {offsets = [2, 0, 0], sizes = [1, 4, 64], strides = [1, 1, 1]} : vector<5x5x64xf32> to vector<1x4x64xf32>
    %70 = vector.shape_cast %69 : vector<1x4x64xf32> to vector<4x64xf32>
    %71 = arith.truncf %70 : vector<4x64xf32> to vector<4x64xbf16>
    %cst_37 = arith.constant dense<0.000000e+00> : vector<4x32xf32>
    %72 = tpu.matmul %71, %5, %cst_37 {dimension_numbers = #tpu.dot_dimension_numbers<[1], [0], [0], [1], [0, 0, 1, 1], [], []>} : vector<4x64xbf16>, vector<64x32xbf16>, vector<4x32xf32> -> vector<4x32xf32>
    %73 = arith.addf %68, %72 : vector<4x32xf32>
    %74 = vector.extract_strided_slice %2 {offsets = [2, 1, 0], sizes = [1, 4, 64], strides = [1, 1, 1]} : vector<5x5x64xf32> to vector<1x4x64xf32>
    %75 = vector.shape_cast %74 : vector<1x4x64xf32> to vector<4x64xf32>
    %76 = arith.truncf %75 : vector<4x64xf32> to vector<4x64xbf16>
    %cst_38 = arith.constant dense<0.000000e+00> : vector<4x32xf32>
    %77 = tpu.matmul %76, %6, %cst_38 {dimension_numbers = #tpu.dot_dimension_numbers<[1], [0], [0], [1], [0, 0, 1, 1], [], []>} : vector<4x64xbf16>, vector<64x32xbf16>, vector<4x32xf32> -> vector<4x32xf32>
    %78 = arith.addf %73, %77 : vector<4x32xf32>
    %79 = vector.extract_strided_slice %2 {offsets = [3, 0, 0], sizes = [1, 4, 64], strides = [1, 1, 1]} : vector<5x5x64xf32> to vector<1x4x64xf32>
    %80 = vector.shape_cast %79 : vector<1x4x64xf32> to vector<4x64xf32>
    %81 = arith.truncf %80 : vector<4x64xf32> to vector<4x64xbf16>
    %cst_39 = arith.constant dense<0.000000e+00> : vector<4x32xf32>
    %82 = tpu.matmul %81, %7, %cst_39 {dimension_numbers = #tpu.dot_dimension_numbers<[1], [0], [0], [1], [0, 0, 1, 1], [], []>} : vector<4x64xbf16>, vector<64x32xbf16>, vector<4x32xf32> -> vector<4x32xf32>
    %83 = arith.addf %78, %82 : vector<4x32xf32>
    %84 = vector.extract_strided_slice %2 {offsets = [3, 1, 0], sizes = [1, 4, 64], strides = [1, 1, 1]} : vector<5x5x64xf32> to vector<1x4x64xf32>
    %85 = vector.shape_cast %84 : vector<1x4x64xf32> to vector<4x64xf32>
    %86 = arith.truncf %85 : vector<4x64xf32> to vector<4x64xbf16>
    %cst_40 = arith.constant dense<0.000000e+00> : vector<4x32xf32>
    %87 = tpu.matmul %86, %8, %cst_40 {dimension_numbers = #tpu.dot_dimension_numbers<[1], [0], [0], [1], [0, 0, 1, 1], [], []>} : vector<4x64xbf16>, vector<64x32xbf16>, vector<4x32xf32> -> vector<4x32xf32>
    %88 = arith.addf %83, %87 : vector<4x32xf32>
    %89 = vector.broadcast %3 : vector<1x32xf32> to vector<4x32xf32>
    %90 = arith.addf %88, %89 : vector<4x32xf32>
    %cst_41 = arith.constant 0.000000e+00 : f32
    %91 = vector.broadcast %cst_41 : f32 to vector<4x32xf32>
    %92 = arith.maximumf %90, %91 : vector<4x32xf32>
    %cst_42 = arith.constant 0.000000e+00 : f32
    %93 = vector.broadcast %cst_42 : f32 to vector<4x32xf32>
    %94 = vector.extract_strided_slice %2 {offsets = [3, 0, 0], sizes = [1, 4, 64], strides = [1, 1, 1]} : vector<5x5x64xf32> to vector<1x4x64xf32>
    %95 = vector.shape_cast %94 : vector<1x4x64xf32> to vector<4x64xf32>
    %96 = arith.truncf %95 : vector<4x64xf32> to vector<4x64xbf16>
    %cst_43 = arith.constant dense<0.000000e+00> : vector<4x32xf32>
    %97 = tpu.matmul %96, %5, %cst_43 {dimension_numbers = #tpu.dot_dimension_numbers<[1], [0], [0], [1], [0, 0, 1, 1], [], []>} : vector<4x64xbf16>, vector<64x32xbf16>, vector<4x32xf32> -> vector<4x32xf32>
    %98 = arith.addf %93, %97 : vector<4x32xf32>
    %99 = vector.extract_strided_slice %2 {offsets = [3, 1, 0], sizes = [1, 4, 64], strides = [1, 1, 1]} : vector<5x5x64xf32> to vector<1x4x64xf32>
    %100 = vector.shape_cast %99 : vector<1x4x64xf32> to vector<4x64xf32>
    %101 = arith.truncf %100 : vector<4x64xf32> to vector<4x64xbf16>
    %cst_44 = arith.constant dense<0.000000e+00> : vector<4x32xf32>
    %102 = tpu.matmul %101, %6, %cst_44 {dimension_numbers = #tpu.dot_dimension_numbers<[1], [0], [0], [1], [0, 0, 1, 1], [], []>} : vector<4x64xbf16>, vector<64x32xbf16>, vector<4x32xf32> -> vector<4x32xf32>
    %103 = arith.addf %98, %102 : vector<4x32xf32>
    %104 = vector.extract_strided_slice %2 {offsets = [4, 0, 0], sizes = [1, 4, 64], strides = [1, 1, 1]} : vector<5x5x64xf32> to vector<1x4x64xf32>
    %105 = vector.shape_cast %104 : vector<1x4x64xf32> to vector<4x64xf32>
    %106 = arith.truncf %105 : vector<4x64xf32> to vector<4x64xbf16>
    %cst_45 = arith.constant dense<0.000000e+00> : vector<4x32xf32>
    %107 = tpu.matmul %106, %7, %cst_45 {dimension_numbers = #tpu.dot_dimension_numbers<[1], [0], [0], [1], [0, 0, 1, 1], [], []>} : vector<4x64xbf16>, vector<64x32xbf16>, vector<4x32xf32> -> vector<4x32xf32>
    %108 = arith.addf %103, %107 : vector<4x32xf32>
    %109 = vector.extract_strided_slice %2 {offsets = [4, 1, 0], sizes = [1, 4, 64], strides = [1, 1, 1]} : vector<5x5x64xf32> to vector<1x4x64xf32>
    %110 = vector.shape_cast %109 : vector<1x4x64xf32> to vector<4x64xf32>
    %111 = arith.truncf %110 : vector<4x64xf32> to vector<4x64xbf16>
    %cst_46 = arith.constant dense<0.000000e+00> : vector<4x32xf32>
    %112 = tpu.matmul %111, %8, %cst_46 {dimension_numbers = #tpu.dot_dimension_numbers<[1], [0], [0], [1], [0, 0, 1, 1], [], []>} : vector<4x64xbf16>, vector<64x32xbf16>, vector<4x32xf32> -> vector<4x32xf32>
    %113 = arith.addf %108, %112 : vector<4x32xf32>
    %114 = vector.broadcast %3 : vector<1x32xf32> to vector<4x32xf32>
    %115 = arith.addf %113, %114 : vector<4x32xf32>
    %cst_47 = arith.constant 0.000000e+00 : f32
    %116 = vector.broadcast %cst_47 : f32 to vector<4x32xf32>
    %117 = arith.maximumf %115, %116 : vector<4x32xf32>
    %cst_48 = arith.constant 0.000000e+00 : f32
    %118 = vector.broadcast %cst_48 : f32 to vector<2x64xf32>
    %119 = vector.extract_strided_slice %42 {offsets = [0, 0], sizes = [2, 32], strides = [1, 1]} : vector<4x32xf32> to vector<2x32xf32>
    %120 = arith.truncf %119 : vector<2x32xf32> to vector<2x32xbf16>
    %cst_49 = arith.constant dense<0.000000e+00> : vector<2x64xf32>
    %121 = tpu.matmul %120, %9, %cst_49 {dimension_numbers = #tpu.dot_dimension_numbers<[1], [0], [0], [1], [0, 0, 1, 1], [], []>} : vector<2x32xbf16>, vector<32x64xbf16>, vector<2x64xf32> -> vector<2x64xf32>
    %122 = arith.addf %118, %121 : vector<2x64xf32>
    %123 = vector.extract_strided_slice %42 {offsets = [1, 0], sizes = [2, 32], strides = [1, 1]} : vector<4x32xf32> to vector<2x32xf32>
    %124 = arith.truncf %123 : vector<2x32xf32> to vector<2x32xbf16>
    %cst_50 = arith.constant dense<0.000000e+00> : vector<2x64xf32>
    %125 = tpu.matmul %124, %10, %cst_50 {dimension_numbers = #tpu.dot_dimension_numbers<[1], [0], [0], [1], [0, 0, 1, 1], [], []>} : vector<2x32xbf16>, vector<32x64xbf16>, vector<2x64xf32> -> vector<2x64xf32>
    %126 = arith.addf %122, %125 : vector<2x64xf32>
    %127 = vector.extract_strided_slice %42 {offsets = [2, 0], sizes = [2, 32], strides = [1, 1]} : vector<4x32xf32> to vector<2x32xf32>
    %128 = arith.truncf %127 : vector<2x32xf32> to vector<2x32xbf16>
    %cst_51 = arith.constant dense<0.000000e+00> : vector<2x64xf32>
    %129 = tpu.matmul %128, %11, %cst_51 {dimension_numbers = #tpu.dot_dimension_numbers<[1], [0], [0], [1], [0, 0, 1, 1], [], []>} : vector<2x32xbf16>, vector<32x64xbf16>, vector<2x64xf32> -> vector<2x64xf32>
    %130 = arith.addf %126, %129 : vector<2x64xf32>
    %131 = vector.extract_strided_slice %67 {offsets = [0, 0], sizes = [2, 32], strides = [1, 1]} : vector<4x32xf32> to vector<2x32xf32>
    %132 = arith.truncf %131 : vector<2x32xf32> to vector<2x32xbf16>
    %cst_52 = arith.constant dense<0.000000e+00> : vector<2x64xf32>
    %133 = tpu.matmul %132, %12, %cst_52 {dimension_numbers = #tpu.dot_dimension_numbers<[1], [0], [0], [1], [0, 0, 1, 1], [], []>} : vector<2x32xbf16>, vector<32x64xbf16>, vector<2x64xf32> -> vector<2x64xf32>
    %134 = arith.addf %130, %133 : vector<2x64xf32>
    %135 = vector.extract_strided_slice %67 {offsets = [1, 0], sizes = [2, 32], strides = [1, 1]} : vector<4x32xf32> to vector<2x32xf32>
    %136 = arith.truncf %135 : vector<2x32xf32> to vector<2x32xbf16>
    %cst_53 = arith.constant dense<0.000000e+00> : vector<2x64xf32>
    %137 = tpu.matmul %136, %13, %cst_53 {dimension_numbers = #tpu.dot_dimension_numbers<[1], [0], [0], [1], [0, 0, 1, 1], [], []>} : vector<2x32xbf16>, vector<32x64xbf16>, vector<2x64xf32> -> vector<2x64xf32>
    %138 = arith.addf %134, %137 : vector<2x64xf32>
    %139 = vector.extract_strided_slice %67 {offsets = [2, 0], sizes = [2, 32], strides = [1, 1]} : vector<4x32xf32> to vector<2x32xf32>
    %140 = arith.truncf %139 : vector<2x32xf32> to vector<2x32xbf16>
    %cst_54 = arith.constant dense<0.000000e+00> : vector<2x64xf32>
    %141 = tpu.matmul %140, %14, %cst_54 {dimension_numbers = #tpu.dot_dimension_numbers<[1], [0], [0], [1], [0, 0, 1, 1], [], []>} : vector<2x32xbf16>, vector<32x64xbf16>, vector<2x64xf32> -> vector<2x64xf32>
    %142 = arith.addf %138, %141 : vector<2x64xf32>
    %143 = vector.extract_strided_slice %92 {offsets = [0, 0], sizes = [2, 32], strides = [1, 1]} : vector<4x32xf32> to vector<2x32xf32>
    %144 = arith.truncf %143 : vector<2x32xf32> to vector<2x32xbf16>
    %cst_55 = arith.constant dense<0.000000e+00> : vector<2x64xf32>
    %145 = tpu.matmul %144, %15, %cst_55 {dimension_numbers = #tpu.dot_dimension_numbers<[1], [0], [0], [1], [0, 0, 1, 1], [], []>} : vector<2x32xbf16>, vector<32x64xbf16>, vector<2x64xf32> -> vector<2x64xf32>
    %146 = arith.addf %142, %145 : vector<2x64xf32>
    %147 = vector.extract_strided_slice %92 {offsets = [1, 0], sizes = [2, 32], strides = [1, 1]} : vector<4x32xf32> to vector<2x32xf32>
    %148 = arith.truncf %147 : vector<2x32xf32> to vector<2x32xbf16>
    %cst_56 = arith.constant dense<0.000000e+00> : vector<2x64xf32>
    %149 = tpu.matmul %148, %16, %cst_56 {dimension_numbers = #tpu.dot_dimension_numbers<[1], [0], [0], [1], [0, 0, 1, 1], [], []>} : vector<2x32xbf16>, vector<32x64xbf16>, vector<2x64xf32> -> vector<2x64xf32>
    %150 = arith.addf %146, %149 : vector<2x64xf32>
    %151 = vector.extract_strided_slice %92 {offsets = [2, 0], sizes = [2, 32], strides = [1, 1]} : vector<4x32xf32> to vector<2x32xf32>
    %152 = arith.truncf %151 : vector<2x32xf32> to vector<2x32xbf16>
    %cst_57 = arith.constant dense<0.000000e+00> : vector<2x64xf32>
    %153 = tpu.matmul %152, %17, %cst_57 {dimension_numbers = #tpu.dot_dimension_numbers<[1], [0], [0], [1], [0, 0, 1, 1], [], []>} : vector<2x32xbf16>, vector<32x64xbf16>, vector<2x64xf32> -> vector<2x64xf32>
    %154 = arith.addf %150, %153 : vector<2x64xf32>
    %155 = vector.broadcast %4 : vector<1x64xf32> to vector<2x64xf32>
    %156 = arith.addf %154, %155 : vector<2x64xf32>
    %cst_58 = arith.constant 0.000000e+00 : f32
    %157 = vector.broadcast %cst_58 : f32 to vector<2x64xf32>
    %158 = arith.maximumf %156, %157 : vector<2x64xf32>
    %cst_59 = arith.constant 0.000000e+00 : f32
    %159 = vector.broadcast %cst_59 : f32 to vector<2x64xf32>
    %160 = vector.extract_strided_slice %67 {offsets = [0, 0], sizes = [2, 32], strides = [1, 1]} : vector<4x32xf32> to vector<2x32xf32>
    %161 = arith.truncf %160 : vector<2x32xf32> to vector<2x32xbf16>
    %cst_60 = arith.constant dense<0.000000e+00> : vector<2x64xf32>
    %162 = tpu.matmul %161, %9, %cst_60 {dimension_numbers = #tpu.dot_dimension_numbers<[1], [0], [0], [1], [0, 0, 1, 1], [], []>} : vector<2x32xbf16>, vector<32x64xbf16>, vector<2x64xf32> -> vector<2x64xf32>
    %163 = arith.addf %159, %162 : vector<2x64xf32>
    %164 = vector.extract_strided_slice %67 {offsets = [1, 0], sizes = [2, 32], strides = [1, 1]} : vector<4x32xf32> to vector<2x32xf32>
    %165 = arith.truncf %164 : vector<2x32xf32> to vector<2x32xbf16>
    %cst_61 = arith.constant dense<0.000000e+00> : vector<2x64xf32>
    %166 = tpu.matmul %165, %10, %cst_61 {dimension_numbers = #tpu.dot_dimension_numbers<[1], [0], [0], [1], [0, 0, 1, 1], [], []>} : vector<2x32xbf16>, vector<32x64xbf16>, vector<2x64xf32> -> vector<2x64xf32>
    %167 = arith.addf %163, %166 : vector<2x64xf32>
    %168 = vector.extract_strided_slice %67 {offsets = [2, 0], sizes = [2, 32], strides = [1, 1]} : vector<4x32xf32> to vector<2x32xf32>
    %169 = arith.truncf %168 : vector<2x32xf32> to vector<2x32xbf16>
    %cst_62 = arith.constant dense<0.000000e+00> : vector<2x64xf32>
    %170 = tpu.matmul %169, %11, %cst_62 {dimension_numbers = #tpu.dot_dimension_numbers<[1], [0], [0], [1], [0, 0, 1, 1], [], []>} : vector<2x32xbf16>, vector<32x64xbf16>, vector<2x64xf32> -> vector<2x64xf32>
    %171 = arith.addf %167, %170 : vector<2x64xf32>
    %172 = vector.extract_strided_slice %92 {offsets = [0, 0], sizes = [2, 32], strides = [1, 1]} : vector<4x32xf32> to vector<2x32xf32>
    %173 = arith.truncf %172 : vector<2x32xf32> to vector<2x32xbf16>
    %cst_63 = arith.constant dense<0.000000e+00> : vector<2x64xf32>
    %174 = tpu.matmul %173, %12, %cst_63 {dimension_numbers = #tpu.dot_dimension_numbers<[1], [0], [0], [1], [0, 0, 1, 1], [], []>} : vector<2x32xbf16>, vector<32x64xbf16>, vector<2x64xf32> -> vector<2x64xf32>
    %175 = arith.addf %171, %174 : vector<2x64xf32>
    %176 = vector.extract_strided_slice %92 {offsets = [1, 0], sizes = [2, 32], strides = [1, 1]} : vector<4x32xf32> to vector<2x32xf32>
    %177 = arith.truncf %176 : vector<2x32xf32> to vector<2x32xbf16>
    %cst_64 = arith.constant dense<0.000000e+00> : vector<2x64xf32>
    %178 = tpu.matmul %177, %13, %cst_64 {dimension_numbers = #tpu.dot_dimension_numbers<[1], [0], [0], [1], [0, 0, 1, 1], [], []>} : vector<2x32xbf16>, vector<32x64xbf16>, vector<2x64xf32> -> vector<2x64xf32>
    %179 = arith.addf %175, %178 : vector<2x64xf32>
    %180 = vector.extract_strided_slice %92 {offsets = [2, 0], sizes = [2, 32], strides = [1, 1]} : vector<4x32xf32> to vector<2x32xf32>
    %181 = arith.truncf %180 : vector<2x32xf32> to vector<2x32xbf16>
    %cst_65 = arith.constant dense<0.000000e+00> : vector<2x64xf32>
    %182 = tpu.matmul %181, %14, %cst_65 {dimension_numbers = #tpu.dot_dimension_numbers<[1], [0], [0], [1], [0, 0, 1, 1], [], []>} : vector<2x32xbf16>, vector<32x64xbf16>, vector<2x64xf32> -> vector<2x64xf32>
    %183 = arith.addf %179, %182 : vector<2x64xf32>
    %184 = vector.extract_strided_slice %117 {offsets = [0, 0], sizes = [2, 32], strides = [1, 1]} : vector<4x32xf32> to vector<2x32xf32>
    %185 = arith.truncf %184 : vector<2x32xf32> to vector<2x32xbf16>
    %cst_66 = arith.constant dense<0.000000e+00> : vector<2x64xf32>
    %186 = tpu.matmul %185, %15, %cst_66 {dimension_numbers = #tpu.dot_dimension_numbers<[1], [0], [0], [1], [0, 0, 1, 1], [], []>} : vector<2x32xbf16>, vector<32x64xbf16>, vector<2x64xf32> -> vector<2x64xf32>
    %187 = arith.addf %183, %186 : vector<2x64xf32>
    %188 = vector.extract_strided_slice %117 {offsets = [1, 0], sizes = [2, 32], strides = [1, 1]} : vector<4x32xf32> to vector<2x32xf32>
    %189 = arith.truncf %188 : vector<2x32xf32> to vector<2x32xbf16>
    %cst_67 = arith.constant dense<0.000000e+00> : vector<2x64xf32>
    %190 = tpu.matmul %189, %16, %cst_67 {dimension_numbers = #tpu.dot_dimension_numbers<[1], [0], [0], [1], [0, 0, 1, 1], [], []>} : vector<2x32xbf16>, vector<32x64xbf16>, vector<2x64xf32> -> vector<2x64xf32>
    %191 = arith.addf %187, %190 : vector<2x64xf32>
    %192 = vector.extract_strided_slice %117 {offsets = [2, 0], sizes = [2, 32], strides = [1, 1]} : vector<4x32xf32> to vector<2x32xf32>
    %193 = arith.truncf %192 : vector<2x32xf32> to vector<2x32xbf16>
    %cst_68 = arith.constant dense<0.000000e+00> : vector<2x64xf32>
    %194 = tpu.matmul %193, %17, %cst_68 {dimension_numbers = #tpu.dot_dimension_numbers<[1], [0], [0], [1], [0, 0, 1, 1], [], []>} : vector<2x32xbf16>, vector<32x64xbf16>, vector<2x64xf32> -> vector<2x64xf32>
    %195 = arith.addf %191, %194 : vector<2x64xf32>
    %196 = vector.broadcast %4 : vector<1x64xf32> to vector<2x64xf32>
    %197 = arith.addf %195, %196 : vector<2x64xf32>
    %cst_69 = arith.constant 0.000000e+00 : f32
    %198 = vector.broadcast %cst_69 : f32 to vector<2x64xf32>
    %199 = arith.maximumf %197, %198 : vector<2x64xf32>
    %cst_70 = arith.constant 0.000000e+00 : f32
    %200 = vector.broadcast %cst_70 : f32 to vector<1x512xf32>
    %201 = vector.extract_strided_slice %158 {offsets = [0, 0], sizes = [1, 64], strides = [1, 1]} : vector<2x64xf32> to vector<1x64xf32>
    %202 = arith.truncf %201 : vector<1x64xf32> to vector<1x64xbf16>
    %c0_71 = arith.constant 0 : index
    %c0_72 = arith.constant 0 : index
    %203 = vector.load %arg6[%c0_71, %c0_72] : memref<256x512xbf16, #tpu.memory_space<vmem>>, vector<64x512xbf16>
    %cst_73 = arith.constant dense<0.000000e+00> : vector<1x512xf32>
    %204 = tpu.matmul %202, %203, %cst_73 {dimension_numbers = #tpu.dot_dimension_numbers<[1], [0], [0], [1], [0, 0, 1, 1], [], []>} : vector<1x64xbf16>, vector<64x512xbf16>, vector<1x512xf32> -> vector<1x512xf32>
    %205 = arith.addf %200, %204 : vector<1x512xf32>
    %206 = vector.extract_strided_slice %158 {offsets = [1, 0], sizes = [1, 64], strides = [1, 1]} : vector<2x64xf32> to vector<1x64xf32>
    %207 = arith.truncf %206 : vector<1x64xf32> to vector<1x64xbf16>
    %c64_74 = arith.constant 64 : index
    %c0_75 = arith.constant 0 : index
    %208 = vector.load %arg6[%c64_74, %c0_75] : memref<256x512xbf16, #tpu.memory_space<vmem>>, vector<64x512xbf16>
    %cst_76 = arith.constant dense<0.000000e+00> : vector<1x512xf32>
    %209 = tpu.matmul %207, %208, %cst_76 {dimension_numbers = #tpu.dot_dimension_numbers<[1], [0], [0], [1], [0, 0, 1, 1], [], []>} : vector<1x64xbf16>, vector<64x512xbf16>, vector<1x512xf32> -> vector<1x512xf32>
    %210 = arith.addf %205, %209 : vector<1x512xf32>
    %211 = vector.extract_strided_slice %199 {offsets = [0, 0], sizes = [1, 64], strides = [1, 1]} : vector<2x64xf32> to vector<1x64xf32>
    %212 = arith.truncf %211 : vector<1x64xf32> to vector<1x64xbf16>
    %c128_77 = arith.constant 128 : index
    %c0_78 = arith.constant 0 : index
    %213 = vector.load %arg6[%c128_77, %c0_78] : memref<256x512xbf16, #tpu.memory_space<vmem>>, vector<64x512xbf16>
    %cst_79 = arith.constant dense<0.000000e+00> : vector<1x512xf32>
    %214 = tpu.matmul %212, %213, %cst_79 {dimension_numbers = #tpu.dot_dimension_numbers<[1], [0], [0], [1], [0, 0, 1, 1], [], []>} : vector<1x64xbf16>, vector<64x512xbf16>, vector<1x512xf32> -> vector<1x512xf32>
    %215 = arith.addf %210, %214 : vector<1x512xf32>
    %216 = vector.extract_strided_slice %199 {offsets = [1, 0], sizes = [1, 64], strides = [1, 1]} : vector<2x64xf32> to vector<1x64xf32>
    %217 = arith.truncf %216 : vector<1x64xf32> to vector<1x64xbf16>
    %c192_80 = arith.constant 192 : index
    %c0_81 = arith.constant 0 : index
    %218 = vector.load %arg6[%c192_80, %c0_81] : memref<256x512xbf16, #tpu.memory_space<vmem>>, vector<64x512xbf16>
    %cst_82 = arith.constant dense<0.000000e+00> : vector<1x512xf32>
    %219 = tpu.matmul %217, %218, %cst_82 {dimension_numbers = #tpu.dot_dimension_numbers<[1], [0], [0], [1], [0, 0, 1, 1], [], []>} : vector<1x64xbf16>, vector<64x512xbf16>, vector<1x512xf32> -> vector<1x512xf32>
    %220 = arith.addf %215, %219 : vector<1x512xf32>
    %c0_83 = arith.constant 0 : index
    %c0_84 = arith.constant 0 : index
    %221 = vector.load %arg7[%c0_83, %c0_84] : memref<1x512xf32, #tpu.memory_space<vmem>>, vector<1x512xf32>
    %222 = arith.addf %220, %221 : vector<1x512xf32>
    %cst_85 = arith.constant 0.000000e+00 : f32
    %223 = vector.broadcast %cst_85 : f32 to vector<1x512xf32>
    %224 = arith.maximumf %222, %223 : vector<1x512xf32>
    %225 = arith.truncf %224 : vector<1x512xf32> to vector<1x512xbf16>
    %c0_86 = arith.constant 0 : index
    %c0_87 = arith.constant 0 : index
    %226 = vector.load %arg8[%c0_86, %c0_87] : memref<512x128xbf16, #tpu.memory_space<vmem>>, vector<512x128xbf16>
    %cst_88 = arith.constant dense<0.000000e+00> : vector<1x128xf32>
    %227 = tpu.matmul %225, %226, %cst_88 {dimension_numbers = #tpu.dot_dimension_numbers<[1], [0], [0], [1], [0, 0, 1, 1], [], []>} : vector<1x512xbf16>, vector<512x128xbf16>, vector<1x128xf32> -> vector<1x128xf32>
    %c0_89 = arith.constant 0 : index
    %c0_90 = arith.constant 0 : index
    %228 = vector.load %arg9[%c0_89, %c0_90] : memref<1x128xf32, #tpu.memory_space<vmem>>, vector<1x128xf32>
    %229 = arith.addf %227, %228 : vector<1x128xf32>
    %230 = tpu.iota {dimensions = array<i32: 1>} : vector<1x128xi32>
    %c12_i32 = arith.constant 12 : i32
    %231 = vector.broadcast %c12_i32 : i32 to vector<1x128xi32>
    %232 = arith.cmpi slt, %230, %231 : vector<1x128xi32>
    %cst_91 = arith.constant 0.000000e+00 : f32
    %233 = vector.broadcast %cst_91 : f32 to vector<1x128xf32>
    %234 = arith.select %232, %229, %233 : vector<1x128xi1>, vector<1x128xf32>
    %cst_92 = arith.constant dense<0.000000e+00> : vector<1xf32>
    %235 = vector.multi_reduction <add>, %234, %cst_92 [1] : vector<1x128xf32> to vector<1xf32>
    %236 = vector.shape_cast %235 : vector<1xf32> to vector<1x1xf32>
    %cst_93 = arith.constant 0.0833333358 : f32
    %237 = vector.broadcast %cst_93 : f32 to vector<1x1xf32>
    %238 = arith.mulf %236, %237 : vector<1x1xf32>
    %c12_i32_94 = arith.constant 12 : i32
    %239 = vector.broadcast %c12_i32_94 : i32 to vector<1x128xi32>
    %240 = arith.cmpi eq, %230, %239 : vector<1x128xi32>
    %cst_95 = arith.constant 0.000000e+00 : f32
    %241 = vector.broadcast %cst_95 : f32 to vector<1x128xf32>
    %242 = arith.select %240, %229, %241 : vector<1x128xi1>, vector<1x128xf32>
    %cst_96 = arith.constant dense<0.000000e+00> : vector<1xf32>
    %243 = vector.multi_reduction <add>, %242, %cst_96 [1] : vector<1x128xf32> to vector<1xf32>
    %244 = vector.shape_cast %243 : vector<1xf32> to vector<1x1xf32>
    %245 = arith.subf %244, %238 : vector<1x1xf32>
    %246 = vector.broadcast %245 : vector<1x1xf32> to vector<1x128xf32>
    %247 = arith.addf %229, %246 : vector<1x128xf32>
    %248 = vector.shape_cast %247 : vector<1x128xf32> to vector<1x128xf32>
    %249 = vector.broadcast %248 : vector<1x128xf32> to vector<8x128xf32>
    %c0_97 = arith.constant 0 : index
    %c0_98 = arith.constant 0 : index
    %c0_99 = arith.constant 0 : index
    %250 = vector.load %arg10[%c0_97, %c0_98, %c0_99] : memref<1x8x128xf32, #tpu.memory_space<vmem>>, vector<1x8x128xf32>
    %251 = vector.shape_cast %250 : vector<1x8x128xf32> to vector<8x128xf32>
    %252 = vector.shape_cast %249 : vector<8x128xf32> to vector<1x8x128xf32>
    tpu.vector_store %arg10[%c0_97, %c0_98, %c0_99], %252 {strides = array<i32>} : memref<1x8x128xf32, #tpu.memory_space<vmem>>, vector<1x8x128xf32>,
    return
  }
  func.func @transform_0(%arg0: i32) -> (i32, i32, i32, i32) {
    %c0_i32 = arith.constant 0 : i32
    %c0_i32_0 = arith.constant 0 : i32
    %c0_i32_1 = arith.constant 0 : i32
    %c0_i32_2 = arith.constant 0 : i32
    return %arg0, %c0_i32, %c0_i32_0, %c0_i32_1 : i32, i32, i32, i32
  }
  func.func @transform_1(%arg0: i32) -> (i32, i32) {
    %c0_i32 = arith.constant 0 : i32
    %c0_i32_0 = arith.constant 0 : i32
    %c0_i32_1 = arith.constant 0 : i32
    return %c0_i32, %c0_i32_0 : i32, i32
  }
  func.func @transform_2(%arg0: i32) -> (i32, i32) {
    %c0_i32 = arith.constant 0 : i32
    %c0_i32_0 = arith.constant 0 : i32
    %c0_i32_1 = arith.constant 0 : i32
    return %c0_i32, %c0_i32_0 : i32, i32
  }
  func.func @transform_3(%arg0: i32) -> (i32, i32) {
    %c0_i32 = arith.constant 0 : i32
    %c0_i32_0 = arith.constant 0 : i32
    %c0_i32_1 = arith.constant 0 : i32
    return %c0_i32, %c0_i32_0 : i32, i32
  }
  func.func @transform_4(%arg0: i32) -> (i32, i32) {
    %c0_i32 = arith.constant 0 : i32
    %c0_i32_0 = arith.constant 0 : i32
    %c0_i32_1 = arith.constant 0 : i32
    return %c0_i32, %c0_i32_0 : i32, i32
  }
  func.func @transform_5(%arg0: i32) -> (i32, i32) {
    %c0_i32 = arith.constant 0 : i32
    %c0_i32_0 = arith.constant 0 : i32
    %c0_i32_1 = arith.constant 0 : i32
    return %c0_i32, %c0_i32_0 : i32, i32
  }
  func.func @transform_6(%arg0: i32) -> (i32, i32) {
    %c0_i32 = arith.constant 0 : i32
    %c0_i32_0 = arith.constant 0 : i32
    %c0_i32_1 = arith.constant 0 : i32
    return %c0_i32, %c0_i32_0 : i32, i32
  }
  func.func @transform_7(%arg0: i32) -> (i32, i32) {
    %c0_i32 = arith.constant 0 : i32
    %c0_i32_0 = arith.constant 0 : i32
    %c0_i32_1 = arith.constant 0 : i32
    return %c0_i32, %c0_i32_0 : i32, i32
  }
  func.func @transform_8(%arg0: i32) -> (i32, i32) {
    %c0_i32 = arith.constant 0 : i32
    %c0_i32_0 = arith.constant 0 : i32
    %c0_i32_1 = arith.constant 0 : i32
    return %c0_i32, %c0_i32_0 : i32, i32
  }
  func.func @transform_9(%arg0: i32) -> (i32, i32, i32) {
    %c0_i32 = arith.constant 0 : i32
    %c0_i32_0 = arith.constant 0 : i32
    %c0_i32_1 = arith.constant 0 : i32
    return %arg0, %c0_i32, %c0_i32_0 : i32, i32, i32
  }
}

</mosaic_0001>

<llo_original>
// kernel: _lambda_.1
$region0: #{_lambda_.1}
  #allocation0 [shape = 'u32[]', space=smem, size = 0x4, offset = 0x4, fixed_abs, tag = 'smem constant byte address 0x4 - core index']
  #allocation1 [shape = 'u32[144,128]{1,0:T(1,128)}', space=vmem, size = 0x12000, scoped, tag = 'internal scratch']
  %s0 = inlined_call_operand.vmem [shape: bf16[2,5,5,64], index: 0, kind: input, shape index: {}]
  %s1 = inlined_call_operand.vmem [shape: bf16[256,32], index: 1, kind: input, shape index: {}]
  %s2 = inlined_call_operand.vmem [shape: f32[1,32], index: 2, kind: input, shape index: {}]
  %s3 = inlined_call_operand.vmem [shape: bf16[288,64], index: 3, kind: input, shape index: {}]
  %s4 = inlined_call_operand.vmem [shape: f32[1,64], index: 4, kind: input, shape index: {}]
  %s5 = inlined_call_operand.vmem [shape: bf16[256,512], index: 5, kind: input, shape index: {}]
  %s6 = inlined_call_operand.vmem [shape: f32[1,512], index: 6, kind: input, shape index: {}]
  %s7 = inlined_call_operand.vmem [shape: bf16[512,128], index: 7, kind: input, shape index: {}]
  %s8 = inlined_call_operand.vmem [shape: f32[1,128], index: 8, kind: input, shape index: {}]
  %s9 = inlined_call_operand.vmem [shape: f32[2,8,128], index: 9, kind: output, shape index: {}]
  %s10 = sld [smem:[#allocation0]]
  $region69: #{_lambda_.1} parent=0
    _
  %s12 = ssub.s32 1, %s10
  %s13 = scalar_select 0, %s12, %s10
  loop: start=0, step=1, limit=4
  $region2: #{_lambda_.1} parent=0 // loop_pre_header
    _
  $region3: #{_lambda_.1} parent=0 // loop_header
    %s15 = sphi 0, %s19
    %p16 = scmp.ge.s32.totalorder %s15, 4
    %s25 = sphi 0, %s27
    %s28 = sphi 0, %s25
    %s29 = sphi 0, %s28
    %s45 = sphi 0, %s29
    %s49 = sphi 0, %s49
    %s51 = sphi 0, %s49
    %s52 = sphi 0, %s51
    %s66 = sphi 0, %s52
    %s70 = sphi 0, %s70
    %s72 = sphi 0, %s70
    %s73 = sphi 0, %s72
    %s87 = sphi 0, %s73
    %s91 = sphi 0, %s91
    %s93 = sphi 0, %s91
    %s94 = sphi 0, %s93
    %s108 = sphi 0, %s94
    %s112 = sphi 0, %s112
    %s114 = sphi 0, %s112
    %s115 = sphi 0, %s114
    %s129 = sphi 0, %s115
    %s133 = sphi 0, %s133
    %s135 = sphi 0, %s133
    %s136 = sphi 0, %s135
    %s150 = sphi 0, %s136
    %s154 = sphi 0, %s154
    %s156 = sphi 0, %s154
    %s157 = sphi 0, %s156
    %s171 = sphi 0, %s157
    %s175 = sphi 0, %s175
    %s177 = sphi 0, %s175
    %s178 = sphi 0, %s177
    %s192 = sphi 0, %s178
    %s196 = sphi 0, %s196
    %s198 = sphi 0, %s196
    %s199 = sphi 0, %s198
    %s213 = sphi 0, %s199
    %s219 = sphi 0, %s221
    %s222 = sphi 0, %s219
    %s223 = sphi 0, %s222
    %s239 = sphi 0, %s223
  $region4: #{_lambda_.1} parent=0 // loop_header_branch
    %18 = sbr.rel (%p16) target = $region8
  $region5: #{_lambda_.1} parent=0 // loop_body
    %s20 = ssub.s32 %s15, 1
    %s21 = ssub.s32 %s15, 2
    %s22 = sadd.s32 %s15, 1
    %s23 = ssub.s32 %s15, %s22
    %p24 = scmp.eq.s32.totalorder %s23, 0
    %s26 = sadd.s32 %s25, 1
    %s27 = scalar_select %p24, %s25, %s26
    %p30 = pneg %p24
    %p31 = scmp.eq.s32.totalorder %s15, 1
    %p32 = por %p30, %p31
    %p33 = scmp.ne.s32.totalorder %s25, %s28
    %p34 = scmp.eq.s32.totalorder %s15, 0
    %p35 = por %p33, %p34
    %p36 = scmp.ne.s32.totalorder %s25, %s28
    %p37 = scmp.eq.s32.totalorder %s20, 1
    %p38 = por %p36, %p37
    %p39 = scmp.ne.s32.totalorder %s28, %s29
    %p40 = scmp.eq.s32.totalorder %s20, 0
    %p41 = por %p39, %p40
    %p42 = scmp.ne.s32.totalorder %s28, %s29
    %p43 = scmp.eq.s32.totalorder %s21, 1
    %p44 = por %p42, %p43
    %p46 = scmp.ne.s32.totalorder %s29, %s45
    %p47 = scmp.eq.s32.totalorder %s21, 0
    %p48 = por %p46, %p47
    %s50 = sadd.s32 %s49, 1
    %p53 = scmp.eq.s32.totalorder %s15, 1
    %p54 = scmp.ne.s32.totalorder %s49, %s51
    %p55 = scmp.eq.s32.totalorder %s15, 0
    %p56 = por %p54, %p55
    %p57 = scmp.ne.s32.totalorder %s49, %s51
    %p58 = scmp.eq.s32.totalorder %s20, 1
    %p59 = por %p57, %p58
    %p60 = scmp.ne.s32.totalorder %s51, %s52
    %p61 = scmp.eq.s32.totalorder %s20, 0
    %p62 = por %p60, %p61
    %p63 = scmp.ne.s32.totalorder %s51, %s52
    %p64 = scmp.eq.s32.totalorder %s21, 1
    %p65 = por %p63, %p64
    %p67 = scmp.ne.s32.totalorder %s52, %s66
    %p68 = scmp.eq.s32.totalorder %s21, 0
    %p69 = por %p67, %p68
    %s71 = sadd.s32 %s70, 1
    %p74 = scmp.eq.s32.totalorder %s15, 1
    %p75 = scmp.ne.s32.totalorder %s70, %s72
    %p76 = scmp.eq.s32.totalorder %s15, 0
    %p77 = por %p75, %p76
    %p78 = scmp.ne.s32.totalorder %s70, %s72
    %p79 = scmp.eq.s32.totalorder %s20, 1
    %p80 = por %p78, %p79
    %p81 = scmp.ne.s32.totalorder %s72, %s73
    %p82 = scmp.eq.s32.totalorder %s20, 0
    %p83 = por %p81, %p82
    %p84 = scmp.ne.s32.totalorder %s72, %s73
    %p85 = scmp.eq.s32.totalorder %s21, 1
    %p86 = por %p84, %p85
    %p88 = scmp.ne.s32.totalorder %s73, %s87
    %p89 = scmp.eq.s32.totalorder %s21, 0
    %p90 = por %p88, %p89
    %s92 = sadd.s32 %s91, 1
    %p95 = scmp.eq.s32.totalorder %s15, 1
    %p96 = scmp.ne.s32.totalorder %s91, %s93
    %p97 = scmp.eq.s32.totalorder %s15, 0
    %p98 = por %p96, %p97
    %p99 = scmp.ne.s32.totalorder %s91, %s93
    %p100 = scmp.eq.s32.totalorder %s20, 1
    %p101 = por %p99, %p100
    %p102 = scmp.ne.s32.totalorder %s93, %s94
    %p103 = scmp.eq.s32.totalorder %s20, 0
    %p104 = por %p102, %p103
    %p105 = scmp.ne.s32.totalorder %s93, %s94
    %p106 = scmp.eq.s32.totalorder %s21, 1
    %p107 = por %p105, %p106
    %p109 = scmp.ne.s32.totalorder %s94, %s108
    %p110 = scmp.eq.s32.totalorder %s21, 0
    %p111 = por %p109, %p110
    %s113 = sadd.s32 %s112, 1
    %p116 = scmp.eq.s32.totalorder %s15, 1
    %p117 = scmp.ne.s32.totalorder %s112, %s114
    %p118 = scmp.eq.s32.totalorder %s15, 0
    %p119 = por %p117, %p118
    %p120 = scmp.ne.s32.totalorder %s112, %s114
    %p121 = scmp.eq.s32.totalorder %s20, 1
    %p122 = por %p120, %p121
    %p123 = scmp.ne.s32.totalorder %s114, %s115
    %p124 = scmp.eq.s32.totalorder %s20, 0
    %p125 = por %p123, %p124
    %p126 = scmp.ne.s32.totalorder %s114, %s115
    %p127 = scmp.eq.s32.totalorder %s21, 1
    %p128 = por %p126, %p127
    %p130 = scmp.ne.s32.totalorder %s115, %s129
    %p131 = scmp.eq.s32.totalorder %s21, 0
    %p132 = por %p130, %p131
    %s134 = sadd.s32 %s133, 1
    %p137 = scmp.eq.s32.totalorder %s15, 1
    %p138 = scmp.ne.s32.totalorder %s133, %s135
    %p139 = scmp.eq.s32.totalorder %s15, 0
    %p140 = por %p138, %p139
    %p141 = scmp.ne.s32.totalorder %s133, %s135
    %p142 = scmp.eq.s32.totalorder %s20, 1
    %p143 = por %p141, %p142
    %p144 = scmp.ne.s32.totalorder %s135, %s136
    %p145 = scmp.eq.s32.totalorder %s20, 0
    %p146 = por %p144, %p145
    %p147 = scmp.ne.s32.totalorder %s135, %s136
    %p148 = scmp.eq.s32.totalorder %s21, 1
    %p149 = por %p147, %p148
    %p151 = scmp.ne.s32.totalorder %s136, %s150
    %p152 = scmp.eq.s32.totalorder %s21, 0
    %p153 = por %p151, %p152
    %s155 = sadd.s32 %s154, 1
    %p158 = scmp.eq.s32.totalorder %s15, 1
    %p159 = scmp.ne.s32.totalorder %s154, %s156
    %p160 = scmp.eq.s32.totalorder %s15, 0
    %p161 = por %p159, %p160
    %p162 = scmp.ne.s32.totalorder %s154, %s156
    %p163 = scmp.eq.s32.totalorder %s20, 1
    %p164 = por %p162, %p163
    %p165 = scmp.ne.s32.totalorder %s156, %s157
    %p166 = scmp.eq.s32.totalorder %s20, 0
    %p167 = por %p165, %p166
    %p168 = scmp.ne.s32.totalorder %s156, %s157
    %p169 = scmp.eq.s32.totalorder %s21, 1
    %p170 = por %p168, %p169
    %p172 = scmp.ne.s32.totalorder %s157, %s171
    %p173 = scmp.eq.s32.totalorder %s21, 0
    %p174 = por %p172, %p173
    %s176 = sadd.s32 %s175, 1
    %p179 = scmp.eq.s32.totalorder %s15, 1
    %p180 = scmp.ne.s32.totalorder %s175, %s177
    %p181 = scmp.eq.s32.totalorder %s15, 0
    %p182 = por %p180, %p181
    %p183 = scmp.ne.s32.totalorder %s175, %s177
    %p184 = scmp.eq.s32.totalorder %s20, 1
    %p185 = por %p183, %p184
    %p186 = scmp.ne.s32.totalorder %s177, %s178
    %p187 = scmp.eq.s32.totalorder %s20, 0
    %p188 = por %p186, %p187
    %p189 = scmp.ne.s32.totalorder %s177, %s178
    %p190 = scmp.eq.s32.totalorder %s21, 1
    %p191 = por %p189, %p190
    %p193 = scmp.ne.s32.totalorder %s178, %s192
    %p194 = scmp.eq.s32.totalorder %s21, 0
    %p195 = por %p193, %p194
    %s197 = sadd.s32 %s196, 1
    %p200 = scmp.eq.s32.totalorder %s15, 1
    %p201 = scmp.ne.s32.totalorder %s196, %s198
    %p202 = scmp.eq.s32.totalorder %s15, 0
    %p203 = por %p201, %p202
    %p204 = scmp.ne.s32.totalorder %s196, %s198
    %p205 = scmp.eq.s32.totalorder %s20, 1
    %p206 = por %p204, %p205
    %p207 = scmp.ne.s32.totalorder %s198, %s199
    %p208 = scmp.eq.s32.totalorder %s20, 0
    %p209 = por %p207, %p208
    %p210 = scmp.ne.s32.totalorder %s198, %s199
    %p211 = scmp.eq.s32.totalorder %s21, 1
    %p212 = por %p210, %p211
    %p214 = scmp.ne.s32.totalorder %s199, %s213
    %p215 = scmp.eq.s32.totalorder %s21, 0
    %p216 = por %p214, %p215
    %s217 = ssub.s32 %s15, %s22
    %p218 = scmp.eq.s32.totalorder %s217, 0
    %s220 = sadd.s32 %s219, 1
    %s221 = scalar_select %p218, %s219, %s220
    %p224 = pneg %p218
    %p225 = scmp.eq.s32.totalorder %s15, 1
    %p226 = por %p224, %p225
    %p227 = scmp.ne.s32.totalorder %s219, %s222
    %p228 = scmp.eq.s32.totalorder %s15, 0
    %p229 = por %p227, %p228
    %p230 = scmp.ne.s32.totalorder %s219, %s222
    %p231 = scmp.eq.s32.totalorder %s20, 1
    %p232 = por %p230, %p231
    %p233 = scmp.ne.s32.totalorder %s222, %s223
    %p234 = scmp.eq.s32.totalorder %s20, 0
    %p235 = por %p233, %p234
    %p236 = scmp.ne.s32.totalorder %s222, %s223
    %p237 = scmp.eq.s32.totalorder %s21, 1
    %p238 = por %p236, %p237
    %p240 = scmp.ne.s32.totalorder %s223, %s239
    %p241 = scmp.eq.s32.totalorder %s21, 0
    %p242 = por %p240, %p241
    %p243 = scmp.le.s32.totalorder 1, %s15
    %p244 = scmp.lt.s32.totalorder %s15, 3
    %p245 = pnand %p243, %p244
    %p246 = pneg %p245
    // Predicated region
    $region9: #{_lambda_.1} parent=5 // pred_check
      _
    $region10: #{_lambda_.1} parent=5 // pred_check_branch
      %248 = sbr.rel (%p245) target = $region12
    $region11: #{_lambda_.1} parent=5 // pred_region
      %s249 = ssub.s32 %s15, 1
      // Predicated region
      $region13: #{_lambda_.1} parent=11 // pred_check
        %p250 = pneg %p62
      $region14: #{_lambda_.1} parent=11 // pred_check_branch
        %252 = sbr.rel (%p250) target = $region16
      $region15: #{_lambda_.1} parent=11 // pred_region
        _
      $region16: #{_lambda_.1} parent=11 // pred_fallthru
        _
      // Predicated region
      $region17: #{_lambda_.1} parent=11 // pred_check
        %p253 = pneg %p83
      $region18: #{_lambda_.1} parent=11 // pred_check_branch
        %255 = sbr.rel (%p253) target = $region20
      $region19: #{_lambda_.1} parent=11 // pred_region
        _
      $region20: #{_lambda_.1} parent=11 // pred_fallthru
        _
      // Predicated region
      $region21: #{_lambda_.1} parent=11 // pred_check
        %p256 = pneg %p104
      $region22: #{_lambda_.1} parent=11 // pred_check_branch
        %258 = sbr.rel (%p256) target = $region24
      $region23: #{_lambda_.1} parent=11 // pred_region
        _
      $region24: #{_lambda_.1} parent=11 // pred_fallthru
        _
      // Predicated region
      $region25: #{_lambda_.1} parent=11 // pred_check
        %p259 = pneg %p125
      $region26: #{_lambda_.1} parent=11 // pred_check_branch
        %261 = sbr.rel (%p259) target = $region28
      $region27: #{_lambda_.1} parent=11 // pred_region
        _
      $region28: #{_lambda_.1} parent=11 // pred_fallthru
        _
      // Predicated region
      $region29: #{_lambda_.1} parent=11 // pred_check
        %p262 = pneg %p146
      $region30: #{_lambda_.1} parent=11 // pred_check_branch
        %264 = sbr.rel (%p262) target = $region32
      $region31: #{_lambda_.1} parent=11 // pred_region
        _
      $region32: #{_lambda_.1} parent=11 // pred_fallthru
        _
      // Predicated region
      $region33: #{_lambda_.1} parent=11 // pred_check
        %p265 = pneg %p167
      $region34: #{_lambda_.1} parent=11 // pred_check_branch
        %267 = sbr.rel (%p265) target = $region36
      $region35: #{_lambda_.1} parent=11 // pred_region
        _
      $region36: #{_lambda_.1} parent=11 // pred_fallthru
        _
      // Predicated region
      $region37: #{_lambda_.1} parent=11 // pred_check
        %p268 = pneg %p188
      $region38: #{_lambda_.1} parent=11 // pred_check_branch
        %270 = sbr.rel (%p268) target = $region40
      $region39: #{_lambda_.1} parent=11 // pred_region
        _
      $region40: #{_lambda_.1} parent=11 // pred_fallthru
        _
      // Predicated region
      $region41: #{_lambda_.1} parent=11 // pred_check
        %p271 = pneg %p209
      $region42: #{_lambda_.1} parent=11 // pred_check_branch
        %273 = sbr.rel (%p271) target = $region44
      $region43: #{_lambda_.1} parent=11 // pred_region
        _
      $region44: #{_lambda_.1} parent=11 // pred_fallthru
        _
    $region12: #{_lambda_.1} parent=5 // pred_fallthru
      _
    %p274 = scmp.lt.s32.totalorder %s15, 2
    // Predicated region
    $region45: #{_lambda_.1} parent=5 // pred_check
      %p275 = pneg %p274
    $region46: #{_lambda_.1} parent=5 // pred_check_branch
      %277 = sbr.rel (%p275) target = $region48
    $region47: #{_lambda_.1} parent=5 // pred_region
      // Predicated region
      $region49: #{_lambda_.1} parent=47 // pred_check
        %p278 = pneg %p35
      $region50: #{_lambda_.1} parent=47 // pred_check_branch
        %280 = sbr.rel (%p278) target = $region52
      $region51: #{_lambda_.1} parent=47 // pred_region
        %p281 = scmp.lt.s32.totalorder %s15, 1
        %s282 = scalar_select %p281, %s15, 1
        %s283 = smul.addr %s282, 5
        %s284 = smul.addr %s283, 4
        %s285 = scalar_lea.vmem %s0, %s284
      $region52: #{_lambda_.1} parent=47 // pred_fallthru
        _
    $region48: #{_lambda_.1} parent=5 // pred_fallthru
      _
    %p286 = scmp.le.s32.totalorder 1, %s15
    %p287 = scmp.lt.s32.totalorder %s15, 3
    %p288 = pnand %p286, %p287
    %p289 = pneg %p288
    // Predicated region
    $region53: #{_lambda_.1} parent=5 // pred_check
      _
    $region54: #{_lambda_.1} parent=5 // pred_check_branch
      %291 = sbr.rel (%p288) target = $region56
    $region55: #{_lambda_.1} parent=5 // pred_region
      %s292 = ssub.s32 %s15, 1
      %p293 = scmp.lt.s32.totalorder %s20, 1
      %s294 = scalar_select %p293, %s20, 1
      %s295 = smul.addr %s294, 5
      %s296 = smul.addr %s295, 4
      %s297 = scalar_lea.vmem %s0, %s296
      %p298 = pneg %p41
      %p299 = pneg %p38
      %p300 = pneg %p62
      %p301 = pneg %p59
      %p302 = pneg %p83
      %p303 = pneg %p80
      %p304 = pneg %p104
      %p305 = pneg %p101
      %p306 = pneg %p125
      %p307 = pneg %p122
      %p308 = pneg %p146
      %p309 = pneg %p143
      %p310 = pneg %p167
      %p311 = pneg %p164
      %p312 = pneg %p188
      %p313 = pneg %p185
      %p314 = pneg %p209
      %p315 = pneg %p206
      %p316 = pneg %p235
      %p317 = pneg %p232
      %p318 = scmp.lt.s32.totalorder %s20, 1
      %s319 = scalar_select %p318, %s20, 1
      %s320 = smul.addr %s319, 8
      %s321 = scalar_lea.vmem %s9, %s320
      %p322 = scmp.lt.s32.totalorder %s20, 1
      %s323 = scalar_select %p322, %s20, 1
      %s324 = smul.addr %s323, 5
      %s325 = smul.addr %s324, 4
      %s326 = scalar_lea.vmem %s0, %s325
      %p327 = scmp.lt.s32.totalorder %s20, 1
      %s328 = scalar_select %p327, %s20, 1
      %s329 = smul.addr %s328, 8
      %s330 = scalar_lea.vmem %s9, %s329
      %v332 = vld [vmem:[%s326] sm:$0x7]
      %v333 = vld [vmem:[%s326 + $0x4] sm:$0x7]
      %v334 = vld [vmem:[%s326 + $0x8] sm:$0x7]
      %v335 = vld [vmem:[%s326 + $0xc] sm:$0x7]
      %v336 = vld [vmem:[%s326 + $0x10] sm:$0x7]
      %v337 = vunpack.c.l.bf16 %v332
      %v338 = vunpack.c.l.bf16 %v333
      %v339 = vunpack.c.l.bf16 %v334
      %v340 = vunpack.c.l.bf16 %v335
      %v341 = vunpack.c.l.bf16 %v336
      %v342 = vld [vmem:[%s2] sm:$0x1]
      %v343 = vld [vmem:[%s4] sm:$0x1]
      %v344 = vld [vmem:[%s1] sm:$0xf]
      %v345 = vld [vmem:[%s1 + $0x4] sm:$0xf]
      %v346 = vld [vmem:[%s1 + $0x8] sm:$0xf]
      %v347 = vld [vmem:[%s1 + $0xc] sm:$0xf]
      %v348 = vld [vmem:[%s1 + $0x10] sm:$0xf]
      %v349 = vld [vmem:[%s1 + $0x14] sm:$0xf]
      %v350 = vld [vmem:[%s1 + $0x18] sm:$0xf]
      %v351 = vld [vmem:[%s1 + $0x1c] sm:$0xf]
      %v352 = vld [vmem:[%s1 + $0x20] sm:$0xf]
      %v353 = vld [vmem:[%s1 + $0x24] sm:$0xf]
      %v354 = vld [vmem:[%s1 + $0x28] sm:$0xf]
      %v355 = vld [vmem:[%s1 + $0x2c] sm:$0xf]
      %v356 = vld [vmem:[%s1 + $0x30] sm:$0xf]
      %v357 = vld [vmem:[%s1 + $0x34] sm:$0xf]
      %v358 = vld [vmem:[%s1 + $0x38] sm:$0xf]
      %v359 = vld [vmem:[%s1 + $0x3c] sm:$0xf]
      %v360 = vld [vmem:[%s1 + $0x40] sm:$0xf]
      %v361 = vld [vmem:[%s1 + $0x44] sm:$0xf]
      %v362 = vld [vmem:[%s1 + $0x48] sm:$0xf]
      %v363 = vld [vmem:[%s1 + $0x4c] sm:$0xf]
      %v364 = vld [vmem:[%s1 + $0x50] sm:$0xf]
      %v365 = vld [vmem:[%s1 + $0x54] sm:$0xf]
      %v366 = vld [vmem:[%s1 + $0x58] sm:$0xf]
      %v367 = vld [vmem:[%s1 + $0x5c] sm:$0xf]
      %v368 = vld [vmem:[%s1 + $0x60] sm:$0xf]
      %v369 = vld [vmem:[%s1 + $0x64] sm:$0xf]
      %v370 = vld [vmem:[%s1 + $0x68] sm:$0xf]
      %v371 = vld [vmem:[%s1 + $0x6c] sm:$0xf]
      %v372 = vld [vmem:[%s1 + $0x70] sm:$0xf]
      %v373 = vld [vmem:[%s1 + $0x74] sm:$0xf]
      %v374 = vld [vmem:[%s1 + $0x78] sm:$0xf]
      %v375 = vld [vmem:[%s1 + $0x7c] sm:$0xf]
      %v376 = vld [vmem:[%s3] sm:$0xf]
      %v377 = vld [vmem:[%s3 + $0x4] sm:$0xf]
      %v378 = vld [vmem:[%s3 + $0x8] sm:$0xf]
      %v379 = vld [vmem:[%s3 + $0xc] sm:$0xf]
      %v380 = vld [vmem:[%s3 + $0x10] sm:$0xf]
      %v381 = vld [vmem:[%s3 + $0x14] sm:$0xf]
      %v382 = vld [vmem:[%s3 + $0x18] sm:$0xf]
      %v383 = vld [vmem:[%s3 + $0x1c] sm:$0xf]
      %v384 = vld [vmem:[%s3 + $0x20] sm:$0xf]
      %v385 = vld [vmem:[%s3 + $0x24] sm:$0xf]
      %v386 = vld [vmem:[%s3 + $0x28] sm:$0xf]
      %v387 = vld [vmem:[%s3 + $0x2c] sm:$0xf]
      %v388 = vld [vmem:[%s3 + $0x30] sm:$0xf]
      %v389 = vld [vmem:[%s3 + $0x34] sm:$0xf]
      %v390 = vld [vmem:[%s3 + $0x38] sm:$0xf]
      %v391 = vld [vmem:[%s3 + $0x3c] sm:$0xf]
      %v392 = vld [vmem:[%s3 + $0x40] sm:$0xf]
      %v393 = vld [vmem:[%s3 + $0x44] sm:$0xf]
      %v394 = vld [vmem:[%s3 + $0x48] sm:$0xf]
      %v395 = vld [vmem:[%s3 + $0x4c] sm:$0xf]
      %v396 = vld [vmem:[%s3 + $0x50] sm:$0xf]
      %v397 = vld [vmem:[%s3 + $0x54] sm:$0xf]
      %v398 = vld [vmem:[%s3 + $0x58] sm:$0xf]
      %v399 = vld [vmem:[%s3 + $0x5c] sm:$0xf]
      %v400 = vld [vmem:[%s3 + $0x60] sm:$0xf]
      %v401 = vld [vmem:[%s3 + $0x64] sm:$0xf]
      %v402 = vld [vmem:[%s3 + $0x68] sm:$0xf]
      %v403 = vld [vmem:[%s3 + $0x6c] sm:$0xf]
      %v404 = vld [vmem:[%s3 + $0x70] sm:$0xf]
      %v405 = vld [vmem:[%s3 + $0x74] sm:$0xf]
      %v406 = vld [vmem:[%s3 + $0x78] sm:$0xf]
      %v407 = vld [vmem:[%s3 + $0x7c] sm:$0xf]
      %v408 = vld [vmem:[%s3 + $0x80] sm:$0xf]
      %v409 = vld [vmem:[%s3 + $0x84] sm:$0xf]
      %v410 = vld [vmem:[%s3 + $0x88] sm:$0xf]
      %v411 = vld [vmem:[%s3 + $0x8c] sm:$0xf]
      %v412 = vpack.c.bf16 %v337, %v337
      %v414 = vshrl.u32 %v412, 16
      %v416 = vshll.u32 %v412, 16
      %v418 = vrot.slane %v416, 1
      %v419 = vor.u32 %v414, %v418
      %v428 = vunpack.c.l.b16 %v352
      %v429 = vunpack.c.l.b16 %v353
      %v430 = vunpack.c.l.b16 %v354
      %v431 = vunpack.c.l.b16 %v355
      %v432 = vunpack.c.l.b16 %v356
      %v433 = vunpack.c.l.b16 %v357
      %v434 = vunpack.c.l.b16 %v358
      %v435 = vunpack.c.l.b16 %v359
      %v436 = vpack.c.b16 %v429, %v428
      %v437 = vpack.c.b16 %v431, %v430
      %v438 = vpack.c.b16 %v433, %v432
      %v439 = vpack.c.b16 %v435, %v434
      %vm444 = vcmask 523264
      %v446 = vsel %vm444, %v419, 0
      %448 = vmatprep.subr.bf16.mxu0 0
      %449 = vmatpush1.bf16.msra.mxu0 %v436
      %450 = vmatprep.subr.bf16.mxu0 0
      %451 = vmatpush1.bf16.msra.mxu0 %v437
      %452 = vmatprep.subr.bf16.mxu0 0
      %453 = vmatpush1.bf16.msra.mxu0 %v438
      %454 = vmatprep.subr.bf16.mxu0 0
      %455 = vmatpush1.bf16.msra.mxu0 %v439
      %456 = vmatprep.subr.bf16.mxu0 0
      %457 = vmatpush1.bf16.msra.mxu0 0
      %458 = vmatprep.subr.bf16.mxu0 0
      %459 = vmatpush1.bf16.msra.mxu0 0
      %460 = vmatprep.subr.bf16.mxu0 0
      %461 = vmatpush1.bf16.msra.mxu0 0
      %462 = vmatprep.subr.bf16.mxu0 0
      %463 = vmatpush1.bf16.msra.mxu0 0
      %464 = vmatprep.subr.bf16.mxu0 0
      %465 = vmatpush1.bf16.msra.mxu0 0
      %466 = vmatprep.subr.bf16.mxu0 0
      %467 = vmatpush1.bf16.msra.mxu0 0
      %468 = vmatprep.subr.bf16.mxu0 0
      %469 = vmatpush1.bf16.msra.mxu0 0
      %470 = vmatprep.subr.bf16.mxu0 0
      %471 = vmatpush1.bf16.msra.mxu0 0
      %472 = vmatprep.subr.bf16.mxu0 0
      %473 = vmatpush1.bf16.msra.mxu0 0
      %474 = vmatprep.subr.bf16.mxu0 0
      %475 = vmatpush1.bf16.msra.mxu0 0
      %476 = vmatprep.subr.bf16.mxu0 0
      %477 = vmatpush1.bf16.msra.mxu0 0
      %478 = vmatprep.subr.bf16.mxu0 0
      %479 = vmatpush1.bf16.msra.mxu0 0
      %480 = vmatprep.mubr.bf16.mxu0 0
      %481 = vmatmul.mubr.bf16.gmra.mrb[0].mxu0 %v446
      %v482 = vpop.f32.mrb[0].mxu0
      %v483 = vadd.f32 0.0, %v482
      %v484 = vpop.f32.mrb[0].mxu0
      %v485 = vpop.f32.mrb[0].mxu0
      %v486 = vpop.f32.mrb[0].mxu0
      %487 = vdwg.mxu0
      %v496 = vunpack.c.l.b16 %v344
      %v497 = vunpack.c.l.b16 %v345
      %v498 = vunpack.c.l.b16 %v346
      %v499 = vunpack.c.l.b16 %v347
      %v500 = vunpack.c.l.b16 %v348
      %v501 = vunpack.c.l.b16 %v349
      %v502 = vunpack.c.l.b16 %v350
      %v503 = vunpack.c.l.b16 %v351
      %v504 = vpack.c.b16 %v497, %v496
      %v505 = vpack.c.b16 %v499, %v498
      %v506 = vpack.c.b16 %v501, %v500
      %v507 = vpack.c.b16 %v503, %v502
      %v512 = vsel %vm444, %v412, 0
      %514 = vmatprep.subr.bf16.mxu0 0
      %515 = vmatpush1.bf16.msra.mxu0 %v504
      %516 = vmatprep.subr.bf16.mxu0 0
      %517 = vmatpush1.bf16.msra.mxu0 %v505
      %518 = vmatprep.subr.bf16.mxu0 0
      %519 = vmatpush1.bf16.msra.mxu0 %v506
      %520 = vmatprep.subr.bf16.mxu0 0
      %521 = vmatpush1.bf16.msra.mxu0 %v507
      %522 = vmatprep.subr.bf16.mxu0 0
      %523 = vmatpush1.bf16.msra.mxu0 0
      %524 = vmatprep.subr.bf16.mxu0 0
      %525 = vmatpush1.bf16.msra.mxu0 0
      %526 = vmatprep.subr.bf16.mxu0 0
      %527 = vmatpush1.bf16.msra.mxu0 0
      %528 = vmatprep.subr.bf16.mxu0 0
      %529 = vmatpush1.bf16.msra.mxu0 0
      %530 = vmatprep.subr.bf16.mxu0 0
      %531 = vmatpush1.bf16.msra.mxu0 0
      %532 = vmatprep.subr.bf16.mxu0 0
      %533 = vmatpush1.bf16.msra.mxu0 0
      %534 = vmatprep.subr.bf16.mxu0 0
      %535 = vmatpush1.bf16.msra.mxu0 0
      %536 = vmatprep.subr.bf16.mxu0 0
      %537 = vmatpush1.bf16.msra.mxu0 0
      %538 = vmatprep.subr.bf16.mxu0 0
      %539 = vmatpush1.bf16.msra.mxu0 0
      %540 = vmatprep.subr.bf16.mxu0 0
      %541 = vmatpush1.bf16.msra.mxu0 0
      %542 = vmatprep.subr.bf16.mxu0 0
      %543 = vmatpush1.bf16.msra.mxu0 0
      %544 = vmatprep.subr.bf16.mxu0 0
      %545 = vmatpush1.bf16.msra.mxu0 0
      %546 = vmatprep.mubr.bf16.mxu0 0
      %547 = vmatmul.mubr.bf16.gmra.mrb[0].mxu0 %v512
      %v548 = vpop.f32.mrb[0].mxu0
      %v549 = vadd.f32 %v483, %v548
      %v550 = vpop.f32.mrb[0].mxu0
      %v551 = vpop.f32.mrb[0].mxu0
      %v552 = vpop.f32.mrb[0].mxu0
      %553 = vdwg.mxu0
      %v554 = vpack.c.bf16 %v338, %v338
      %v563 = vunpack.c.l.b16 %v360
      %v564 = vunpack.c.l.b16 %v361
      %v565 = vunpack.c.l.b16 %v362
      %v566 = vunpack.c.l.b16 %v363
      %v567 = vunpack.c.l.b16 %v364
      %v568 = vunpack.c.l.b16 %v365
      %v569 = vunpack.c.l.b16 %v366
      %v570 = vunpack.c.l.b16 %v367
      %v571 = vpack.c.b16 %v564, %v563
      %v572 = vpack.c.b16 %v566, %v565
      %v573 = vpack.c.b16 %v568, %v567
      %v574 = vpack.c.b16 %v570, %v569
      %v580 = vsel %vm444, %v554, 0
      %582 = vmatprep.subr.bf16.mxu0 0
      %583 = vmatpush1.bf16.msra.mxu0 %v571
      %584 = vmatprep.subr.bf16.mxu0 0
      %585 = vmatpush1.bf16.msra.mxu0 %v572
      %586 = vmatprep.subr.bf16.mxu0 0
      %587 = vmatpush1.bf16.msra.mxu0 %v573
      %588 = vmatprep.subr.bf16.mxu0 0
      %589 = vmatpush1.bf16.msra.mxu0 %v574
      %590 = vmatprep.subr.bf16.mxu0 0
      %591 = vmatpush1.bf16.msra.mxu0 0
      %592 = vmatprep.subr.bf16.mxu0 0
      %593 = vmatpush1.bf16.msra.mxu0 0
      %594 = vmatprep.subr.bf16.mxu0 0
      %595 = vmatpush1.bf16.msra.mxu0 0
      %596 = vmatprep.subr.bf16.mxu0 0
      %597 = vmatpush1.bf16.msra.mxu0 0
      %598 = vmatprep.subr.bf16.mxu0 0
      %599 = vmatpush1.bf16.msra.mxu0 0
      %600 = vmatprep.subr.bf16.mxu0 0
      %601 = vmatpush1.bf16.msra.mxu0 0
      %602 = vmatprep.subr.bf16.mxu0 0
      %603 = vmatpush1.bf16.msra.mxu0 0
      %604 = vmatprep.subr.bf16.mxu0 0
      %605 = vmatpush1.bf16.msra.mxu0 0
      %606 = vmatprep.subr.bf16.mxu0 0
      %607 = vmatpush1.bf16.msra.mxu0 0
      %608 = vmatprep.subr.bf16.mxu0 0
      %609 = vmatpush1.bf16.msra.mxu0 0
      %610 = vmatprep.subr.bf16.mxu0 0
      %611 = vmatpush1.bf16.msra.mxu0 0
      %612 = vmatprep.subr.bf16.mxu0 0
      %613 = vmatpush1.bf16.msra.mxu0 0
      %614 = vmatprep.mubr.bf16.mxu0 0
      %615 = vmatmul.mubr.bf16.gmra.mrb[0].mxu0 %v580
      %v616 = vpop.f32.mrb[0].mxu0
      %v617 = vadd.f32 0.0, %v616
      %v618 = vpop.f32.mrb[0].mxu0
      %v619 = vpop.f32.mrb[0].mxu0
      %v620 = vpop.f32.mrb[0].mxu0
      %621 = vdwg.mxu0
      %v622 = vadd.f32 %v549, %v617
      %v623 = vshrl.u32 %v554, 16
      %v625 = vshll.u32 %v554, 16
      %v627 = vrot.slane %v625, 1
      %v628 = vor.u32 %v623, %v627
      %v637 = vunpack.c.l.b16 %v368
      %v638 = vunpack.c.l.b16 %v369
      %v639 = vunpack.c.l.b16 %v370
      %v640 = vunpack.c.l.b16 %v371
      %v641 = vunpack.c.l.b16 %v372
      %v642 = vunpack.c.l.b16 %v373
      %v643 = vunpack.c.l.b16 %v374
      %v644 = vunpack.c.l.b16 %v375
      %v645 = vpack.c.b16 %v638, %v637
      %v646 = vpack.c.b16 %v640, %v639
      %v647 = vpack.c.b16 %v642, %v641
      %v648 = vpack.c.b16 %v644, %v643
      %v654 = vsel %vm444, %v628, 0
      %656 = vmatprep.subr.bf16.mxu0 0
      %657 = vmatpush1.bf16.msra.mxu0 %v645
      %658 = vmatprep.subr.bf16.mxu0 0
      %659 = vmatpush1.bf16.msra.mxu0 %v646
      %660 = vmatprep.subr.bf16.mxu0 0
      %661 = vmatpush1.bf16.msra.mxu0 %v647
      %662 = vmatprep.subr.bf16.mxu0 0
      %663 = vmatpush1.bf16.msra.mxu0 %v648
      %664 = vmatprep.subr.bf16.mxu0 0
      %665 = vmatpush1.bf16.msra.mxu0 0
      %666 = vmatprep.subr.bf16.mxu0 0
      %667 = vmatpush1.bf16.msra.mxu0 0
      %668 = vmatprep.subr.bf16.mxu0 0
      %669 = vmatpush1.bf16.msra.mxu0 0
      %670 = vmatprep.subr.bf16.mxu0 0
      %671 = vmatpush1.bf16.msra.mxu0 0
      %672 = vmatprep.subr.bf16.mxu0 0
      %673 = vmatpush1.bf16.msra.mxu0 0
      %674 = vmatprep.subr.bf16.mxu0 0
      %675 = vmatpush1.bf16.msra.mxu0 0
      %676 = vmatprep.subr.bf16.mxu0 0
      %677 = vmatpush1.bf16.msra.mxu0 0
      %678 = vmatprep.subr.bf16.mxu0 0
      %679 = vmatpush1.bf16.msra.mxu0 0
      %680 = vmatprep.subr.bf16.mxu0 0
      %681 = vmatpush1.bf16.msra.mxu0 0
      %682 = vmatprep.subr.bf16.mxu0 0
      %683 = vmatpush1.bf16.msra.mxu0 0
      %684 = vmatprep.subr.bf16.mxu0 0
      %685 = vmatpush1.bf16.msra.mxu0 0
      %686 = vmatprep.subr.bf16.mxu0 0
      %687 = vmatpush1.bf16.msra.mxu0 0
      %688 = vmatprep.mubr.bf16.mxu0 0
      %689 = vmatmul.mubr.bf16.gmra.mrb[0].mxu0 %v654
      %v690 = vpop.f32.mrb[0].mxu0
      %v691 = vadd.f32 0.0, %v690
      %v692 = vpop.f32.mrb[0].mxu0
      %v693 = vpop.f32.mrb[0].mxu0
      %v694 = vpop.f32.mrb[0].mxu0
      %695 = vdwg.mxu0
      %v696 = vadd.f32 %v622, %v691
      %v698 = vlaneseq
      %v699 = vshrl.u32 %v698, 7
      %v700 = vsub.s32 0, %v699
      %v701 = vrot.slane %v342, %v700
      %v703 = vadd.f32 %v696, %v701
      %v704 = vmax.f32 %v703, 0.0
      %705 = vmatprep.subr.bf16.mxu0 0
      %706 = vmatpush1.bf16.msra.mxu0 %v436
      %707 = vmatprep.subr.bf16.mxu0 0
      %708 = vmatpush1.bf16.msra.mxu0 %v437
      %709 = vmatprep.subr.bf16.mxu0 0
      %710 = vmatpush1.bf16.msra.mxu0 %v438
      %711 = vmatprep.subr.bf16.mxu0 0
      %712 = vmatpush1.bf16.msra.mxu0 %v439
      %713 = vmatprep.subr.bf16.mxu0 0
      %714 = vmatpush1.bf16.msra.mxu0 0
      %715 = vmatprep.subr.bf16.mxu0 0
      %716 = vmatpush1.bf16.msra.mxu0 0
      %717 = vmatprep.subr.bf16.mxu0 0
      %718 = vmatpush1.bf16.msra.mxu0 0
      %719 = vmatprep.subr.bf16.mxu0 0
      %720 = vmatpush1.bf16.msra.mxu0 0
      %721 = vmatprep.subr.bf16.mxu0 0
      %722 = vmatpush1.bf16.msra.mxu0 0
      %723 = vmatprep.subr.bf16.mxu0 0
      %724 = vmatpush1.bf16.msra.mxu0 0
      %725 = vmatprep.subr.bf16.mxu0 0
      %726 = vmatpush1.bf16.msra.mxu0 0
      %727 = vmatprep.subr.bf16.mxu0 0
      %728 = vmatpush1.bf16.msra.mxu0 0
      %729 = vmatprep.subr.bf16.mxu0 0
      %730 = vmatpush1.bf16.msra.mxu0 0
      %731 = vmatprep.subr.bf16.mxu0 0
      %732 = vmatpush1.bf16.msra.mxu0 0
      %733 = vmatprep.subr.bf16.mxu0 0
      %734 = vmatpush1.bf16.msra.mxu0 0
      %735 = vmatprep.subr.bf16.mxu0 0
      %736 = vmatpush1.bf16.msra.mxu0 0
      %737 = vmatprep.mubr.bf16.mxu0 0
      %738 = vmatmul.mubr.bf16.gmra.mrb[0].mxu0 %v654
      %v739 = vpop.f32.mrb[0].mxu0
      %v740 = vadd.f32 0.0, %v739
      %v741 = vpop.f32.mrb[0].mxu0
      %v742 = vpop.f32.mrb[0].mxu0
      %v743 = vpop.f32.mrb[0].mxu0
      %744 = vdwg.mxu0
      %745 = vmatprep.subr.bf16.mxu0 0
      %746 = vmatpush1.bf16.msra.mxu0 %v504
      %747 = vmatprep.subr.bf16.mxu0 0
      %748 = vmatpush1.bf16.msra.mxu0 %v505
      %749 = vmatprep.subr.bf16.mxu0 0
      %750 = vmatpush1.bf16.msra.mxu0 %v506
      %751 = vmatprep.subr.bf16.mxu0 0
      %752 = vmatpush1.bf16.msra.mxu0 %v507
      %753 = vmatprep.subr.bf16.mxu0 0
      %754 = vmatpush1.bf16.msra.mxu0 0
      %755 = vmatprep.subr.bf16.mxu0 0
      %756 = vmatpush1.bf16.msra.mxu0 0
      %757 = vmatprep.subr.bf16.mxu0 0
      %758 = vmatpush1.bf16.msra.mxu0 0
      %759 = vmatprep.subr.bf16.mxu0 0
      %760 = vmatpush1.bf16.msra.mxu0 0
      %761 = vmatprep.subr.bf16.mxu0 0
      %762 = vmatpush1.bf16.msra.mxu0 0
      %763 = vmatprep.subr.bf16.mxu0 0
      %764 = vmatpush1.bf16.msra.mxu0 0
      %765 = vmatprep.subr.bf16.mxu0 0
      %766 = vmatpush1.bf16.msra.mxu0 0
      %767 = vmatprep.subr.bf16.mxu0 0
      %768 = vmatpush1.bf16.msra.mxu0 0
      %769 = vmatprep.subr.bf16.mxu0 0
      %770 = vmatpush1.bf16.msra.mxu0 0
      %771 = vmatprep.subr.bf16.mxu0 0
      %772 = vmatpush1.bf16.msra.mxu0 0
      %773 = vmatprep.subr.bf16.mxu0 0
      %774 = vmatpush1.bf16.msra.mxu0 0
      %775 = vmatprep.subr.bf16.mxu0 0
      %776 = vmatpush1.bf16.msra.mxu0 0
      %777 = vmatprep.mubr.bf16.mxu0 0
      %778 = vmatmul.mubr.bf16.gmra.mrb[0].mxu0 %v580
      %v779 = vpop.f32.mrb[0].mxu0
      %v780 = vadd.f32 %v740, %v779
      %v781 = vpop.f32.mrb[0].mxu0
      %v782 = vpop.f32.mrb[0].mxu0
      %v783 = vpop.f32.mrb[0].mxu0
      %784 = vdwg.mxu0
      %v785 = vpack.c.bf16 %v339, %v339
      %v787 = vsel %vm444, %v785, 0
      %789 = vmatprep.subr.bf16.mxu0 0
      %790 = vmatpush1.bf16.msra.mxu0 %v571
      %791 = vmatprep.subr.bf16.mxu0 0
      %792 = vmatpush1.bf16.msra.mxu0 %v572
      %793 = vmatprep.subr.bf16.mxu0 0
      %794 = vmatpush1.bf16.msra.mxu0 %v573
      %795 = vmatprep.subr.bf16.mxu0 0
      %796 = vmatpush1.bf16.msra.mxu0 %v574
      %797 = vmatprep.subr.bf16.mxu0 0
      %798 = vmatpush1.bf16.msra.mxu0 0
      %799 = vmatprep.subr.bf16.mxu0 0
      %800 = vmatpush1.bf16.msra.mxu0 0
      %801 = vmatprep.subr.bf16.mxu0 0
      %802 = vmatpush1.bf16.msra.mxu0 0
      %803 = vmatprep.subr.bf16.mxu0 0
      %804 = vmatpush1.bf16.msra.mxu0 0
      %805 = vmatprep.subr.bf16.mxu0 0
      %806 = vmatpush1.bf16.msra.mxu0 0
      %807 = vmatprep.subr.bf16.mxu0 0
      %808 = vmatpush1.bf16.msra.mxu0 0
      %809 = vmatprep.subr.bf16.mxu0 0
      %810 = vmatpush1.bf16.msra.mxu0 0
      %811 = vmatprep.subr.bf16.mxu0 0
      %812 = vmatpush1.bf16.msra.mxu0 0
      %813 = vmatprep.subr.bf16.mxu0 0
      %814 = vmatpush1.bf16.msra.mxu0 0
      %815 = vmatprep.subr.bf16.mxu0 0
      %816 = vmatpush1.bf16.msra.mxu0 0
      %817 = vmatprep.subr.bf16.mxu0 0
      %818 = vmatpush1.bf16.msra.mxu0 0
      %819 = vmatprep.subr.bf16.mxu0 0
      %820 = vmatpush1.bf16.msra.mxu0 0
      %821 = vmatprep.mubr.bf16.mxu0 0
      %822 = vmatmul.mubr.bf16.gmra.mrb[0].mxu0 %v787
      %v823 = vpop.f32.mrb[0].mxu0
      %v824 = vadd.f32 0.0, %v823
      %v825 = vpop.f32.mrb[0].mxu0
      %v826 = vpop.f32.mrb[0].mxu0
      %v827 = vpop.f32.mrb[0].mxu0
      %828 = vdwg.mxu0
      %v829 = vadd.f32 %v780, %v824
      %v830 = vshrl.u32 %v785, 16
      %v832 = vshll.u32 %v785, 16
      %v834 = vrot.slane %v832, 1
      %v835 = vor.u32 %v830, %v834
      %v837 = vsel %vm444, %v835, 0
      %839 = vmatprep.subr.bf16.mxu0 0
      %840 = vmatpush1.bf16.msra.mxu0 %v645
      %841 = vmatprep.subr.bf16.mxu0 0
      %842 = vmatpush1.bf16.msra.mxu0 %v646
      %843 = vmatprep.subr.bf16.mxu0 0
      %844 = vmatpush1.bf16.msra.mxu0 %v647
      %845 = vmatprep.subr.bf16.mxu0 0
      %846 = vmatpush1.bf16.msra.mxu0 %v648
      %847 = vmatprep.subr.bf16.mxu0 0
      %848 = vmatpush1.bf16.msra.mxu0 0
      %849 = vmatprep.subr.bf16.mxu0 0
      %850 = vmatpush1.bf16.msra.mxu0 0
      %851 = vmatprep.subr.bf16.mxu0 0
      %852 = vmatpush1.bf16.msra.mxu0 0
      %853 = vmatprep.subr.bf16.mxu0 0
      %854 = vmatpush1.bf16.msra.mxu0 0
      %855 = vmatprep.subr.bf16.mxu0 0
      %856 = vmatpush1.bf16.msra.mxu0 0
      %857 = vmatprep.subr.bf16.mxu0 0
      %858 = vmatpush1.bf16.msra.mxu0 0
      %859 = vmatprep.subr.bf16.mxu0 0
      %860 = vmatpush1.bf16.msra.mxu0 0
      %861 = vmatprep.subr.bf16.mxu0 0
      %862 = vmatpush1.bf16.msra.mxu0 0
      %863 = vmatprep.subr.bf16.mxu0 0
      %864 = vmatpush1.bf16.msra.mxu0 0
      %865 = vmatprep.subr.bf16.mxu0 0
      %866 = vmatpush1.bf16.msra.mxu0 0
      %867 = vmatprep.subr.bf16.mxu0 0
      %868 = vmatpush1.bf16.msra.mxu0 0
      %869 = vmatprep.subr.bf16.mxu0 0
      %870 = vmatpush1.bf16.msra.mxu0 0
      %871 = vmatprep.mubr.bf16.mxu0 0
      %872 = vmatmul.mubr.bf16.gmra.mrb[0].mxu0 %v837
      %v873 = vpop.f32.mrb[0].mxu0
      %v874 = vadd.f32 0.0, %v873
      %v875 = vpop.f32.mrb[0].mxu0
      %v876 = vpop.f32.mrb[0].mxu0
      %v877 = vpop.f32.mrb[0].mxu0
      %878 = vdwg.mxu0
      %v879 = vadd.f32 %v829, %v874
      %v880 = vadd.f32 %v879, %v701
      %v881 = vmax.f32 %v880, 0.0
      %882 = vmatprep.subr.bf16.mxu0 0
      %883 = vmatpush1.bf16.msra.mxu0 %v436
      %884 = vmatprep.subr.bf16.mxu0 0
      %885 = vmatpush1.bf16.msra.mxu0 %v437
      %886 = vmatprep.subr.bf16.mxu0 0
      %887 = vmatpush1.bf16.msra.mxu0 %v438
      %888 = vmatprep.subr.bf16.mxu0 0
      %889 = vmatpush1.bf16.msra.mxu0 %v439
      %890 = vmatprep.subr.bf16.mxu0 0
      %891 = vmatpush1.bf16.msra.mxu0 0
      %892 = vmatprep.subr.bf16.mxu0 0
      %893 = vmatpush1.bf16.msra.mxu0 0
      %894 = vmatprep.subr.bf16.mxu0 0
      %895 = vmatpush1.bf16.msra.mxu0 0
      %896 = vmatprep.subr.bf16.mxu0 0
      %897 = vmatpush1.bf16.msra.mxu0 0
      %898 = vmatprep.subr.bf16.mxu0 0
      %899 = vmatpush1.bf16.msra.mxu0 0
      %900 = vmatprep.subr.bf16.mxu0 0
      %901 = vmatpush1.bf16.msra.mxu0 0
      %902 = vmatprep.subr.bf16.mxu0 0
      %903 = vmatpush1.bf16.msra.mxu0 0
      %904 = vmatprep.subr.bf16.mxu0 0
      %905 = vmatpush1.bf16.msra.mxu0 0
      %906 = vmatprep.subr.bf16.mxu0 0
      %907 = vmatpush1.bf16.msra.mxu0 0
      %908 = vmatprep.subr.bf16.mxu0 0
      %909 = vmatpush1.bf16.msra.mxu0 0
      %910 = vmatprep.subr.bf16.mxu0 0
      %911 = vmatpush1.bf16.msra.mxu0 0
      %912 = vmatprep.subr.bf16.mxu0 0
      %913 = vmatpush1.bf16.msra.mxu0 0
      %914 = vmatprep.mubr.bf16.mxu0 0
      %915 = vmatmul.mubr.bf16.gmra.mrb[0].mxu0 %v837
      %v916 = vpop.f32.mrb[0].mxu0
      %v917 = vadd.f32 0.0, %v916
      %v918 = vpop.f32.mrb[0].mxu0
      %v919 = vpop.f32.mrb[0].mxu0
      %v920 = vpop.f32.mrb[0].mxu0
      %921 = vdwg.mxu0
      %922 = vmatprep.subr.bf16.mxu0 0
      %923 = vmatpush1.bf16.msra.mxu0 %v504
      %924 = vmatprep.subr.bf16.mxu0 0
      %925 = vmatpush1.bf16.msra.mxu0 %v505
      %926 = vmatprep.subr.bf16.mxu0 0
      %927 = vmatpush1.bf16.msra.mxu0 %v506
      %928 = vmatprep.subr.bf16.mxu0 0
      %929 = vmatpush1.bf16.msra.mxu0 %v507
      %930 = vmatprep.subr.bf16.mxu0 0
      %931 = vmatpush1.bf16.msra.mxu0 0
      %932 = vmatprep.subr.bf16.mxu0 0
      %933 = vmatpush1.bf16.msra.mxu0 0
      %934 = vmatprep.subr.bf16.mxu0 0
      %935 = vmatpush1.bf16.msra.mxu0 0
      %936 = vmatprep.subr.bf16.mxu0 0
      %937 = vmatpush1.bf16.msra.mxu0 0
      %938 = vmatprep.subr.bf16.mxu0 0
      %939 = vmatpush1.bf16.msra.mxu0 0
      %940 = vmatprep.subr.bf16.mxu0 0
      %941 = vmatpush1.bf16.msra.mxu0 0
      %942 = vmatprep.subr.bf16.mxu0 0
      %943 = vmatpush1.bf16.msra.mxu0 0
      %944 = vmatprep.subr.bf16.mxu0 0
      %945 = vmatpush1.bf16.msra.mxu0 0
      %946 = vmatprep.subr.bf16.mxu0 0
      %947 = vmatpush1.bf16.msra.mxu0 0
      %948 = vmatprep.subr.bf16.mxu0 0
      %949 = vmatpush1.bf16.msra.mxu0 0
      %950 = vmatprep.subr.bf16.mxu0 0
      %951 = vmatpush1.bf16.msra.mxu0 0
      %952 = vmatprep.subr.bf16.mxu0 0
      %953 = vmatpush1.bf16.msra.mxu0 0
      %954 = vmatprep.mubr.bf16.mxu0 0
      %955 = vmatmul.mubr.bf16.gmra.mrb[0].mxu0 %v787
      %v956 = vpop.f32.mrb[0].mxu0
      %v957 = vadd.f32 %v917, %v956
      %v958 = vpop.f32.mrb[0].mxu0
      %v959 = vpop.f32.mrb[0].mxu0
      %v960 = vpop.f32.mrb[0].mxu0
      %961 = vdwg.mxu0
      %v962 = vpack.c.bf16 %v340, %v340
      %v964 = vsel %vm444, %v962, 0
      %966 = vmatprep.subr.bf16.mxu0 0
      %967 = vmatpush1.bf16.msra.mxu0 %v571
      %968 = vmatprep.subr.bf16.mxu0 0
      %969 = vmatpush1.bf16.msra.mxu0 %v572
      %970 = vmatprep.subr.bf16.mxu0 0
      %971 = vmatpush1.bf16.msra.mxu0 %v573
      %972 = vmatprep.subr.bf16.mxu0 0
      %973 = vmatpush1.bf16.msra.mxu0 %v574
      %974 = vmatprep.subr.bf16.mxu0 0
      %975 = vmatpush1.bf16.msra.mxu0 0
      %976 = vmatprep.subr.bf16.mxu0 0
      %977 = vmatpush1.bf16.msra.mxu0 0
      %978 = vmatprep.subr.bf16.mxu0 0
      %979 = vmatpush1.bf16.msra.mxu0 0
      %980 = vmatprep.subr.bf16.mxu0 0
      %981 = vmatpush1.bf16.msra.mxu0 0
      %982 = vmatprep.subr.bf16.mxu0 0
      %983 = vmatpush1.bf16.msra.mxu0 0
      %984 = vmatprep.subr.bf16.mxu0 0
      %985 = vmatpush1.bf16.msra.mxu0 0
      %986 = vmatprep.subr.bf16.mxu0 0
      %987 = vmatpush1.bf16.msra.mxu0 0
      %988 = vmatprep.subr.bf16.mxu0 0
      %989 = vmatpush1.bf16.msra.mxu0 0
      %990 = vmatprep.subr.bf16.mxu0 0
      %991 = vmatpush1.bf16.msra.mxu0 0
      %992 = vmatprep.subr.bf16.mxu0 0
      %993 = vmatpush1.bf16.msra.mxu0 0
      %994 = vmatprep.subr.bf16.mxu0 0
      %995 = vmatpush1.bf16.msra.mxu0 0
      %996 = vmatprep.subr.bf16.mxu0 0
      %997 = vmatpush1.bf16.msra.mxu0 0
      %998 = vmatprep.mubr.bf16.mxu0 0
      %999 = vmatmul.mubr.bf16.gmra.mrb[0].mxu0 %v964
      %v1000 = vpop.f32.mrb[0].mxu0
      %v1001 = vadd.f32 0.0, %v1000
      %v1002 = vpop.f32.mrb[0].mxu0
      %v1003 = vpop.f32.mrb[0].mxu0
      %v1004 = vpop.f32.mrb[0].mxu0
      %1005 = vdwg.mxu0
      %v1006 = vadd.f32 %v957, %v1001
      %v1007 = vshrl.u32 %v962, 16
      %v1009 = vshll.u32 %v962, 16
      %v1011 = vrot.slane %v1009, 1
      %v1012 = vor.u32 %v1007, %v1011
      %v1014 = vsel %vm444, %v1012, 0
      %1016 = vmatprep.subr.bf16.mxu0 0
      %1017 = vmatpush1.bf16.msra.mxu0 %v645
      %1018 = vmatprep.subr.bf16.mxu0 0
      %1019 = vmatpush1.bf16.msra.mxu0 %v646
      %1020 = vmatprep.subr.bf16.mxu0 0
      %1021 = vmatpush1.bf16.msra.mxu0 %v647
      %1022 = vmatprep.subr.bf16.mxu0 0
      %1023 = vmatpush1.bf16.msra.mxu0 %v648
      %1024 = vmatprep.subr.bf16.mxu0 0
      %1025 = vmatpush1.bf16.msra.mxu0 0
      %1026 = vmatprep.subr.bf16.mxu0 0
      %1027 = vmatpush1.bf16.msra.mxu0 0
      %1028 = vmatprep.subr.bf16.mxu0 0
      %1029 = vmatpush1.bf16.msra.mxu0 0
      %1030 = vmatprep.subr.bf16.mxu0 0
      %1031 = vmatpush1.bf16.msra.mxu0 0
      %1032 = vmatprep.subr.bf16.mxu0 0
      %1033 = vmatpush1.bf16.msra.mxu0 0
      %1034 = vmatprep.subr.bf16.mxu0 0
      %1035 = vmatpush1.bf16.msra.mxu0 0
      %1036 = vmatprep.subr.bf16.mxu0 0
      %1037 = vmatpush1.bf16.msra.mxu0 0
      %1038 = vmatprep.subr.bf16.mxu0 0
      %1039 = vmatpush1.bf16.msra.mxu0 0
      %1040 = vmatprep.subr.bf16.mxu0 0
      %1041 = vmatpush1.bf16.msra.mxu0 0
      %1042 = vmatprep.subr.bf16.mxu0 0
      %1043 = vmatpush1.bf16.msra.mxu0 0
      %1044 = vmatprep.subr.bf16.mxu0 0
      %1045 = vmatpush1.bf16.msra.mxu0 0
      %1046 = vmatprep.subr.bf16.mxu0 0
      %1047 = vmatpush1.bf16.msra.mxu0 0
      %1048 = vmatprep.mubr.bf16.mxu0 0
      %1049 = vmatmul.mubr.bf16.gmra.mrb[0].mxu0 %v1014
      %v1050 = vpop.f32.mrb[0].mxu0
      %v1051 = vadd.f32 0.0, %v1050
      %v1052 = vpop.f32.mrb[0].mxu0
      %v1053 = vpop.f32.mrb[0].mxu0
      %v1054 = vpop.f32.mrb[0].mxu0
      %1055 = vdwg.mxu0
      %v1056 = vadd.f32 %v1006, %v1051
      %v1057 = vadd.f32 %v1056, %v701
      %v1058 = vmax.f32 %v1057, 0.0
      %1059 = vmatprep.subr.bf16.mxu0 0
      %1060 = vmatpush1.bf16.msra.mxu0 %v436
      %1061 = vmatprep.subr.bf16.mxu0 0
      %1062 = vmatpush1.bf16.msra.mxu0 %v437
      %1063 = vmatprep.subr.bf16.mxu0 0
      %1064 = vmatpush1.bf16.msra.mxu0 %v438
      %1065 = vmatprep.subr.bf16.mxu0 0
      %1066 = vmatpush1.bf16.msra.mxu0 %v439
      %1067 = vmatprep.subr.bf16.mxu0 0
      %1068 = vmatpush1.bf16.msra.mxu0 0
      %1069 = vmatprep.subr.bf16.mxu0 0
      %1070 = vmatpush1.bf16.msra.mxu0 0
      %1071 = vmatprep.subr.bf16.mxu0 0
      %1072 = vmatpush1.bf16.msra.mxu0 0
      %1073 = vmatprep.subr.bf16.mxu0 0
      %1074 = vmatpush1.bf16.msra.mxu0 0
      %1075 = vmatprep.subr.bf16.mxu0 0
      %1076 = vmatpush1.bf16.msra.mxu0 0
      %1077 = vmatprep.subr.bf16.mxu0 0
      %1078 = vmatpush1.bf16.msra.mxu0 0
      %1079 = vmatprep.subr.bf16.mxu0 0
      %1080 = vmatpush1.bf16.msra.mxu0 0
      %1081 = vmatprep.subr.bf16.mxu0 0
      %1082 = vmatpush1.bf16.msra.mxu0 0
      %1083 = vmatprep.subr.bf16.mxu0 0
      %1084 = vmatpush1.bf16.msra.mxu0 0
      %1085 = vmatprep.subr.bf16.mxu0 0
      %1086 = vmatpush1.bf16.msra.mxu0 0
      %1087 = vmatprep.subr.bf16.mxu0 0
      %1088 = vmatpush1.bf16.msra.mxu0 0
      %1089 = vmatprep.subr.bf16.mxu0 0
      %1090 = vmatpush1.bf16.msra.mxu0 0
      %1091 = vmatprep.mubr.bf16.mxu0 0
      %1092 = vmatmul.mubr.bf16.gmra.mrb[0].mxu0 %v1014
      %v1093 = vpop.f32.mrb[0].mxu0
      %v1094 = vadd.f32 0.0, %v1093
      %v1095 = vpop.f32.mrb[0].mxu0
      %v1096 = vpop.f32.mrb[0].mxu0
      %v1097 = vpop.f32.mrb[0].mxu0
      %1098 = vdwg.mxu0
      %1099 = vmatprep.subr.bf16.mxu0 0
      %1100 = vmatpush1.bf16.msra.mxu0 %v504
      %1101 = vmatprep.subr.bf16.mxu0 0
      %1102 = vmatpush1.bf16.msra.mxu0 %v505
      %1103 = vmatprep.subr.bf16.mxu0 0
      %1104 = vmatpush1.bf16.msra.mxu0 %v506
      %1105 = vmatprep.subr.bf16.mxu0 0
      %1106 = vmatpush1.bf16.msra.mxu0 %v507
      %1107 = vmatprep.subr.bf16.mxu0 0
      %1108 = vmatpush1.bf16.msra.mxu0 0
      %1109 = vmatprep.subr.bf16.mxu0 0
      %1110 = vmatpush1.bf16.msra.mxu0 0
      %1111 = vmatprep.subr.bf16.mxu0 0
      %1112 = vmatpush1.bf16.msra.mxu0 0
      %1113 = vmatprep.subr.bf16.mxu0 0
      %1114 = vmatpush1.bf16.msra.mxu0 0
      %1115 = vmatprep.subr.bf16.mxu0 0
      %1116 = vmatpush1.bf16.msra.mxu0 0
      %1117 = vmatprep.subr.bf16.mxu0 0
      %1118 = vmatpush1.bf16.msra.mxu0 0
      %1119 = vmatprep.subr.bf16.mxu0 0
      %1120 = vmatpush1.bf16.msra.mxu0 0
      %1121 = vmatprep.subr.bf16.mxu0 0
      %1122 = vmatpush1.bf16.msra.mxu0 0
      %1123 = vmatprep.subr.bf16.mxu0 0
      %1124 = vmatpush1.bf16.msra.mxu0 0
      %1125 = vmatprep.subr.bf16.mxu0 0
      %1126 = vmatpush1.bf16.msra.mxu0 0
      %1127 = vmatprep.subr.bf16.mxu0 0
      %1128 = vmatpush1.bf16.msra.mxu0 0
      %1129 = vmatprep.subr.bf16.mxu0 0
      %1130 = vmatpush1.bf16.msra.mxu0 0
      %1131 = vmatprep.mubr.bf16.mxu0 0
      %1132 = vmatmul.mubr.bf16.gmra.mrb[0].mxu0 %v964
      %v1133 = vpop.f32.mrb[0].mxu0
      %v1134 = vadd.f32 %v1094, %v1133
      %v1135 = vpop.f32.mrb[0].mxu0
      %v1136 = vpop.f32.mrb[0].mxu0
      %v1137 = vpop.f32.mrb[0].mxu0
      %1138 = vdwg.mxu0
      %v1139 = vpack.c.bf16 %v341, %v341
      %v1141 = vsel %vm444, %v1139, 0
      %1143 = vmatprep.subr.bf16.mxu0 0
      %1144 = vmatpush1.bf16.msra.mxu0 %v571
      %1145 = vmatprep.subr.bf16.mxu0 0
      %1146 = vmatpush1.bf16.msra.mxu0 %v572
      %1147 = vmatprep.subr.bf16.mxu0 0
      %1148 = vmatpush1.bf16.msra.mxu0 %v573
      %1149 = vmatprep.subr.bf16.mxu0 0
      %1150 = vmatpush1.bf16.msra.mxu0 %v574
      %1151 = vmatprep.subr.bf16.mxu0 0
      %1152 = vmatpush1.bf16.msra.mxu0 0
      %1153 = vmatprep.subr.bf16.mxu0 0
      %1154 = vmatpush1.bf16.msra.mxu0 0
      %1155 = vmatprep.subr.bf16.mxu0 0
      %1156 = vmatpush1.bf16.msra.mxu0 0
      %1157 = vmatprep.subr.bf16.mxu0 0
      %1158 = vmatpush1.bf16.msra.mxu0 0
      %1159 = vmatprep.subr.bf16.mxu0 0
      %1160 = vmatpush1.bf16.msra.mxu0 0
      %1161 = vmatprep.subr.bf16.mxu0 0
      %1162 = vmatpush1.bf16.msra.mxu0 0
      %1163 = vmatprep.subr.bf16.mxu0 0
      %1164 = vmatpush1.bf16.msra.mxu0 0
      %1165 = vmatprep.subr.bf16.mxu0 0
      %1166 = vmatpush1.bf16.msra.mxu0 0
      %1167 = vmatprep.subr.bf16.mxu0 0
      %1168 = vmatpush1.bf16.msra.mxu0 0
      %1169 = vmatprep.subr.bf16.mxu0 0
      %1170 = vmatpush1.bf16.msra.mxu0 0
      %1171 = vmatprep.subr.bf16.mxu0 0
      %1172 = vmatpush1.bf16.msra.mxu0 0
      %1173 = vmatprep.subr.bf16.mxu0 0
      %1174 = vmatpush1.bf16.msra.mxu0 0
      %1175 = vmatprep.mubr.bf16.mxu0 0
      %1176 = vmatmul.mubr.bf16.gmra.mrb[0].mxu0 %v1141
      %v1177 = vpop.f32.mrb[0].mxu0
      %v1178 = vadd.f32 0.0, %v1177
      %v1179 = vpop.f32.mrb[0].mxu0
      %v1180 = vpop.f32.mrb[0].mxu0
      %v1181 = vpop.f32.mrb[0].mxu0
      %1182 = vdwg.mxu0
      %v1183 = vadd.f32 %v1134, %v1178
      %v1184 = vshrl.u32 %v1139, 16
      %v1186 = vshll.u32 %v1139, 16
      %v1188 = vrot.slane %v1186, 1
      %v1189 = vor.u32 %v1184, %v1188
      %v1191 = vsel %vm444, %v1189, 0
      %1193 = vmatprep.subr.bf16.mxu0 0
      %1194 = vmatpush1.bf16.msra.mxu0 %v645
      %1195 = vmatprep.subr.bf16.mxu0 0
      %1196 = vmatpush1.bf16.msra.mxu0 %v646
      %1197 = vmatprep.subr.bf16.mxu0 0
      %1198 = vmatpush1.bf16.msra.mxu0 %v647
      %1199 = vmatprep.subr.bf16.mxu0 0
      %1200 = vmatpush1.bf16.msra.mxu0 %v648
      %1201 = vmatprep.subr.bf16.mxu0 0
      %1202 = vmatpush1.bf16.msra.mxu0 0
      %1203 = vmatprep.subr.bf16.mxu0 0
      %1204 = vmatpush1.bf16.msra.mxu0 0
      %1205 = vmatprep.subr.bf16.mxu0 0
      %1206 = vmatpush1.bf16.msra.mxu0 0
      %1207 = vmatprep.subr.bf16.mxu0 0
      %1208 = vmatpush1.bf16.msra.mxu0 0
      %1209 = vmatprep.subr.bf16.mxu0 0
      %1210 = vmatpush1.bf16.msra.mxu0 0
      %1211 = vmatprep.subr.bf16.mxu0 0
      %1212 = vmatpush1.bf16.msra.mxu0 0
      %1213 = vmatprep.subr.bf16.mxu0 0
      %1214 = vmatpush1.bf16.msra.mxu0 0
      %1215 = vmatprep.subr.bf16.mxu0 0
      %1216 = vmatpush1.bf16.msra.mxu0 0
      %1217 = vmatprep.subr.bf16.mxu0 0
      %1218 = vmatpush1.bf16.msra.mxu0 0
      %1219 = vmatprep.subr.bf16.mxu0 0
      %1220 = vmatpush1.bf16.msra.mxu0 0
      %1221 = vmatprep.subr.bf16.mxu0 0
      %1222 = vmatpush1.bf16.msra.mxu0 0
      %1223 = vmatprep.subr.bf16.mxu0 0
      %1224 = vmatpush1.bf16.msra.mxu0 0
      %1225 = vmatprep.mubr.bf16.mxu0 0
      %1226 = vmatmul.mubr.bf16.gmra.mrb[0].mxu0 %v1191
      %v1227 = vpop.f32.mrb[0].mxu0
      %v1228 = vadd.f32 0.0, %v1227
      %v1229 = vpop.f32.mrb[0].mxu0
      %v1230 = vpop.f32.mrb[0].mxu0
      %v1231 = vpop.f32.mrb[0].mxu0
      %1232 = vdwg.mxu0
      %v1233 = vadd.f32 %v1183, %v1228
      %v1234 = vadd.f32 %v1233, %v701
      %v1235 = vmax.f32 %v1234, 0.0
      %v1236 = vpack.c.bf16 %v704, %v704
      %v1238 = vshrl.u32 %v1236, 16
      %v1240 = vshll.u32 %v1236, 16
      %v1242 = vrot.slane %v1240, 1
      %v1243 = vor.u32 %v1238, %v1242
      %v1248 = vunpack.c.l.b16 %v380
      %v1249 = vunpack.c.l.b16 %v381
      %v1250 = vunpack.c.l.b16 %v382
      %v1251 = vunpack.c.l.b16 %v383
      %v1252 = vpack.c.b16 %v1249, %v1248
      %v1253 = vpack.c.b16 %v1251, %v1250
      %vm1256 = vcmask 261120
      %v1258 = vsel %vm1256, %v1243, 0
      %1260 = vmatprep.subr.bf16.mxu0 0
      %1261 = vmatpush1.bf16.msra.mxu0 %v1252
      %1262 = vmatprep.subr.bf16.mxu0 0
      %1263 = vmatpush1.bf16.msra.mxu0 %v1253
      %1264 = vmatprep.subr.bf16.mxu0 0
      %1265 = vmatpush1.bf16.msra.mxu0 0
      %1266 = vmatprep.subr.bf16.mxu0 0
      %1267 = vmatpush1.bf16.msra.mxu0 0
      %1268 = vmatprep.subr.bf16.mxu0 0
      %1269 = vmatpush1.bf16.msra.mxu0 0
      %1270 = vmatprep.subr.bf16.mxu0 0
      %1271 = vmatpush1.bf16.msra.mxu0 0
      %1272 = vmatprep.subr.bf16.mxu0 0
      %1273 = vmatpush1.bf16.msra.mxu0 0
      %1274 = vmatprep.subr.bf16.mxu0 0
      %1275 = vmatpush1.bf16.msra.mxu0 0
      %1276 = vmatprep.subr.bf16.mxu0 0
      %1277 = vmatpush1.bf16.msra.mxu0 0
      %1278 = vmatprep.subr.bf16.mxu0 0
      %1279 = vmatpush1.bf16.msra.mxu0 0
      %1280 = vmatprep.subr.bf16.mxu0 0
      %1281 = vmatpush1.bf16.msra.mxu0 0
      %1282 = vmatprep.subr.bf16.mxu0 0
      %1283 = vmatpush1.bf16.msra.mxu0 0
      %1284 = vmatprep.subr.bf16.mxu0 0
      %1285 = vmatpush1.bf16.msra.mxu0 0
      %1286 = vmatprep.subr.bf16.mxu0 0
      %1287 = vmatpush1.bf16.msra.mxu0 0
      %1288 = vmatprep.subr.bf16.mxu0 0
      %1289 = vmatpush1.bf16.msra.mxu0 0
      %1290 = vmatprep.subr.bf16.mxu0 0
      %1291 = vmatpush1.bf16.msra.mxu0 0
      %1292 = vmatprep.mubr.bf16.mxu0 0
      %1293 = vmatmul.mubr.bf16.gmra.mrb[0].mxu0 %v1258
      %v1294 = vpop.f32.mrb[0].mxu0
      %v1295 = vadd.f32 0.0, %v1294
      %v1296 = vpop.f32.mrb[0].mxu0
      %v1297 = vpop.f32.mrb[0].mxu0
      %v1298 = vpop.f32.mrb[0].mxu0
      %1299 = vdwg.mxu0
      %v1304 = vunpack.c.l.b16 %v376
      %v1305 = vunpack.c.l.b16 %v377
      %v1306 = vunpack.c.l.b16 %v378
      %v1307 = vunpack.c.l.b16 %v379
      %v1308 = vpack.c.b16 %v1305, %v1304
      %v1309 = vpack.c.b16 %v1307, %v1306
      %v1312 = vsel %vm1256, %v1236, 0
      %1314 = vmatprep.subr.bf16.mxu0 0
      %1315 = vmatpush1.bf16.msra.mxu0 %v1308
      %1316 = vmatprep.subr.bf16.mxu0 0
      %1317 = vmatpush1.bf16.msra.mxu0 %v1309
      %1318 = vmatprep.subr.bf16.mxu0 0
      %1319 = vmatpush1.bf16.msra.mxu0 0
      %1320 = vmatprep.subr.bf16.mxu0 0
      %1321 = vmatpush1.bf16.msra.mxu0 0
      %1322 = vmatprep.subr.bf16.mxu0 0
      %1323 = vmatpush1.bf16.msra.mxu0 0
      %1324 = vmatprep.subr.bf16.mxu0 0
      %1325 = vmatpush1.bf16.msra.mxu0 0
      %1326 = vmatprep.subr.bf16.mxu0 0
      %1327 = vmatpush1.bf16.msra.mxu0 0
      %1328 = vmatprep.subr.bf16.mxu0 0
      %1329 = vmatpush1.bf16.msra.mxu0 0
      %1330 = vmatprep.subr.bf16.mxu0 0
      %1331 = vmatpush1.bf16.msra.mxu0 0
      %1332 = vmatprep.subr.bf16.mxu0 0
      %1333 = vmatpush1.bf16.msra.mxu0 0
      %1334 = vmatprep.subr.bf16.mxu0 0
      %1335 = vmatpush1.bf16.msra.mxu0 0
      %1336 = vmatprep.subr.bf16.mxu0 0
      %1337 = vmatpush1.bf16.msra.mxu0 0
      %1338 = vmatprep.subr.bf16.mxu0 0
      %1339 = vmatpush1.bf16.msra.mxu0 0
      %1340 = vmatprep.subr.bf16.mxu0 0
      %1341 = vmatpush1.bf16.msra.mxu0 0
      %1342 = vmatprep.subr.bf16.mxu0 0
      %1343 = vmatpush1.bf16.msra.mxu0 0
      %1344 = vmatprep.subr.bf16.mxu0 0
      %1345 = vmatpush1.bf16.msra.mxu0 0
      %1346 = vmatprep.mubr.bf16.mxu0 0
      %1347 = vmatmul.mubr.bf16.gmra.mrb[0].mxu0 %v1312
      %v1348 = vpop.f32.mrb[0].mxu0
      %v1349 = vadd.f32 %v1295, %v1348
      %v1350 = vpop.f32.mrb[0].mxu0
      %v1351 = vpop.f32.mrb[0].mxu0
      %v1352 = vpop.f32.mrb[0].mxu0
      %1353 = vdwg.mxu0
      %v1355 = vrot.slane %v1236, 1
      %v1360 = vunpack.c.l.b16 %v384
      %v1361 = vunpack.c.l.b16 %v385
      %v1362 = vunpack.c.l.b16 %v386
      %v1363 = vunpack.c.l.b16 %v387
      %v1364 = vpack.c.b16 %v1361, %v1360
      %v1365 = vpack.c.b16 %v1363, %v1362
      %v1369 = vsel %vm1256, %v1355, 0
      %1371 = vmatprep.subr.bf16.mxu0 0
      %1372 = vmatpush1.bf16.msra.mxu0 %v1364
      %1373 = vmatprep.subr.bf16.mxu0 0
      %1374 = vmatpush1.bf16.msra.mxu0 %v1365
      %1375 = vmatprep.subr.bf16.mxu0 0
      %1376 = vmatpush1.bf16.msra.mxu0 0
      %1377 = vmatprep.subr.bf16.mxu0 0
      %1378 = vmatpush1.bf16.msra.mxu0 0
      %1379 = vmatprep.subr.bf16.mxu0 0
      %1380 = vmatpush1.bf16.msra.mxu0 0
      %1381 = vmatprep.subr.bf16.mxu0 0
      %1382 = vmatpush1.bf16.msra.mxu0 0
      %1383 = vmatprep.subr.bf16.mxu0 0
      %1384 = vmatpush1.bf16.msra.mxu0 0
      %1385 = vmatprep.subr.bf16.mxu0 0
      %1386 = vmatpush1.bf16.msra.mxu0 0
      %1387 = vmatprep.subr.bf16.mxu0 0
      %1388 = vmatpush1.bf16.msra.mxu0 0
      %1389 = vmatprep.subr.bf16.mxu0 0
      %1390 = vmatpush1.bf16.msra.mxu0 0
      %1391 = vmatprep.subr.bf16.mxu0 0
      %1392 = vmatpush1.bf16.msra.mxu0 0
      %1393 = vmatprep.subr.bf16.mxu0 0
      %1394 = vmatpush1.bf16.msra.mxu0 0
      %1395 = vmatprep.subr.bf16.mxu0 0
      %1396 = vmatpush1.bf16.msra.mxu0 0
      %1397 = vmatprep.subr.bf16.mxu0 0
      %1398 = vmatpush1.bf16.msra.mxu0 0
      %1399 = vmatprep.subr.bf16.mxu0 0
      %1400 = vmatpush1.bf16.msra.mxu0 0
      %1401 = vmatprep.subr.bf16.mxu0 0
      %1402 = vmatpush1.bf16.msra.mxu0 0
      %1403 = vmatprep.mubr.bf16.mxu0 0
      %1404 = vmatmul.mubr.bf16.gmra.mrb[0].mxu0 %v1369
      %v1405 = vpop.f32.mrb[0].mxu0
      %v1406 = vadd.f32 0.0, %v1405
      %v1407 = vpop.f32.mrb[0].mxu0
      %v1408 = vpop.f32.mrb[0].mxu0
      %v1409 = vpop.f32.mrb[0].mxu0
      %1410 = vdwg.mxu0
      %v1411 = vadd.f32 %v1349, %v1406
      %v1412 = vpack.c.bf16 %v881, %v881
      %v1417 = vunpack.c.l.b16 %v388
      %v1418 = vunpack.c.l.b16 %v389
      %v1419 = vunpack.c.l.b16 %v390
      %v1420 = vunpack.c.l.b16 %v391
      %v1421 = vpack.c.b16 %v1418, %v1417
      %v1422 = vpack.c.b16 %v1420, %v1419
      %v1426 = vsel %vm1256, %v1412, 0
      %1428 = vmatprep.subr.bf16.mxu0 0
      %1429 = vmatpush1.bf16.msra.mxu0 %v1421
      %1430 = vmatprep.subr.bf16.mxu0 0
      %1431 = vmatpush1.bf16.msra.mxu0 %v1422
      %1432 = vmatprep.subr.bf16.mxu0 0
      %1433 = vmatpush1.bf16.msra.mxu0 0
      %1434 = vmatprep.subr.bf16.mxu0 0
      %1435 = vmatpush1.bf16.msra.mxu0 0
      %1436 = vmatprep.subr.bf16.mxu0 0
      %1437 = vmatpush1.bf16.msra.mxu0 0
      %1438 = vmatprep.subr.bf16.mxu0 0
      %1439 = vmatpush1.bf16.msra.mxu0 0
      %1440 = vmatprep.subr.bf16.mxu0 0
      %1441 = vmatpush1.bf16.msra.mxu0 0
      %1442 = vmatprep.subr.bf16.mxu0 0
      %1443 = vmatpush1.bf16.msra.mxu0 0
      %1444 = vmatprep.subr.bf16.mxu0 0
      %1445 = vmatpush1.bf16.msra.mxu0 0
      %1446 = vmatprep.subr.bf16.mxu0 0
      %1447 = vmatpush1.bf16.msra.mxu0 0
      %1448 = vmatprep.subr.bf16.mxu0 0
      %1449 = vmatpush1.bf16.msra.mxu0 0
      %1450 = vmatprep.subr.bf16.mxu0 0
      %1451 = vmatpush1.bf16.msra.mxu0 0
      %1452 = vmatprep.subr.bf16.mxu0 0
      %1453 = vmatpush1.bf16.msra.mxu0 0
      %1454 = vmatprep.subr.bf16.mxu0 0
      %1455 = vmatpush1.bf16.msra.mxu0 0
      %1456 = vmatprep.subr.bf16.mxu0 0
      %1457 = vmatpush1.bf16.msra.mxu0 0
      %1458 = vmatprep.subr.bf16.mxu0 0
      %1459 = vmatpush1.bf16.msra.mxu0 0
      %1460 = vmatprep.mubr.bf16.mxu0 0
      %1461 = vmatmul.mubr.bf16.gmra.mrb[0].mxu0 %v1426
      %v1462 = vpop.f32.mrb[0].mxu0
      %v1463 = vadd.f32 0.0, %v1462
      %v1464 = vpop.f32.mrb[0].mxu0
      %v1465 = vpop.f32.mrb[0].mxu0
      %v1466 = vpop.f32.mrb[0].mxu0
      %1467 = vdwg.mxu0
      %v1468 = vadd.f32 %v1411, %v1463
      %v1469 = vshrl.u32 %v1412, 16
      %v1471 = vshll.u32 %v1412, 16
      %v1473 = vrot.slane %v1471, 1
      %v1474 = vor.u32 %v1469, %v1473
      %v1479 = vunpack.c.l.b16 %v392
      %v1480 = vunpack.c.l.b16 %v393
      %v1481 = vunpack.c.l.b16 %v394
      %v1482 = vunpack.c.l.b16 %v395
      %v1483 = vpack.c.b16 %v1480, %v1479
      %v1484 = vpack.c.b16 %v1482, %v1481
      %v1488 = vsel %vm1256, %v1474, 0
      %1490 = vmatprep.subr.bf16.mxu0 0
      %1491 = vmatpush1.bf16.msra.mxu0 %v1483
      %1492 = vmatprep.subr.bf16.mxu0 0
      %1493 = vmatpush1.bf16.msra.mxu0 %v1484
      %1494 = vmatprep.subr.bf16.mxu0 0
      %1495 = vmatpush1.bf16.msra.mxu0 0
      %1496 = vmatprep.subr.bf16.mxu0 0
      %1497 = vmatpush1.bf16.msra.mxu0 0
      %1498 = vmatprep.subr.bf16.mxu0 0
      %1499 = vmatpush1.bf16.msra.mxu0 0
      %1500 = vmatprep.subr.bf16.mxu0 0
      %1501 = vmatpush1.bf16.msra.mxu0 0
      %1502 = vmatprep.subr.bf16.mxu0 0
      %1503 = vmatpush1.bf16.msra.mxu0 0
      %1504 = vmatprep.subr.bf16.mxu0 0
      %1505 = vmatpush1.bf16.msra.mxu0 0
      %1506 = vmatprep.subr.bf16.mxu0 0
      %1507 = vmatpush1.bf16.msra.mxu0 0
      %1508 = vmatprep.subr.bf16.mxu0 0
      %1509 = vmatpush1.bf16.msra.mxu0 0
      %1510 = vmatprep.subr.bf16.mxu0 0
      %1511 = vmatpush1.bf16.msra.mxu0 0
      %1512 = vmatprep.subr.bf16.mxu0 0
      %1513 = vmatpush1.bf16.msra.mxu0 0
      %1514 = vmatprep.subr.bf16.mxu0 0
      %1515 = vmatpush1.bf16.msra.mxu0 0
      %1516 = vmatprep.subr.bf16.mxu0 0
      %1517 = vmatpush1.bf16.msra.mxu0 0
      %1518 = vmatprep.subr.bf16.mxu0 0
      %1519 = vmatpush1.bf16.msra.mxu0 0
      %1520 = vmatprep.subr.bf16.mxu0 0
      %1521 = vmatpush1.bf16.msra.mxu0 0
      %1522 = vmatprep.mubr.bf16.mxu0 0
      %1523 = vmatmul.mubr.bf16.gmra.mrb[0].mxu0 %v1488
      %v1524 = vpop.f32.mrb[0].mxu0
      %v1525 = vadd.f32 0.0, %v1524
      %v1526 = vpop.f32.mrb[0].mxu0
      %v1527 = vpop.f32.mrb[0].mxu0
      %v1528 = vpop.f32.mrb[0].mxu0
      %1529 = vdwg.mxu0
      %v1530 = vadd.f32 %v1468, %v1525
      %v1532 = vrot.slane %v1412, 1
      %v1537 = vunpack.c.l.b16 %v396
      %v1538 = vunpack.c.l.b16 %v397
      %v1539 = vunpack.c.l.b16 %v398
      %v1540 = vunpack.c.l.b16 %v399
      %v1541 = vpack.c.b16 %v1538, %v1537
      %v1542 = vpack.c.b16 %v1540, %v1539
      %v1546 = vsel %vm1256, %v1532, 0
      %1548 = vmatprep.subr.bf16.mxu0 0
      %1549 = vmatpush1.bf16.msra.mxu0 %v1541
      %1550 = vmatprep.subr.bf16.mxu0 0
      %1551 = vmatpush1.bf16.msra.mxu0 %v1542
      %1552 = vmatprep.subr.bf16.mxu0 0
      %1553 = vmatpush1.bf16.msra.mxu0 0
      %1554 = vmatprep.subr.bf16.mxu0 0
      %1555 = vmatpush1.bf16.msra.mxu0 0
      %1556 = vmatprep.subr.bf16.mxu0 0
      %1557 = vmatpush1.bf16.msra.mxu0 0
      %1558 = vmatprep.subr.bf16.mxu0 0
      %1559 = vmatpush1.bf16.msra.mxu0 0
      %1560 = vmatprep.subr.bf16.mxu0 0
      %1561 = vmatpush1.bf16.msra.mxu0 0
      %1562 = vmatprep.subr.bf16.mxu0 0
      %1563 = vmatpush1.bf16.msra.mxu0 0
      %1564 = vmatprep.subr.bf16.mxu0 0
      %1565 = vmatpush1.bf16.msra.mxu0 0
      %1566 = vmatprep.subr.bf16.mxu0 0
      %1567 = vmatpush1.bf16.msra.mxu0 0
      %1568 = vmatprep.subr.bf16.mxu0 0
      %1569 = vmatpush1.bf16.msra.mxu0 0
      %1570 = vmatprep.subr.bf16.mxu0 0
      %1571 = vmatpush1.bf16.msra.mxu0 0
      %1572 = vmatprep.subr.bf16.mxu0 0
      %1573 = vmatpush1.bf16.msra.mxu0 0
      %1574 = vmatprep.subr.bf16.mxu0 0
      %1575 = vmatpush1.bf16.msra.mxu0 0
      %1576 = vmatprep.subr.bf16.mxu0 0
      %1577 = vmatpush1.bf16.msra.mxu0 0
      %1578 = vmatprep.subr.bf16.mxu0 0
      %1579 = vmatpush1.bf16.msra.mxu0 0
      %1580 = vmatprep.mubr.bf16.mxu0 0
      %1581 = vmatmul.mubr.bf16.gmra.mrb[0].mxu0 %v1546
      %v1582 = vpop.f32.mrb[0].mxu0
      %v1583 = vadd.f32 0.0, %v1582
      %v1584 = vpop.f32.mrb[0].mxu0
      %v1585 = vpop.f32.mrb[0].mxu0
      %v1586 = vpop.f32.mrb[0].mxu0
      %1587 = vdwg.mxu0
      %v1588 = vadd.f32 %v1530, %v1583
      %v1589 = vpack.c.bf16 %v1058, %v1058
      %v1594 = vunpack.c.l.b16 %v400
      %v1595 = vunpack.c.l.b16 %v401
      %v1596 = vunpack.c.l.b16 %v402
      %v1597 = vunpack.c.l.b16 %v403
      %v1598 = vpack.c.b16 %v1595, %v1594
      %v1599 = vpack.c.b16 %v1597, %v1596
      %v1603 = vsel %vm1256, %v1589, 0
      %1605 = vmatprep.subr.bf16.mxu0 0
      %1606 = vmatpush1.bf16.msra.mxu0 %v1598
      %1607 = vmatprep.subr.bf16.mxu0 0
      %1608 = vmatpush1.bf16.msra.mxu0 %v1599
      %1609 = vmatprep.subr.bf16.mxu0 0
      %1610 = vmatpush1.bf16.msra.mxu0 0
      %1611 = vmatprep.subr.bf16.mxu0 0
      %1612 = vmatpush1.bf16.msra.mxu0 0
      %1613 = vmatprep.subr.bf16.mxu0 0
      %1614 = vmatpush1.bf16.msra.mxu0 0
      %1615 = vmatprep.subr.bf16.mxu0 0
      %1616 = vmatpush1.bf16.msra.mxu0 0
      %1617 = vmatprep.subr.bf16.mxu0 0
      %1618 = vmatpush1.bf16.msra.mxu0 0
      %1619 = vmatprep.subr.bf16.mxu0 0
      %1620 = vmatpush1.bf16.msra.mxu0 0
      %1621 = vmatprep.subr.bf16.mxu0 0
      %1622 = vmatpush1.bf16.msra.mxu0 0
      %1623 = vmatprep.subr.bf16.mxu0 0
      %1624 = vmatpush1.bf16.msra.mxu0 0
      %1625 = vmatprep.subr.bf16.mxu0 0
      %1626 = vmatpush1.bf16.msra.mxu0 0
      %1627 = vmatprep.subr.bf16.mxu0 0
      %1628 = vmatpush1.bf16.msra.mxu0 0
      %1629 = vmatprep.subr.bf16.mxu0 0
      %1630 = vmatpush1.bf16.msra.mxu0 0
      %1631 = vmatprep.subr.bf16.mxu0 0
      %1632 = vmatpush1.bf16.msra.mxu0 0
      %1633 = vmatprep.subr.bf16.mxu0 0
      %1634 = vmatpush1.bf16.msra.mxu0 0
      %1635 = vmatprep.subr.bf16.mxu0 0
      %1636 = vmatpush1.bf16.msra.mxu0 0
      %1637 = vmatprep.mubr.bf16.mxu0 0
      %1638 = vmatmul.mubr.bf16.gmra.mrb[0].mxu0 %v1603
      %v1639 = vpop.f32.mrb[0].mxu0
      %v1640 = vadd.f32 0.0, %v1639
      %v1641 = vpop.f32.mrb[0].mxu0
      %v1642 = vpop.f32.mrb[0].mxu0
      %v1643 = vpop.f32.mrb[0].mxu0
      %1644 = vdwg.mxu0
      %v1645 = vadd.f32 %v1588, %v1640
      %v1646 = vshrl.u32 %v1589, 16
      %v1648 = vshll.u32 %v1589, 16
      %v1650 = vrot.slane %v1648, 1
      %v1651 = vor.u32 %v1646, %v1650
      %v1656 = vunpack.c.l.b16 %v404
      %v1657 = vunpack.c.l.b16 %v405
      %v1658 = vunpack.c.l.b16 %v406
      %v1659 = vunpack.c.l.b16 %v407
      %v1660 = vpack.c.b16 %v1657, %v1656
      %v1661 = vpack.c.b16 %v1659, %v1658
      %v1665 = vsel %vm1256, %v1651, 0
      %1667 = vmatprep.subr.bf16.mxu0 0
      %1668 = vmatpush1.bf16.msra.mxu0 %v1660
      %1669 = vmatprep.subr.bf16.mxu0 0
      %1670 = vmatpush1.bf16.msra.mxu0 %v1661
      %1671 = vmatprep.subr.bf16.mxu0 0
      %1672 = vmatpush1.bf16.msra.mxu0 0
      %1673 = vmatprep.subr.bf16.mxu0 0
      %1674 = vmatpush1.bf16.msra.mxu0 0
      %1675 = vmatprep.subr.bf16.mxu0 0
      %1676 = vmatpush1.bf16.msra.mxu0 0
      %1677 = vmatprep.subr.bf16.mxu0 0
      %1678 = vmatpush1.bf16.msra.mxu0 0
      %1679 = vmatprep.subr.bf16.mxu0 0
      %1680 = vmatpush1.bf16.msra.mxu0 0
      %1681 = vmatprep.subr.bf16.mxu0 0
      %1682 = vmatpush1.bf16.msra.mxu0 0
      %1683 = vmatprep.subr.bf16.mxu0 0
      %1684 = vmatpush1.bf16.msra.mxu0 0
      %1685 = vmatprep.subr.bf16.mxu0 0
      %1686 = vmatpush1.bf16.msra.mxu0 0
      %1687 = vmatprep.subr.bf16.mxu0 0
      %1688 = vmatpush1.bf16.msra.mxu0 0
      %1689 = vmatprep.subr.bf16.mxu0 0
      %1690 = vmatpush1.bf16.msra.mxu0 0
      %1691 = vmatprep.subr.bf16.mxu0 0
      %1692 = vmatpush1.bf16.msra.mxu0 0
      %1693 = vmatprep.subr.bf16.mxu0 0
      %1694 = vmatpush1.bf16.msra.mxu0 0
      %1695 = vmatprep.subr.bf16.mxu0 0
      %1696 = vmatpush1.bf16.msra.mxu0 0
      %1697 = vmatprep.subr.bf16.mxu0 0
      %1698 = vmatpush1.bf16.msra.mxu0 0
      %1699 = vmatprep.mubr.bf16.mxu0 0
      %1700 = vmatmul.mubr.bf16.gmra.mrb[0].mxu0 %v1665
      %v1701 = vpop.f32.mrb[0].mxu0
      %v1702 = vadd.f32 0.0, %v1701
      %v1703 = vpop.f32.mrb[0].mxu0
      %v1704 = vpop.f32.mrb[0].mxu0
      %v1705 = vpop.f32.mrb[0].mxu0
      %1706 = vdwg.mxu0
      %v1707 = vadd.f32 %v1645, %v1702
      %v1709 = vrot.slane %v1589, 1
      %v1714 = vunpack.c.l.b16 %v408
      %v1715 = vunpack.c.l.b16 %v409
      %v1716 = vunpack.c.l.b16 %v410
      %v1717 = vunpack.c.l.b16 %v411
      %v1718 = vpack.c.b16 %v1715, %v1714
      %v1719 = vpack.c.b16 %v1717, %v1716
      %v1723 = vsel %vm1256, %v1709, 0
      %1725 = vmatprep.subr.bf16.mxu0 0
      %1726 = vmatpush1.bf16.msra.mxu0 %v1718
      %1727 = vmatprep.subr.bf16.mxu0 0
      %1728 = vmatpush1.bf16.msra.mxu0 %v1719
      %1729 = vmatprep.subr.bf16.mxu0 0
      %1730 = vmatpush1.bf16.msra.mxu0 0
      %1731 = vmatprep.subr.bf16.mxu0 0
      %1732 = vmatpush1.bf16.msra.mxu0 0
      %1733 = vmatprep.subr.bf16.mxu0 0
      %1734 = vmatpush1.bf16.msra.mxu0 0
      %1735 = vmatprep.subr.bf16.mxu0 0
      %1736 = vmatpush1.bf16.msra.mxu0 0
      %1737 = vmatprep.subr.bf16.mxu0 0
      %1738 = vmatpush1.bf16.msra.mxu0 0
      %1739 = vmatprep.subr.bf16.mxu0 0
      %1740 = vmatpush1.bf16.msra.mxu0 0
      %1741 = vmatprep.subr.bf16.mxu0 0
      %1742 = vmatpush1.bf16.msra.mxu0 0
      %1743 = vmatprep.subr.bf16.mxu0 0
      %1744 = vmatpush1.bf16.msra.mxu0 0
      %1745 = vmatprep.subr.bf16.mxu0 0
      %1746 = vmatpush1.bf16.msra.mxu0 0
      %1747 = vmatprep.subr.bf16.mxu0 0
      %1748 = vmatpush1.bf16.msra.mxu0 0
      %1749 = vmatprep.subr.bf16.mxu0 0
      %1750 = vmatpush1.bf16.msra.mxu0 0
      %1751 = vmatprep.subr.bf16.mxu0 0
      %1752 = vmatpush1.bf16.msra.mxu0 0
      %1753 = vmatprep.subr.bf16.mxu0 0
      %1754 = vmatpush1.bf16.msra.mxu0 0
      %1755 = vmatprep.subr.bf16.mxu0 0
      %1756 = vmatpush1.bf16.msra.mxu0 0
      %1757 = vmatprep.mubr.bf16.mxu0 0
      %1758 = vmatmul.mubr.bf16.gmra.mrb[0].mxu0 %v1723
      %v1759 = vpop.f32.mrb[0].mxu0
      %v1760 = vadd.f32 0.0, %v1759
      %v1761 = vpop.f32.mrb[0].mxu0
      %v1762 = vpop.f32.mrb[0].mxu0
      %v1763 = vpop.f32.mrb[0].mxu0
      %1764 = vdwg.mxu0
      %v1765 = vadd.f32 %v1707, %v1760
      %v1767 = vlaneseq
      %v1768 = vshrl.u32 %v1767, 7
      %v1769 = vsub.s32 0, %v1768
      %v1770 = vrot.slane %v343, %v1769
      %v1772 = vadd.f32 %v1765, %v1770
      %v1773 = vmax.f32 %v1772, 0.0
      %1774 = vmatprep.subr.bf16.mxu0 0
      %1775 = vmatpush1.bf16.msra.mxu0 %v1252
      %1776 = vmatprep.subr.bf16.mxu0 0
      %1777 = vmatpush1.bf16.msra.mxu0 %v1253
      %1778 = vmatprep.subr.bf16.mxu0 0
      %1779 = vmatpush1.bf16.msra.mxu0 0
      %1780 = vmatprep.subr.bf16.mxu0 0
      %1781 = vmatpush1.bf16.msra.mxu0 0
      %1782 = vmatprep.subr.bf16.mxu0 0
      %1783 = vmatpush1.bf16.msra.mxu0 0
      %1784 = vmatprep.subr.bf16.mxu0 0
      %1785 = vmatpush1.bf16.msra.mxu0 0
      %1786 = vmatprep.subr.bf16.mxu0 0
      %1787 = vmatpush1.bf16.msra.mxu0 0
      %1788 = vmatprep.subr.bf16.mxu0 0
      %1789 = vmatpush1.bf16.msra.mxu0 0
      %1790 = vmatprep.subr.bf16.mxu0 0
      %1791 = vmatpush1.bf16.msra.mxu0 0
      %1792 = vmatprep.subr.bf16.mxu0 0
      %1793 = vmatpush1.bf16.msra.mxu0 0
      %1794 = vmatprep.subr.bf16.mxu0 0
      %1795 = vmatpush1.bf16.msra.mxu0 0
      %1796 = vmatprep.subr.bf16.mxu0 0
      %1797 = vmatpush1.bf16.msra.mxu0 0
      %1798 = vmatprep.subr.bf16.mxu0 0
      %1799 = vmatpush1.bf16.msra.mxu0 0
      %1800 = vmatprep.subr.bf16.mxu0 0
      %1801 = vmatpush1.bf16.msra.mxu0 0
      %1802 = vmatprep.subr.bf16.mxu0 0
      %1803 = vmatpush1.bf16.msra.mxu0 0
      %1804 = vmatprep.subr.bf16.mxu0 0
      %1805 = vmatpush1.bf16.msra.mxu0 0
      %1806 = vmatprep.mubr.bf16.mxu0 0
      %1807 = vmatmul.mubr.bf16.gmra.mrb[0].mxu0 %v1488
      %v1808 = vpop.f32.mrb[0].mxu0
      %v1809 = vadd.f32 0.0, %v1808
      %v1810 = vpop.f32.mrb[0].mxu0
      %v1811 = vpop.f32.mrb[0].mxu0
      %v1812 = vpop.f32.mrb[0].mxu0
      %1813 = vdwg.mxu0
      %1814 = vmatprep.subr.bf16.mxu0 0
      %1815 = vmatpush1.bf16.msra.mxu0 %v1308
      %1816 = vmatprep.subr.bf16.mxu0 0
      %1817 = vmatpush1.bf16.msra.mxu0 %v1309
      %1818 = vmatprep.subr.bf16.mxu0 0
      %1819 = vmatpush1.bf16.msra.mxu0 0
      %1820 = vmatprep.subr.bf16.mxu0 0
      %1821 = vmatpush1.bf16.msra.mxu0 0
      %1822 = vmatprep.subr.bf16.mxu0 0
      %1823 = vmatpush1.bf16.msra.mxu0 0
      %1824 = vmatprep.subr.bf16.mxu0 0
      %1825 = vmatpush1.bf16.msra.mxu0 0
      %1826 = vmatprep.subr.bf16.mxu0 0
      %1827 = vmatpush1.bf16.msra.mxu0 0
      %1828 = vmatprep.subr.bf16.mxu0 0
      %1829 = vmatpush1.bf16.msra.mxu0 0
      %1830 = vmatprep.subr.bf16.mxu0 0
      %1831 = vmatpush1.bf16.msra.mxu0 0
      %1832 = vmatprep.subr.bf16.mxu0 0
      %1833 = vmatpush1.bf16.msra.mxu0 0
      %1834 = vmatprep.subr.bf16.mxu0 0
      %1835 = vmatpush1.bf16.msra.mxu0 0
      %1836 = vmatprep.subr.bf16.mxu0 0
      %1837 = vmatpush1.bf16.msra.mxu0 0
      %1838 = vmatprep.subr.bf16.mxu0 0
      %1839 = vmatpush1.bf16.msra.mxu0 0
      %1840 = vmatprep.subr.bf16.mxu0 0
      %1841 = vmatpush1.bf16.msra.mxu0 0
      %1842 = vmatprep.subr.bf16.mxu0 0
      %1843 = vmatpush1.bf16.msra.mxu0 0
      %1844 = vmatprep.subr.bf16.mxu0 0
      %1845 = vmatpush1.bf16.msra.mxu0 0
      %1846 = vmatprep.mubr.bf16.mxu0 0
      %1847 = vmatmul.mubr.bf16.gmra.mrb[0].mxu0 %v1426
      %v1848 = vpop.f32.mrb[0].mxu0
      %v1849 = vadd.f32 %v1809, %v1848
      %v1850 = vpop.f32.mrb[0].mxu0
      %v1851 = vpop.f32.mrb[0].mxu0
      %v1852 = vpop.f32.mrb[0].mxu0
      %1853 = vdwg.mxu0
      %1854 = vmatprep.subr.bf16.mxu0 0
      %1855 = vmatpush1.bf16.msra.mxu0 %v1364
      %1856 = vmatprep.subr.bf16.mxu0 0
      %1857 = vmatpush1.bf16.msra.mxu0 %v1365
      %1858 = vmatprep.subr.bf16.mxu0 0
      %1859 = vmatpush1.bf16.msra.mxu0 0
      %1860 = vmatprep.subr.bf16.mxu0 0
      %1861 = vmatpush1.bf16.msra.mxu0 0
      %1862 = vmatprep.subr.bf16.mxu0 0
      %1863 = vmatpush1.bf16.msra.mxu0 0
      %1864 = vmatprep.subr.bf16.mxu0 0
      %1865 = vmatpush1.bf16.msra.mxu0 0
      %1866 = vmatprep.subr.bf16.mxu0 0
      %1867 = vmatpush1.bf16.msra.mxu0 0
      %1868 = vmatprep.subr.bf16.mxu0 0
      %1869 = vmatpush1.bf16.msra.mxu0 0
      %1870 = vmatprep.subr.bf16.mxu0 0
      %1871 = vmatpush1.bf16.msra.mxu0 0
      %1872 = vmatprep.subr.bf16.mxu0 0
      %1873 = vmatpush1.bf16.msra.mxu0 0
      %1874 = vmatprep.subr.bf16.mxu0 0
      %1875 = vmatpush1.bf16.msra.mxu0 0
      %1876 = vmatprep.subr.bf16.mxu0 0
      %1877 = vmatpush1.bf16.msra.mxu0 0
      %1878 = vmatprep.subr.bf16.mxu0 0
      %1879 = vmatpush1.bf16.msra.mxu0 0
      %1880 = vmatprep.subr.bf16.mxu0 0
      %1881 = vmatpush1.bf16.msra.mxu0 0
      %1882 = vmatprep.subr.bf16.mxu0 0
      %1883 = vmatpush1.bf16.msra.mxu0 0
      %1884 = vmatprep.subr.bf16.mxu0 0
      %1885 = vmatpush1.bf16.msra.mxu0 0
      %1886 = vmatprep.mubr.bf16.mxu0 0
      %1887 = vmatmul.mubr.bf16.gmra.mrb[0].mxu0 %v1546
      %v1888 = vpop.f32.mrb[0].mxu0
      %v1889 = vadd.f32 0.0, %v1888
      %v1890 = vpop.f32.mrb[0].mxu0
      %v1891 = vpop.f32.mrb[0].mxu0
      %v1892 = vpop.f32.mrb[0].mxu0
      %1893 = vdwg.mxu0
      %v1894 = vadd.f32 %v1849, %v1889
      %1895 = vmatprep.subr.bf16.mxu0 0
      %1896 = vmatpush1.bf16.msra.mxu0 %v1421
      %1897 = vmatprep.subr.bf16.mxu0 0
      %1898 = vmatpush1.bf16.msra.mxu0 %v1422
      %1899 = vmatprep.subr.bf16.mxu0 0
      %1900 = vmatpush1.bf16.msra.mxu0 0
      %1901 = vmatprep.subr.bf16.mxu0 0
      %1902 = vmatpush1.bf16.msra.mxu0 0
      %1903 = vmatprep.subr.bf16.mxu0 0
      %1904 = vmatpush1.bf16.msra.mxu0 0
      %1905 = vmatprep.subr.bf16.mxu0 0
      %1906 = vmatpush1.bf16.msra.mxu0 0
      %1907 = vmatprep.subr.bf16.mxu0 0
      %1908 = vmatpush1.bf16.msra.mxu0 0
      %1909 = vmatprep.subr.bf16.mxu0 0
      %1910 = vmatpush1.bf16.msra.mxu0 0
      %1911 = vmatprep.subr.bf16.mxu0 0
      %1912 = vmatpush1.bf16.msra.mxu0 0
      %1913 = vmatprep.subr.bf16.mxu0 0
      %1914 = vmatpush1.bf16.msra.mxu0 0
      %1915 = vmatprep.subr.bf16.mxu0 0
      %1916 = vmatpush1.bf16.msra.mxu0 0
      %1917 = vmatprep.subr.bf16.mxu0 0
      %1918 = vmatpush1.bf16.msra.mxu0 0
      %1919 = vmatprep.subr.bf16.mxu0 0
      %1920 = vmatpush1.bf16.msra.mxu0 0
      %1921 = vmatprep.subr.bf16.mxu0 0
      %1922 = vmatpush1.bf16.msra.mxu0 0
      %1923 = vmatprep.subr.bf16.mxu0 0
      %1924 = vmatpush1.bf16.msra.mxu0 0
      %1925 = vmatprep.subr.bf16.mxu0 0
      %1926 = vmatpush1.bf16.msra.mxu0 0
      %1927 = vmatprep.mubr.bf16.mxu0 0
      %1928 = vmatmul.mubr.bf16.gmra.mrb[0].mxu0 %v1603
      %v1929 = vpop.f32.mrb[0].mxu0
      %v1930 = vadd.f32 0.0, %v1929
      %v1931 = vpop.f32.mrb[0].mxu0
      %v1932 = vpop.f32.mrb[0].mxu0
      %v1933 = vpop.f32.mrb[0].mxu0
      %1934 = vdwg.mxu0
      %v1935 = vadd.f32 %v1894, %v1930
      %1936 = vmatprep.subr.bf16.mxu0 0
      %1937 = vmatpush1.bf16.msra.mxu0 %v1483
      %1938 = vmatprep.subr.bf16.mxu0 0
      %1939 = vmatpush1.bf16.msra.mxu0 %v1484
      %1940 = vmatprep.subr.bf16.mxu0 0
      %1941 = vmatpush1.bf16.msra.mxu0 0
      %1942 = vmatprep.subr.bf16.mxu0 0
      %1943 = vmatpush1.bf16.msra.mxu0 0
      %1944 = vmatprep.subr.bf16.mxu0 0
      %1945 = vmatpush1.bf16.msra.mxu0 0
      %1946 = vmatprep.subr.bf16.mxu0 0
      %1947 = vmatpush1.bf16.msra.mxu0 0
      %1948 = vmatprep.subr.bf16.mxu0 0
      %1949 = vmatpush1.bf16.msra.mxu0 0
      %1950 = vmatprep.subr.bf16.mxu0 0
      %1951 = vmatpush1.bf16.msra.mxu0 0
      %1952 = vmatprep.subr.bf16.mxu0 0
      %1953 = vmatpush1.bf16.msra.mxu0 0
      %1954 = vmatprep.subr.bf16.mxu0 0
      %1955 = vmatpush1.bf16.msra.mxu0 0
      %1956 = vmatprep.subr.bf16.mxu0 0
      %1957 = vmatpush1.bf16.msra.mxu0 0
      %1958 = vmatprep.subr.bf16.mxu0 0
      %1959 = vmatpush1.bf16.msra.mxu0 0
      %1960 = vmatprep.subr.bf16.mxu0 0
      %1961 = vmatpush1.bf16.msra.mxu0 0
      %1962 = vmatprep.subr.bf16.mxu0 0
      %1963 = vmatpush1.bf16.msra.mxu0 0
      %1964 = vmatprep.subr.bf16.mxu0 0
      %1965 = vmatpush1.bf16.msra.mxu0 0
      %1966 = vmatprep.subr.bf16.mxu0 0
      %1967 = vmatpush1.bf16.msra.mxu0 0
      %1968 = vmatprep.mubr.bf16.mxu0 0
      %1969 = vmatmul.mubr.bf16.gmra.mrb[0].mxu0 %v1665
      %v1970 = vpop.f32.mrb[0].mxu0
      %v1971 = vadd.f32 0.0, %v1970
      %v1972 = vpop.f32.mrb[0].mxu0
      %v1973 = vpop.f32.mrb[0].mxu0
      %v1974 = vpop.f32.mrb[0].mxu0
      %1975 = vdwg.mxu0
      %v1976 = vadd.f32 %v1935, %v1971
      %1977 = vmatprep.subr.bf16.mxu0 0
      %1978 = vmatpush1.bf16.msra.mxu0 %v1541
      %1979 = vmatprep.subr.bf16.mxu0 0
      %1980 = vmatpush1.bf16.msra.mxu0 %v1542
      %1981 = vmatprep.subr.bf16.mxu0 0
      %1982 = vmatpush1.bf16.msra.mxu0 0
      %1983 = vmatprep.subr.bf16.mxu0 0
      %1984 = vmatpush1.bf16.msra.mxu0 0
      %1985 = vmatprep.subr.bf16.mxu0 0
      %1986 = vmatpush1.bf16.msra.mxu0 0
      %1987 = vmatprep.subr.bf16.mxu0 0
      %1988 = vmatpush1.bf16.msra.mxu0 0
      %1989 = vmatprep.subr.bf16.mxu0 0
      %1990 = vmatpush1.bf16.msra.mxu0 0
      %1991 = vmatprep.subr.bf16.mxu0 0
      %1992 = vmatpush1.bf16.msra.mxu0 0
      %1993 = vmatprep.subr.bf16.mxu0 0
      %1994 = vmatpush1.bf16.msra.mxu0 0
      %1995 = vmatprep.subr.bf16.mxu0 0
      %1996 = vmatpush1.bf16.msra.mxu0 0
      %1997 = vmatprep.subr.bf16.mxu0 0
      %1998 = vmatpush1.bf16.msra.mxu0 0
      %1999 = vmatprep.subr.bf16.mxu0 0
      %2000 = vmatpush1.bf16.msra.mxu0 0
      %2001 = vmatprep.subr.bf16.mxu0 0
      %2002 = vmatpush1.bf16.msra.mxu0 0
      %2003 = vmatprep.subr.bf16.mxu0 0
      %2004 = vmatpush1.bf16.msra.mxu0 0
      %2005 = vmatprep.subr.bf16.mxu0 0
      %2006 = vmatpush1.bf16.msra.mxu0 0
      %2007 = vmatprep.subr.bf16.mxu0 0
      %2008 = vmatpush1.bf16.msra.mxu0 0
      %2009 = vmatprep.mubr.bf16.mxu0 0
      %2010 = vmatmul.mubr.bf16.gmra.mrb[0].mxu0 %v1723
      %v2011 = vpop.f32.mrb[0].mxu0
      %v2012 = vadd.f32 0.0, %v2011
      %v2013 = vpop.f32.mrb[0].mxu0
      %v2014 = vpop.f32.mrb[0].mxu0
      %v2015 = vpop.f32.mrb[0].mxu0
      %2016 = vdwg.mxu0
      %v2017 = vadd.f32 %v1976, %v2012
      %v2018 = vpack.c.bf16 %v1235, %v1235
      %v2020 = vsel %vm1256, %v2018, 0
      %2022 = vmatprep.subr.bf16.mxu0 0
      %2023 = vmatpush1.bf16.msra.mxu0 %v1598
      %2024 = vmatprep.subr.bf16.mxu0 0
      %2025 = vmatpush1.bf16.msra.mxu0 %v1599
      %2026 = vmatprep.subr.bf16.mxu0 0
      %2027 = vmatpush1.bf16.msra.mxu0 0
      %2028 = vmatprep.subr.bf16.mxu0 0
      %2029 = vmatpush1.bf16.msra.mxu0 0
      %2030 = vmatprep.subr.bf16.mxu0 0
      %2031 = vmatpush1.bf16.msra.mxu0 0
      %2032 = vmatprep.subr.bf16.mxu0 0
      %2033 = vmatpush1.bf16.msra.mxu0 0
      %2034 = vmatprep.subr.bf16.mxu0 0
      %2035 = vmatpush1.bf16.msra.mxu0 0
      %2036 = vmatprep.subr.bf16.mxu0 0
      %2037 = vmatpush1.bf16.msra.mxu0 0
      %2038 = vmatprep.subr.bf16.mxu0 0
      %2039 = vmatpush1.bf16.msra.mxu0 0
      %2040 = vmatprep.subr.bf16.mxu0 0
      %2041 = vmatpush1.bf16.msra.mxu0 0
      %2042 = vmatprep.subr.bf16.mxu0 0
      %2043 = vmatpush1.bf16.msra.mxu0 0
      %2044 = vmatprep.subr.bf16.mxu0 0
      %2045 = vmatpush1.bf16.msra.mxu0 0
      %2046 = vmatprep.subr.bf16.mxu0 0
      %2047 = vmatpush1.bf16.msra.mxu0 0
      %2048 = vmatprep.subr.bf16.mxu0 0
      %2049 = vmatpush1.bf16.msra.mxu0 0
      %2050 = vmatprep.subr.bf16.mxu0 0
      %2051 = vmatpush1.bf16.msra.mxu0 0
      %2052 = vmatprep.subr.bf16.mxu0 0
      %2053 = vmatpush1.bf16.msra.mxu0 0
      %2054 = vmatprep.mubr.bf16.mxu0 0
      %2055 = vmatmul.mubr.bf16.gmra.mrb[0].mxu0 %v2020
      %v2056 = vpop.f32.mrb[0].mxu0
      %v2057 = vadd.f32 0.0, %v2056
      %v2058 = vpop.f32.mrb[0].mxu0
      %v2059 = vpop.f32.mrb[0].mxu0
      %v2060 = vpop.f32.mrb[0].mxu0
      %2061 = vdwg.mxu0
      %v2062 = vadd.f32 %v2017, %v2057
      %v2063 = vshrl.u32 %v2018, 16
      %v2065 = vshll.u32 %v2018, 16
      %v2067 = vrot.slane %v2065, 1
      %v2068 = vor.u32 %v2063, %v2067
      %v2070 = vsel %vm1256, %v2068, 0
      %2072 = vmatprep.subr.bf16.mxu0 0
      %2073 = vmatpush1.bf16.msra.mxu0 %v1660
      %2074 = vmatprep.subr.bf16.mxu0 0
      %2075 = vmatpush1.bf16.msra.mxu0 %v1661
      %2076 = vmatprep.subr.bf16.mxu0 0
      %2077 = vmatpush1.bf16.msra.mxu0 0
      %2078 = vmatprep.subr.bf16.mxu0 0
      %2079 = vmatpush1.bf16.msra.mxu0 0
      %2080 = vmatprep.subr.bf16.mxu0 0
      %2081 = vmatpush1.bf16.msra.mxu0 0
      %2082 = vmatprep.subr.bf16.mxu0 0
      %2083 = vmatpush1.bf16.msra.mxu0 0
      %2084 = vmatprep.subr.bf16.mxu0 0
      %2085 = vmatpush1.bf16.msra.mxu0 0
      %2086 = vmatprep.subr.bf16.mxu0 0
      %2087 = vmatpush1.bf16.msra.mxu0 0
      %2088 = vmatprep.subr.bf16.mxu0 0
      %2089 = vmatpush1.bf16.msra.mxu0 0
      %2090 = vmatprep.subr.bf16.mxu0 0
      %2091 = vmatpush1.bf16.msra.mxu0 0
      %2092 = vmatprep.subr.bf16.mxu0 0
      %2093 = vmatpush1.bf16.msra.mxu0 0
      %2094 = vmatprep.subr.bf16.mxu0 0
      %2095 = vmatpush1.bf16.msra.mxu0 0
      %2096 = vmatprep.subr.bf16.mxu0 0
      %2097 = vmatpush1.bf16.msra.mxu0 0
      %2098 = vmatprep.subr.bf16.mxu0 0
      %2099 = vmatpush1.bf16.msra.mxu0 0
      %2100 = vmatprep.subr.bf16.mxu0 0
      %2101 = vmatpush1.bf16.msra.mxu0 0
      %2102 = vmatprep.subr.bf16.mxu0 0
      %2103 = vmatpush1.bf16.msra.mxu0 0
      %2104 = vmatprep.mubr.bf16.mxu0 0
      %2105 = vmatmul.mubr.bf16.gmra.mrb[0].mxu0 %v2070
      %v2106 = vpop.f32.mrb[0].mxu0
      %v2107 = vadd.f32 0.0, %v2106
      %v2108 = vpop.f32.mrb[0].mxu0
      %v2109 = vpop.f32.mrb[0].mxu0
      %v2110 = vpop.f32.mrb[0].mxu0
      %2111 = vdwg.mxu0
      %v2112 = vadd.f32 %v2062, %v2107
      %v2114 = vrot.slane %v2018, 1
      %v2116 = vsel %vm1256, %v2114, 0
      %2118 = vmatprep.subr.bf16.mxu0 0
      %2119 = vmatpush1.bf16.msra.mxu0 %v1718
      %2120 = vmatprep.subr.bf16.mxu0 0
      %2121 = vmatpush1.bf16.msra.mxu0 %v1719
      %2122 = vmatprep.subr.bf16.mxu0 0
      %2123 = vmatpush1.bf16.msra.mxu0 0
      %2124 = vmatprep.subr.bf16.mxu0 0
      %2125 = vmatpush1.bf16.msra.mxu0 0
      %2126 = vmatprep.subr.bf16.mxu0 0
      %2127 = vmatpush1.bf16.msra.mxu0 0
      %2128 = vmatprep.subr.bf16.mxu0 0
      %2129 = vmatpush1.bf16.msra.mxu0 0
      %2130 = vmatprep.subr.bf16.mxu0 0
      %2131 = vmatpush1.bf16.msra.mxu0 0
      %2132 = vmatprep.subr.bf16.mxu0 0
      %2133 = vmatpush1.bf16.msra.mxu0 0
      %2134 = vmatprep.subr.bf16.mxu0 0
      %2135 = vmatpush1.bf16.msra.mxu0 0
      %2136 = vmatprep.subr.bf16.mxu0 0
      %2137 = vmatpush1.bf16.msra.mxu0 0
      %2138 = vmatprep.subr.bf16.mxu0 0
      %2139 = vmatpush1.bf16.msra.mxu0 0
      %2140 = vmatprep.subr.bf16.mxu0 0
      %2141 = vmatpush1.bf16.msra.mxu0 0
      %2142 = vmatprep.subr.bf16.mxu0 0
      %2143 = vmatpush1.bf16.msra.mxu0 0
      %2144 = vmatprep.subr.bf16.mxu0 0
      %2145 = vmatpush1.bf16.msra.mxu0 0
      %2146 = vmatprep.subr.bf16.mxu0 0
      %2147 = vmatpush1.bf16.msra.mxu0 0
      %2148 = vmatprep.subr.bf16.mxu0 0
      %2149 = vmatpush1.bf16.msra.mxu0 0
      %2150 = vmatprep.mubr.bf16.mxu0 0
      %2151 = vmatmul.mubr.bf16.gmra.mrb[0].mxu0 %v2116
      %v2152 = vpop.f32.mrb[0].mxu0
      %v2153 = vadd.f32 0.0, %v2152
      %v2154 = vpop.f32.mrb[0].mxu0
      %v2155 = vpop.f32.mrb[0].mxu0
      %v2156 = vpop.f32.mrb[0].mxu0
      %2157 = vdwg.mxu0
      %v2158 = vadd.f32 %v2112, %v2153
      %v2159 = vadd.f32 %v2158, %v1770
      %v2160 = vmax.f32 %v2159, 0.0
      %v2161 = vpack.c.bf16 %v1773, %v1773
      %v2162 = vld [vmem:[%s5] sm:$0xff]
      %v2163 = vld [vmem:[%s5 + $0x8] sm:$0xff]
      %v2164 = vld [vmem:[%s5 + $0x10] sm:$0xff]
      %v2165 = vld [vmem:[%s5 + $0x18] sm:$0xff]
      %v2166 = vld [vmem:[%s5 + $0x20] sm:$0xff]
      %v2167 = vld [vmem:[%s5 + $0x28] sm:$0xff]
      %v2168 = vld [vmem:[%s5 + $0x30] sm:$0xff]
      %v2169 = vld [vmem:[%s5 + $0x38] sm:$0xff]
      %v2170 = vld [vmem:[%s5 + $0x40] sm:$0xff]
      %v2171 = vld [vmem:[%s5 + $0x48] sm:$0xff]
      %v2172 = vld [vmem:[%s5 + $0x50] sm:$0xff]
      %v2173 = vld [vmem:[%s5 + $0x58] sm:$0xff]
      %v2174 = vld [vmem:[%s5 + $0x60] sm:$0xff]
      %v2175 = vld [vmem:[%s5 + $0x68] sm:$0xff]
      %v2176 = vld [vmem:[%s5 + $0x70] sm:$0xff]
      %v2177 = vld [vmem:[%s5 + $0x78] sm:$0xff]
      %v2178 = vld [vmem:[%s5 + $0x80] sm:$0xff]
      %v2179 = vld [vmem:[%s5 + $0x88] sm:$0xff]
      %v2180 = vld [vmem:[%s5 + $0x90] sm:$0xff]
      %v2181 = vld [vmem:[%s5 + $0x98] sm:$0xff]
      %v2182 = vld [vmem:[%s5 + $0xa0] sm:$0xff]
      %v2183 = vld [vmem:[%s5 + $0xa8] sm:$0xff]
      %v2184 = vld [vmem:[%s5 + $0xb0] sm:$0xff]
      %v2185 = vld [vmem:[%s5 + $0xb8] sm:$0xff]
      %v2186 = vld [vmem:[%s5 + $0xc0] sm:$0xff]
      %v2187 = vld [vmem:[%s5 + $0xc8] sm:$0xff]
      %v2188 = vld [vmem:[%s5 + $0xd0] sm:$0xff]
      %v2189 = vld [vmem:[%s5 + $0xd8] sm:$0xff]
      %v2190 = vld [vmem:[%s5 + $0xe0] sm:$0xff]
      %v2191 = vld [vmem:[%s5 + $0xe8] sm:$0xff]
      %v2192 = vld [vmem:[%s5 + $0xf0] sm:$0xff]
      %v2193 = vld [vmem:[%s5 + $0xf8] sm:$0xff]
      %v2195 = vshrl.u32 %v2161, 16
      %v2213 = vunpack.c.l.b16 %v2178
      %v2214 = vunpack.c.h.b16 %v2178
      %v2215 = vunpack.c.l.b16 %v2179
      %v2216 = vunpack.c.h.b16 %v2179
      %v2217 = vunpack.c.l.b16 %v2180
      %v2218 = vunpack.c.h.b16 %v2180
      %v2219 = vunpack.c.l.b16 %v2181
      %v2220 = vunpack.c.h.b16 %v2181
      %v2221 = vunpack.c.l.b16 %v2182
      %v2222 = vunpack.c.h.b16 %v2182
      %v2223 = vunpack.c.l.b16 %v2183
      %v2224 = vunpack.c.h.b16 %v2183
      %v2225 = vunpack.c.l.b16 %v2184
      %v2226 = vunpack.c.h.b16 %v2184
      %v2227 = vunpack.c.l.b16 %v2185
      %v2228 = vunpack.c.h.b16 %v2185
      %v2229 = vunpack.c.l.b16 %v2186
      %v2230 = vunpack.c.h.b16 %v2186
      %v2231 = vunpack.c.l.b16 %v2187
      %v2232 = vunpack.c.h.b16 %v2187
      %v2233 = vunpack.c.l.b16 %v2188
      %v2234 = vunpack.c.h.b16 %v2188
      %v2235 = vunpack.c.l.b16 %v2189
      %v2236 = vunpack.c.h.b16 %v2189
      %v2237 = vunpack.c.l.b16 %v2190
      %v2238 = vunpack.c.h.b16 %v2190
      %v2239 = vunpack.c.l.b16 %v2191
      %v2240 = vunpack.c.h.b16 %v2191
      %v2241 = vunpack.c.l.b16 %v2192
      %v2242 = vunpack.c.h.b16 %v2192
      %v2243 = vunpack.c.l.b16 %v2193
      %v2244 = vunpack.c.h.b16 %v2193
      %v2245 = vpack.c.b16 %v2217, %v2213
      %v2246 = vpack.c.b16 %v2218, %v2214
      %v2247 = vpack.c.b16 %v2219, %v2215
      %v2248 = vpack.c.b16 %v2220, %v2216
      %v2249 = vpack.c.b16 %v2225, %v2221
      %v2250 = vpack.c.b16 %v2226, %v2222
      %v2251 = vpack.c.b16 %v2227, %v2223
      %v2252 = vpack.c.b16 %v2228, %v2224
      %v2253 = vpack.c.b16 %v2233, %v2229
      %v2254 = vpack.c.b16 %v2234, %v2230
      %v2255 = vpack.c.b16 %v2235, %v2231
      %v2256 = vpack.c.b16 %v2236, %v2232
      %v2257 = vpack.c.b16 %v2241, %v2237
      %v2258 = vpack.c.b16 %v2242, %v2238
      %v2259 = vpack.c.b16 %v2243, %v2239
      %v2260 = vpack.c.b16 %v2244, %v2240
      %v2278 = vsel %vm444, %v2195, 0
      %2280 = vmatprep.subr.bf16.mxu0 %v2246
      %2281 = vmatpush1.bf16.msra.mxu0 %v2245
      %2282 = vmatprep.subr.bf16.mxu0 %v2250
      %2283 = vmatpush1.bf16.msra.mxu0 %v2249
      %2284 = vmatprep.subr.bf16.mxu0 %v2254
      %2285 = vmatpush1.bf16.msra.mxu0 %v2253
      %2286 = vmatprep.subr.bf16.mxu0 %v2258
      %2287 = vmatpush1.bf16.msra.mxu0 %v2257
      %2288 = vmatprep.subr.bf16.mxu0 0
      %2289 = vmatpush1.bf16.msra.mxu0 0
      %2290 = vmatprep.subr.bf16.mxu0 0
      %2291 = vmatpush1.bf16.msra.mxu0 0
      %2292 = vmatprep.subr.bf16.mxu0 0
      %2293 = vmatpush1.bf16.msra.mxu0 0
      %2294 = vmatprep.subr.bf16.mxu0 0
      %2295 = vmatpush1.bf16.msra.mxu0 0
      %2296 = vmatprep.subr.bf16.mxu0 0
      %2297 = vmatpush1.bf16.msra.mxu0 0
      %2298 = vmatprep.subr.bf16.mxu0 0
      %2299 = vmatpush1.bf16.msra.mxu0 0
      %2300 = vmatprep.subr.bf16.mxu0 0
      %2301 = vmatpush1.bf16.msra.mxu0 0
      %2302 = vmatprep.subr.bf16.mxu0 0
      %2303 = vmatpush1.bf16.msra.mxu0 0
      %2304 = vmatprep.subr.bf16.mxu0 0
      %2305 = vmatpush1.bf16.msra.mxu0 0
      %2306 = vmatprep.subr.bf16.mxu0 0
      %2307 = vmatpush1.bf16.msra.mxu0 0
      %2308 = vmatprep.subr.bf16.mxu0 0
      %2309 = vmatpush1.bf16.msra.mxu0 0
      %2310 = vmatprep.subr.bf16.mxu0 0
      %2311 = vmatpush1.bf16.msra.mxu0 0
      %2312 = vmatprep.mubr.bf16.mxu0 0
      %2313 = vmatmul.mubr.bf16.gmra.mrb[0].mxu0 %v2278
      %v2314 = vpop.f32.mrb[0].mxu0
      %v2315 = vadd.f32 0.0, %v2314
      %v2316 = vpop.f32.mrb[0].mxu0
      %v2317 = vadd.f32 0.0, %v2316
      %v2318 = vpop.f32.mrb[0].mxu0
      %v2319 = vpop.f32.mrb[0].mxu0
      %2320 = vdwg.mxu0
      %2321 = vmatprep.subr.bf16.mxu0 %v2248
      %2322 = vmatpush1.bf16.msra.mxu0 %v2247
      %2323 = vmatprep.subr.bf16.mxu0 %v2252
      %2324 = vmatpush1.bf16.msra.mxu0 %v2251
      %2325 = vmatprep.subr.bf16.mxu0 %v2256
      %2326 = vmatpush1.bf16.msra.mxu0 %v2255
      %2327 = vmatprep.subr.bf16.mxu0 %v2260
      %2328 = vmatpush1.bf16.msra.mxu0 %v2259
      %2329 = vmatprep.subr.bf16.mxu0 0
      %2330 = vmatpush1.bf16.msra.mxu0 0
      %2331 = vmatprep.subr.bf16.mxu0 0
      %2332 = vmatpush1.bf16.msra.mxu0 0
      %2333 = vmatprep.subr.bf16.mxu0 0
      %2334 = vmatpush1.bf16.msra.mxu0 0
      %2335 = vmatprep.subr.bf16.mxu0 0
      %2336 = vmatpush1.bf16.msra.mxu0 0
      %2337 = vmatprep.subr.bf16.mxu0 0
      %2338 = vmatpush1.bf16.msra.mxu0 0
      %2339 = vmatprep.subr.bf16.mxu0 0
      %2340 = vmatpush1.bf16.msra.mxu0 0
      %2341 = vmatprep.subr.bf16.mxu0 0
      %2342 = vmatpush1.bf16.msra.mxu0 0
      %2343 = vmatprep.subr.bf16.mxu0 0
      %2344 = vmatpush1.bf16.msra.mxu0 0
      %2345 = vmatprep.subr.bf16.mxu0 0
      %2346 = vmatpush1.bf16.msra.mxu0 0
      %2347 = vmatprep.subr.bf16.mxu0 0
      %2348 = vmatpush1.bf16.msra.mxu0 0
      %2349 = vmatprep.subr.bf16.mxu0 0
      %2350 = vmatpush1.bf16.msra.mxu0 0
      %2351 = vmatprep.subr.bf16.mxu0 0
      %2352 = vmatpush1.bf16.msra.mxu0 0
      %2353 = vmatprep.mubr.bf16.mxu0 0
      %2354 = vmatmul.mubr.bf16.gmra.mrb[0].mxu0 %v2278
      %v2355 = vpop.f32.mrb[0].mxu0
      %v2356 = vadd.f32 0.0, %v2355
      %v2357 = vpop.f32.mrb[0].mxu0
      %v2358 = vadd.f32 0.0, %v2357
      %v2359 = vpop.f32.mrb[0].mxu0
      %v2360 = vpop.f32.mrb[0].mxu0
      %2361 = vdwg.mxu0
      %v2378 = vunpack.c.l.b16 %v2162
      %v2379 = vunpack.c.h.b16 %v2162
      %v2380 = vunpack.c.l.b16 %v2163
      %v2381 = vunpack.c.h.b16 %v2163
      %v2382 = vunpack.c.l.b16 %v2164
      %v2383 = vunpack.c.h.b16 %v2164
      %v2384 = vunpack.c.l.b16 %v2165
      %v2385 = vunpack.c.h.b16 %v2165
      %v2386 = vunpack.c.l.b16 %v2166
      %v2387 = vunpack.c.h.b16 %v2166
      %v2388 = vunpack.c.l.b16 %v2167
      %v2389 = vunpack.c.h.b16 %v2167
      %v2390 = vunpack.c.l.b16 %v2168
      %v2391 = vunpack.c.h.b16 %v2168
      %v2392 = vunpack.c.l.b16 %v2169
      %v2393 = vunpack.c.h.b16 %v2169
      %v2394 = vunpack.c.l.b16 %v2170
      %v2395 = vunpack.c.h.b16 %v2170
      %v2396 = vunpack.c.l.b16 %v2171
      %v2397 = vunpack.c.h.b16 %v2171
      %v2398 = vunpack.c.l.b16 %v2172
      %v2399 = vunpack.c.h.b16 %v2172
      %v2400 = vunpack.c.l.b16 %v2173
      %v2401 = vunpack.c.h.b16 %v2173
      %v2402 = vunpack.c.l.b16 %v2174
      %v2403 = vunpack.c.h.b16 %v2174
      %v2404 = vunpack.c.l.b16 %v2175
      %v2405 = vunpack.c.h.b16 %v2175
      %v2406 = vunpack.c.l.b16 %v2176
      %v2407 = vunpack.c.h.b16 %v2176
      %v2408 = vunpack.c.l.b16 %v2177
      %v2409 = vunpack.c.h.b16 %v2177
      %v2410 = vpack.c.b16 %v2382, %v2378
      %v2411 = vpack.c.b16 %v2383, %v2379
      %v2412 = vpack.c.b16 %v2384, %v2380
      %v2413 = vpack.c.b16 %v2385, %v2381
      %v2414 = vpack.c.b16 %v2390, %v2386
      %v2415 = vpack.c.b16 %v2391, %v2387
      %v2416 = vpack.c.b16 %v2392, %v2388
      %v2417 = vpack.c.b16 %v2393, %v2389
      %v2418 = vpack.c.b16 %v2398, %v2394
      %v2419 = vpack.c.b16 %v2399, %v2395
      %v2420 = vpack.c.b16 %v2400, %v2396
      %v2421 = vpack.c.b16 %v2401, %v2397
      %v2422 = vpack.c.b16 %v2406, %v2402
      %v2423 = vpack.c.b16 %v2407, %v2403
      %v2424 = vpack.c.b16 %v2408, %v2404
      %v2425 = vpack.c.b16 %v2409, %v2405
      %v2442 = vsel %vm444, %v2161, 0
      %2444 = vmatprep.subr.bf16.mxu0 %v2411
      %2445 = vmatpush1.bf16.msra.mxu0 %v2410
      %2446 = vmatprep.subr.bf16.mxu0 %v2415
      %2447 = vmatpush1.bf16.msra.mxu0 %v2414
      %2448 = vmatprep.subr.bf16.mxu0 %v2419
      %2449 = vmatpush1.bf16.msra.mxu0 %v2418
      %2450 = vmatprep.subr.bf16.mxu0 %v2423
      %2451 = vmatpush1.bf16.msra.mxu0 %v2422
      %2452 = vmatprep.subr.bf16.mxu0 0
      %2453 = vmatpush1.bf16.msra.mxu0 0
      %2454 = vmatprep.subr.bf16.mxu0 0
      %2455 = vmatpush1.bf16.msra.mxu0 0
      %2456 = vmatprep.subr.bf16.mxu0 0
      %2457 = vmatpush1.bf16.msra.mxu0 0
      %2458 = vmatprep.subr.bf16.mxu0 0
      %2459 = vmatpush1.bf16.msra.mxu0 0
      %2460 = vmatprep.subr.bf16.mxu0 0
      %2461 = vmatpush1.bf16.msra.mxu0 0
      %2462 = vmatprep.subr.bf16.mxu0 0
      %2463 = vmatpush1.bf16.msra.mxu0 0
      %2464 = vmatprep.subr.bf16.mxu0 0
      %2465 = vmatpush1.bf16.msra.mxu0 0
      %2466 = vmatprep.subr.bf16.mxu0 0
      %2467 = vmatpush1.bf16.msra.mxu0 0
      %2468 = vmatprep.subr.bf16.mxu0 0
      %2469 = vmatpush1.bf16.msra.mxu0 0
      %2470 = vmatprep.subr.bf16.mxu0 0
      %2471 = vmatpush1.bf16.msra.mxu0 0
      %2472 = vmatprep.subr.bf16.mxu0 0
      %2473 = vmatpush1.bf16.msra.mxu0 0
      %2474 = vmatprep.subr.bf16.mxu0 0
      %2475 = vmatpush1.bf16.msra.mxu0 0
      %2476 = vmatprep.mubr.bf16.mxu0 0
      %2477 = vmatmul.mubr.bf16.gmra.mrb[0].mxu0 %v2442
      %v2478 = vpop.f32.mrb[0].mxu0
      %v2479 = vadd.f32 %v2315, %v2478
      %v2480 = vpop.f32.mrb[0].mxu0
      %v2481 = vadd.f32 %v2317, %v2480
      %v2482 = vpop.f32.mrb[0].mxu0
      %v2483 = vpop.f32.mrb[0].mxu0
      %2484 = vdwg.mxu0
      %2485 = vmatprep.subr.bf16.mxu0 %v2413
      %2486 = vmatpush1.bf16.msra.mxu0 %v2412
      %2487 = vmatprep.subr.bf16.mxu0 %v2417
      %2488 = vmatpush1.bf16.msra.mxu0 %v2416
      %2489 = vmatprep.subr.bf16.mxu0 %v2421
      %2490 = vmatpush1.bf16.msra.mxu0 %v2420
      %2491 = vmatprep.subr.bf16.mxu0 %v2425
      %2492 = vmatpush1.bf16.msra.mxu0 %v2424
      %2493 = vmatprep.subr.bf16.mxu0 0
      %2494 = vmatpush1.bf16.msra.mxu0 0
      %2495 = vmatprep.subr.bf16.mxu0 0
      %2496 = vmatpush1.bf16.msra.mxu0 0
      %2497 = vmatprep.subr.bf16.mxu0 0
      %2498 = vmatpush1.bf16.msra.mxu0 0
      %2499 = vmatprep.subr.bf16.mxu0 0
      %2500 = vmatpush1.bf16.msra.mxu0 0
      %2501 = vmatprep.subr.bf16.mxu0 0
      %2502 = vmatpush1.bf16.msra.mxu0 0
      %2503 = vmatprep.subr.bf16.mxu0 0
      %2504 = vmatpush1.bf16.msra.mxu0 0
      %2505 = vmatprep.subr.bf16.mxu0 0
      %2506 = vmatpush1.bf16.msra.mxu0 0
      %2507 = vmatprep.subr.bf16.mxu0 0
      %2508 = vmatpush1.bf16.msra.mxu0 0
      %2509 = vmatprep.subr.bf16.mxu0 0
      %2510 = vmatpush1.bf16.msra.mxu0 0
      %2511 = vmatprep.subr.bf16.mxu0 0
      %2512 = vmatpush1.bf16.msra.mxu0 0
      %2513 = vmatprep.subr.bf16.mxu0 0
      %2514 = vmatpush1.bf16.msra.mxu0 0
      %2515 = vmatprep.subr.bf16.mxu0 0
      %2516 = vmatpush1.bf16.msra.mxu0 0
      %2517 = vmatprep.mubr.bf16.mxu0 0
      %2518 = vmatmul.mubr.bf16.gmra.mrb[0].mxu0 %v2442
      %v2519 = vpop.f32.mrb[0].mxu0
      %v2520 = vadd.f32 %v2356, %v2519
      %v2521 = vpop.f32.mrb[0].mxu0
      %v2522 = vadd.f32 %v2358, %v2521
      %v2523 = vpop.f32.mrb[0].mxu0
      %v2524 = vpop.f32.mrb[0].mxu0
      %2525 = vdwg.mxu0
      %v2526 = vpack.c.bf16 %v2160, %v2160
      %v2527 = vld [vmem:[%s5 + $0x100] sm:$0xff]
      %v2528 = vld [vmem:[%s5 + $0x108] sm:$0xff]
      %v2529 = vld [vmem:[%s5 + $0x110] sm:$0xff]
      %v2530 = vld [vmem:[%s5 + $0x118] sm:$0xff]
      %v2531 = vld [vmem:[%s5 + $0x120] sm:$0xff]
      %v2532 = vld [vmem:[%s5 + $0x128] sm:$0xff]
      %v2533 = vld [vmem:[%s5 + $0x130] sm:$0xff]
      %v2534 = vld [vmem:[%s5 + $0x138] sm:$0xff]
      %v2535 = vld [vmem:[%s5 + $0x140] sm:$0xff]
      %v2536 = vld [vmem:[%s5 + $0x148] sm:$0xff]
      %v2537 = vld [vmem:[%s5 + $0x150] sm:$0xff]
      %v2538 = vld [vmem:[%s5 + $0x158] sm:$0xff]
      %v2539 = vld [vmem:[%s5 + $0x160] sm:$0xff]
      %v2540 = vld [vmem:[%s5 + $0x168] sm:$0xff]
      %v2541 = vld [vmem:[%s5 + $0x170] sm:$0xff]
      %v2542 = vld [vmem:[%s5 + $0x178] sm:$0xff]
      %v2559 = vunpack.c.l.b16 %v2527
      %v2560 = vunpack.c.h.b16 %v2527
      %v2561 = vunpack.c.l.b16 %v2528
      %v2562 = vunpack.c.h.b16 %v2528
      %v2563 = vunpack.c.l.b16 %v2529
      %v2564 = vunpack.c.h.b16 %v2529
      %v2565 = vunpack.c.l.b16 %v2530
      %v2566 = vunpack.c.h.b16 %v2530
      %v2567 = vunpack.c.l.b16 %v2531
      %v2568 = vunpack.c.h.b16 %v2531
      %v2569 = vunpack.c.l.b16 %v2532
      %v2570 = vunpack.c.h.b16 %v2532
      %v2571 = vunpack.c.l.b16 %v2533
      %v2572 = vunpack.c.h.b16 %v2533
      %v2573 = vunpack.c.l.b16 %v2534
      %v2574 = vunpack.c.h.b16 %v2534
      %v2575 = vunpack.c.l.b16 %v2535
      %v2576 = vunpack.c.h.b16 %v2535
      %v2577 = vunpack.c.l.b16 %v2536
      %v2578 = vunpack.c.h.b16 %v2536
      %v2579 = vunpack.c.l.b16 %v2537
      %v2580 = vunpack.c.h.b16 %v2537
      %v2581 = vunpack.c.l.b16 %v2538
      %v2582 = vunpack.c.h.b16 %v2538
      %v2583 = vunpack.c.l.b16 %v2539
      %v2584 = vunpack.c.h.b16 %v2539
      %v2585 = vunpack.c.l.b16 %v2540
      %v2586 = vunpack.c.h.b16 %v2540
      %v2587 = vunpack.c.l.b16 %v2541
      %v2588 = vunpack.c.h.b16 %v2541
      %v2589 = vunpack.c.l.b16 %v2542
      %v2590 = vunpack.c.h.b16 %v2542
      %v2591 = vpack.c.b16 %v2563, %v2559
      %v2592 = vpack.c.b16 %v2564, %v2560
      %v2593 = vpack.c.b16 %v2565, %v2561
      %v2594 = vpack.c.b16 %v2566, %v2562
      %v2595 = vpack.c.b16 %v2571, %v2567
      %v2596 = vpack.c.b16 %v2572, %v2568
      %v2597 = vpack.c.b16 %v2573, %v2569
      %v2598 = vpack.c.b16 %v2574, %v2570
      %v2599 = vpack.c.b16 %v2579, %v2575
      %v2600 = vpack.c.b16 %v2580, %v2576
      %v2601 = vpack.c.b16 %v2581, %v2577
      %v2602 = vpack.c.b16 %v2582, %v2578
      %v2603 = vpack.c.b16 %v2587, %v2583
      %v2604 = vpack.c.b16 %v2588, %v2584
      %v2605 = vpack.c.b16 %v2589, %v2585
      %v2606 = vpack.c.b16 %v2590, %v2586
      %v2624 = vsel %vm444, %v2526, 0
      %2626 = vmatprep.subr.bf16.mxu0 %v2592
      %2627 = vmatpush1.bf16.msra.mxu0 %v2591
      %2628 = vmatprep.subr.bf16.mxu0 %v2596
      %2629 = vmatpush1.bf16.msra.mxu0 %v2595
      %2630 = vmatprep.subr.bf16.mxu0 %v2600
      %2631 = vmatpush1.bf16.msra.mxu0 %v2599
      %2632 = vmatprep.subr.bf16.mxu0 %v2604
      %2633 = vmatpush1.bf16.msra.mxu0 %v2603
      %2634 = vmatprep.subr.bf16.mxu0 0
      %2635 = vmatpush1.bf16.msra.mxu0 0
      %2636 = vmatprep.subr.bf16.mxu0 0
      %2637 = vmatpush1.bf16.msra.mxu0 0
      %2638 = vmatprep.subr.bf16.mxu0 0
      %2639 = vmatpush1.bf16.msra.mxu0 0
      %2640 = vmatprep.subr.bf16.mxu0 0
      %2641 = vmatpush1.bf16.msra.mxu0 0
      %2642 = vmatprep.subr.bf16.mxu0 0
      %2643 = vmatpush1.bf16.msra.mxu0 0
      %2644 = vmatprep.subr.bf16.mxu0 0
      %2645 = vmatpush1.bf16.msra.mxu0 0
      %2646 = vmatprep.subr.bf16.mxu0 0
      %2647 = vmatpush1.bf16.msra.mxu0 0
      %2648 = vmatprep.subr.bf16.mxu0 0
      %2649 = vmatpush1.bf16.msra.mxu0 0
      %2650 = vmatprep.subr.bf16.mxu0 0
      %2651 = vmatpush1.bf16.msra.mxu0 0
      %2652 = vmatprep.subr.bf16.mxu0 0
      %2653 = vmatpush1.bf16.msra.mxu0 0
      %2654 = vmatprep.subr.bf16.mxu0 0
      %2655 = vmatpush1.bf16.msra.mxu0 0
      %2656 = vmatprep.subr.bf16.mxu0 0
      %2657 = vmatpush1.bf16.msra.mxu0 0
      %2658 = vmatprep.mubr.bf16.mxu0 0
      %2659 = vmatmul.mubr.bf16.gmra.mrb[0].mxu0 %v2624
      %v2660 = vpop.f32.mrb[0].mxu0
      %v2661 = vadd.f32 0.0, %v2660
      %v2662 = vpop.f32.mrb[0].mxu0
      %v2663 = vadd.f32 0.0, %v2662
      %v2664 = vpop.f32.mrb[0].mxu0
      %v2665 = vpop.f32.mrb[0].mxu0
      %2666 = vdwg.mxu0
      %2667 = vmatprep.subr.bf16.mxu0 %v2594
      %2668 = vmatpush1.bf16.msra.mxu0 %v2593
      %2669 = vmatprep.subr.bf16.mxu0 %v2598
      %2670 = vmatpush1.bf16.msra.mxu0 %v2597
      %2671 = vmatprep.subr.bf16.mxu0 %v2602
      %2672 = vmatpush1.bf16.msra.mxu0 %v2601
      %2673 = vmatprep.subr.bf16.mxu0 %v2606
      %2674 = vmatpush1.bf16.msra.mxu0 %v2605
      %2675 = vmatprep.subr.bf16.mxu0 0
      %2676 = vmatpush1.bf16.msra.mxu0 0
      %2677 = vmatprep.subr.bf16.mxu0 0
      %2678 = vmatpush1.bf16.msra.mxu0 0
      %2679 = vmatprep.subr.bf16.mxu0 0
      %2680 = vmatpush1.bf16.msra.mxu0 0
      %2681 = vmatprep.subr.bf16.mxu0 0
      %2682 = vmatpush1.bf16.msra.mxu0 0
      %2683 = vmatprep.subr.bf16.mxu0 0
      %2684 = vmatpush1.bf16.msra.mxu0 0
      %2685 = vmatprep.subr.bf16.mxu0 0
      %2686 = vmatpush1.bf16.msra.mxu0 0
      %2687 = vmatprep.subr.bf16.mxu0 0
      %2688 = vmatpush1.bf16.msra.mxu0 0
      %2689 = vmatprep.subr.bf16.mxu0 0
      %2690 = vmatpush1.bf16.msra.mxu0 0
      %2691 = vmatprep.subr.bf16.mxu0 0
      %2692 = vmatpush1.bf16.msra.mxu0 0
      %2693 = vmatprep.subr.bf16.mxu0 0
      %2694 = vmatpush1.bf16.msra.mxu0 0
      %2695 = vmatprep.subr.bf16.mxu0 0
      %2696 = vmatpush1.bf16.msra.mxu0 0
      %2697 = vmatprep.subr.bf16.mxu0 0
      %2698 = vmatpush1.bf16.msra.mxu0 0
      %2699 = vmatprep.mubr.bf16.mxu0 0
      %2700 = vmatmul.mubr.bf16.gmra.mrb[0].mxu0 %v2624
      %v2701 = vpop.f32.mrb[0].mxu0
      %v2702 = vadd.f32 0.0, %v2701
      %v2703 = vpop.f32.mrb[0].mxu0
      %v2704 = vadd.f32 0.0, %v2703
      %v2705 = vpop.f32.mrb[0].mxu0
      %v2706 = vpop.f32.mrb[0].mxu0
      %2707 = vdwg.mxu0
      %v2708 = vadd.f32 %v2479, %v2661
      %v2709 = vadd.f32 %v2481, %v2663
      %v2710 = vadd.f32 %v2520, %v2702
      %v2711 = vadd.f32 %v2522, %v2704
      %v2712 = vld [vmem:[%s5 + $0x180] sm:$0xff]
      %v2713 = vld [vmem:[%s5 + $0x188] sm:$0xff]
      %v2714 = vld [vmem:[%s5 + $0x190] sm:$0xff]
      %v2715 = vld [vmem:[%s5 + $0x198] sm:$0xff]
      %v2716 = vld [vmem:[%s5 + $0x1a0] sm:$0xff]
      %v2717 = vld [vmem:[%s5 + $0x1a8] sm:$0xff]
      %v2718 = vld [vmem:[%s5 + $0x1b0] sm:$0xff]
      %v2719 = vld [vmem:[%s5 + $0x1b8] sm:$0xff]
      %v2720 = vld [vmem:[%s5 + $0x1c0] sm:$0xff]
      %v2721 = vld [vmem:[%s5 + $0x1c8] sm:$0xff]
      %v2722 = vld [vmem:[%s5 + $0x1d0] sm:$0xff]
      %v2723 = vld [vmem:[%s5 + $0x1d8] sm:$0xff]
      %v2724 = vld [vmem:[%s5 + $0x1e0] sm:$0xff]
      %v2725 = vld [vmem:[%s5 + $0x1e8] sm:$0xff]
      %v2726 = vld [vmem:[%s5 + $0x1f0] sm:$0xff]
      %v2727 = vld [vmem:[%s5 + $0x1f8] sm:$0xff]
      %v2728 = vshrl.u32 %v2526, 16
      %v2746 = vunpack.c.l.b16 %v2712
      %v2747 = vunpack.c.h.b16 %v2712
      %v2748 = vunpack.c.l.b16 %v2713
      %v2749 = vunpack.c.h.b16 %v2713
      %v2750 = vunpack.c.l.b16 %v2714
      %v2751 = vunpack.c.h.b16 %v2714
      %v2752 = vunpack.c.l.b16 %v2715
      %v2753 = vunpack.c.h.b16 %v2715
      %v2754 = vunpack.c.l.b16 %v2716
      %v2755 = vunpack.c.h.b16 %v2716
      %v2756 = vunpack.c.l.b16 %v2717
      %v2757 = vunpack.c.h.b16 %v2717
      %v2758 = vunpack.c.l.b16 %v2718
      %v2759 = vunpack.c.h.b16 %v2718
      %v2760 = vunpack.c.l.b16 %v2719
      %v2761 = vunpack.c.h.b16 %v2719
      %v2762 = vunpack.c.l.b16 %v2720
      %v2763 = vunpack.c.h.b16 %v2720
      %v2764 = vunpack.c.l.b16 %v2721
      %v2765 = vunpack.c.h.b16 %v2721
      %v2766 = vunpack.c.l.b16 %v2722
      %v2767 = vunpack.c.h.b16 %v2722
      %v2768 = vunpack.c.l.b16 %v2723
      %v2769 = vunpack.c.h.b16 %v2723
      %v2770 = vunpack.c.l.b16 %v2724
      %v2771 = vunpack.c.h.b16 %v2724
      %v2772 = vunpack.c.l.b16 %v2725
      %v2773 = vunpack.c.h.b16 %v2725
      %v2774 = vunpack.c.l.b16 %v2726
      %v2775 = vunpack.c.h.b16 %v2726
      %v2776 = vunpack.c.l.b16 %v2727
      %v2777 = vunpack.c.h.b16 %v2727
      %v2778 = vpack.c.b16 %v2750, %v2746
      %v2779 = vpack.c.b16 %v2751, %v2747
      %v2780 = vpack.c.b16 %v2752, %v2748
      %v2781 = vpack.c.b16 %v2753, %v2749
      %v2782 = vpack.c.b16 %v2758, %v2754
      %v2783 = vpack.c.b16 %v2759, %v2755
      %v2784 = vpack.c.b16 %v2760, %v2756
      %v2785 = vpack.c.b16 %v2761, %v2757
      %v2786 = vpack.c.b16 %v2766, %v2762
      %v2787 = vpack.c.b16 %v2767, %v2763
      %v2788 = vpack.c.b16 %v2768, %v2764
      %v2789 = vpack.c.b16 %v2769, %v2765
      %v2790 = vpack.c.b16 %v2774, %v2770
      %v2791 = vpack.c.b16 %v2775, %v2771
      %v2792 = vpack.c.b16 %v2776, %v2772
      %v2793 = vpack.c.b16 %v2777, %v2773
      %v2811 = vsel %vm444, %v2728, 0
      %2813 = vmatprep.subr.bf16.mxu0 %v2779
      %2814 = vmatpush1.bf16.msra.mxu0 %v2778
      %2815 = vmatprep.subr.bf16.mxu0 %v2783
      %2816 = vmatpush1.bf16.msra.mxu0 %v2782
      %2817 = vmatprep.subr.bf16.mxu0 %v2787
      %2818 = vmatpush1.bf16.msra.mxu0 %v2786
      %2819 = vmatprep.subr.bf16.mxu0 %v2791
      %2820 = vmatpush1.bf16.msra.mxu0 %v2790
      %2821 = vmatprep.subr.bf16.mxu0 0
      %2822 = vmatpush1.bf16.msra.mxu0 0
      %2823 = vmatprep.subr.bf16.mxu0 0
      %2824 = vmatpush1.bf16.msra.mxu0 0
      %2825 = vmatprep.subr.bf16.mxu0 0
      %2826 = vmatpush1.bf16.msra.mxu0 0
      %2827 = vmatprep.subr.bf16.mxu0 0
      %2828 = vmatpush1.bf16.msra.mxu0 0
      %2829 = vmatprep.subr.bf16.mxu0 0
      %2830 = vmatpush1.bf16.msra.mxu0 0
      %2831 = vmatprep.subr.bf16.mxu0 0
      %2832 = vmatpush1.bf16.msra.mxu0 0
      %2833 = vmatprep.subr.bf16.mxu0 0
      %2834 = vmatpush1.bf16.msra.mxu0 0
      %2835 = vmatprep.subr.bf16.mxu0 0
      %2836 = vmatpush1.bf16.msra.mxu0 0
      %2837 = vmatprep.subr.bf16.mxu0 0
      %2838 = vmatpush1.bf16.msra.mxu0 0
      %2839 = vmatprep.subr.bf16.mxu0 0
      %2840 = vmatpush1.bf16.msra.mxu0 0
      %2841 = vmatprep.subr.bf16.mxu0 0
      %2842 = vmatpush1.bf16.msra.mxu0 0
      %2843 = vmatprep.subr.bf16.mxu0 0
      %2844 = vmatpush1.bf16.msra.mxu0 0
      %2845 = vmatprep.mubr.bf16.mxu0 0
      %2846 = vmatmul.mubr.bf16.gmra.mrb[0].mxu0 %v2811
      %v2847 = vpop.f32.mrb[0].mxu0
      %v2848 = vadd.f32 0.0, %v2847
      %v2849 = vpop.f32.mrb[0].mxu0
      %v2850 = vadd.f32 0.0, %v2849
      %v2851 = vpop.f32.mrb[0].mxu0
      %v2852 = vpop.f32.mrb[0].mxu0
      %2853 = vdwg.mxu0
      %2854 = vmatprep.subr.bf16.mxu0 %v2781
      %2855 = vmatpush1.bf16.msra.mxu0 %v2780
      %2856 = vmatprep.subr.bf16.mxu0 %v2785
      %2857 = vmatpush1.bf16.msra.mxu0 %v2784
      %2858 = vmatprep.subr.bf16.mxu0 %v2789
      %2859 = vmatpush1.bf16.msra.mxu0 %v2788
      %2860 = vmatprep.subr.bf16.mxu0 %v2793
      %2861 = vmatpush1.bf16.msra.mxu0 %v2792
      %2862 = vmatprep.subr.bf16.mxu0 0
      %2863 = vmatpush1.bf16.msra.mxu0 0
      %2864 = vmatprep.subr.bf16.mxu0 0
      %2865 = vmatpush1.bf16.msra.mxu0 0
      %2866 = vmatprep.subr.bf16.mxu0 0
      %2867 = vmatpush1.bf16.msra.mxu0 0
      %2868 = vmatprep.subr.bf16.mxu0 0
      %2869 = vmatpush1.bf16.msra.mxu0 0
      %2870 = vmatprep.subr.bf16.mxu0 0
      %2871 = vmatpush1.bf16.msra.mxu0 0
      %2872 = vmatprep.subr.bf16.mxu0 0
      %2873 = vmatpush1.bf16.msra.mxu0 0
      %2874 = vmatprep.subr.bf16.mxu0 0
      %2875 = vmatpush1.bf16.msra.mxu0 0
      %2876 = vmatprep.subr.bf16.mxu0 0
      %2877 = vmatpush1.bf16.msra.mxu0 0
      %2878 = vmatprep.subr.bf16.mxu0 0
      %2879 = vmatpush1.bf16.msra.mxu0 0
      %2880 = vmatprep.subr.bf16.mxu0 0
      %2881 = vmatpush1.bf16.msra.mxu0 0
      %2882 = vmatprep.subr.bf16.mxu0 0
      %2883 = vmatpush1.bf16.msra.mxu0 0
      %2884 = vmatprep.subr.bf16.mxu0 0
      %2885 = vmatpush1.bf16.msra.mxu0 0
      %2886 = vmatprep.mubr.bf16.mxu0 0
      %2887 = vmatmul.mubr.bf16.gmra.mrb[0].mxu0 %v2811
      %v2888 = vpop.f32.mrb[0].mxu0
      %v2889 = vadd.f32 0.0, %v2888
      %v2890 = vpop.f32.mrb[0].mxu0
      %v2891 = vadd.f32 0.0, %v2890
      %v2892 = vpop.f32.mrb[0].mxu0
      %v2893 = vpop.f32.mrb[0].mxu0
      %2894 = vdwg.mxu0
      %v2895 = vadd.f32 %v2708, %v2848
      %v2896 = vadd.f32 %v2709, %v2850
      %v2897 = vadd.f32 %v2710, %v2889
      %v2898 = vadd.f32 %v2711, %v2891
      %v2899 = vld [vmem:[%s6] sm:$0xf]
      %v2901 = vlaneseq
      %v2902 = vshrl.u32 %v2901, 7
      %v2903 = vsub.s32 0, %v2902
      %v2904 = vrot.slane %v2899, %v2903
      %v2905 = vlaneseq
      %v2906 = vshrl.u32 %v2905, 7
      %v2907 = vsub.s32 1, %v2906
      %v2908 = vrot.slane %v2899, %v2907
      %v2909 = vlaneseq
      %v2910 = vshrl.u32 %v2909, 7
      %v2911 = vsub.s32 2, %v2910
      %v2912 = vrot.slane %v2899, %v2911
      %v2913 = vlaneseq
      %v2914 = vshrl.u32 %v2913, 7
      %v2915 = vsub.s32 3, %v2914
      %v2916 = vrot.slane %v2899, %v2915
      %v2921 = vadd.f32 %v2895, %v2904
      %v2922 = vadd.f32 %v2896, %v2908
      %v2923 = vadd.f32 %v2897, %v2912
      %v2924 = vadd.f32 %v2898, %v2916
      %v2925 = vmax.f32 %v2921, 0.0
      %v2926 = vmax.f32 %v2922, 0.0
      %v2927 = vmax.f32 %v2923, 0.0
      %v2928 = vmax.f32 %v2924, 0.0
      %v2929 = vpack.c.bf16 %v2925, %v2925
      %v2930 = vpack.c.bf16 %v2926, %v2926
      %v2931 = vpack.c.bf16 %v2927, %v2927
      %v2932 = vpack.c.bf16 %v2928, %v2928
      %v2933 = vld [vmem:[%s7] sm:$0xf]
      %v2934 = vld [vmem:[%s7 + $0x4] sm:$0xf]
      %v2935 = vld [vmem:[%s7 + $0x8] sm:$0xf]
      %v2936 = vld [vmem:[%s7 + $0xc] sm:$0xf]
      %v2937 = vld [vmem:[%s7 + $0x10] sm:$0xf]
      %v2938 = vld [vmem:[%s7 + $0x14] sm:$0xf]
      %v2939 = vld [vmem:[%s7 + $0x18] sm:$0xf]
      %v2940 = vld [vmem:[%s7 + $0x1c] sm:$0xf]
      %v2941 = vld [vmem:[%s7 + $0x20] sm:$0xf]
      %v2942 = vld [vmem:[%s7 + $0x24] sm:$0xf]
      %v2943 = vld [vmem:[%s7 + $0x28] sm:$0xf]
      %v2944 = vld [vmem:[%s7 + $0x2c] sm:$0xf]
      %v2945 = vld [vmem:[%s7 + $0x30] sm:$0xf]
      %v2946 = vld [vmem:[%s7 + $0x34] sm:$0xf]
      %v2947 = vld [vmem:[%s7 + $0x38] sm:$0xf]
      %v2948 = vld [vmem:[%s7 + $0x3c] sm:$0xf]
      %v2949 = vld [vmem:[%s7 + $0x40] sm:$0xf]
      %v2950 = vld [vmem:[%s7 + $0x44] sm:$0xf]
      %v2951 = vld [vmem:[%s7 + $0x48] sm:$0xf]
      %v2952 = vld [vmem:[%s7 + $0x4c] sm:$0xf]
      %v2953 = vld [vmem:[%s7 + $0x50] sm:$0xf]
      %v2954 = vld [vmem:[%s7 + $0x54] sm:$0xf]
      %v2955 = vld [vmem:[%s7 + $0x58] sm:$0xf]
      %v2956 = vld [vmem:[%s7 + $0x5c] sm:$0xf]
      %v2957 = vld [vmem:[%s7 + $0x60] sm:$0xf]
      %v2958 = vld [vmem:[%s7 + $0x64] sm:$0xf]
      %v2959 = vld [vmem:[%s7 + $0x68] sm:$0xf]
      %v2960 = vld [vmem:[%s7 + $0x6c] sm:$0xf]
      %v2961 = vld [vmem:[%s7 + $0x70] sm:$0xf]
      %v2962 = vld [vmem:[%s7 + $0x74] sm:$0xf]
      %v2963 = vld [vmem:[%s7 + $0x78] sm:$0xf]
      %v2964 = vld [vmem:[%s7 + $0x7c] sm:$0xf]
      %v2965 = vld [vmem:[%s7 + $0x80] sm:$0xf]
      %v2966 = vld [vmem:[%s7 + $0x84] sm:$0xf]
      %v2967 = vld [vmem:[%s7 + $0x88] sm:$0xf]
      %v2968 = vld [vmem:[%s7 + $0x8c] sm:$0xf]
      %v2969 = vld [vmem:[%s7 + $0x90] sm:$0xf]
      %v2970 = vld [vmem:[%s7 + $0x94] sm:$0xf]
      %v2971 = vld [vmem:[%s7 + $0x98] sm:$0xf]
      %v2972 = vld [vmem:[%s7 + $0x9c] sm:$0xf]
      %v2973 = vld [vmem:[%s7 + $0xa0] sm:$0xf]
      %v2974 = vld [vmem:[%s7 + $0xa4] sm:$0xf]
      %v2975 = vld [vmem:[%s7 + $0xa8] sm:$0xf]
      %v2976 = vld [vmem:[%s7 + $0xac] sm:$0xf]
      %v2977 = vld [vmem:[%s7 + $0xb0] sm:$0xf]
      %v2978 = vld [vmem:[%s7 + $0xb4] sm:$0xf]
      %v2979 = vld [vmem:[%s7 + $0xb8] sm:$0xf]
      %v2980 = vld [vmem:[%s7 + $0xbc] sm:$0xf]
      %v2981 = vld [vmem:[%s7 + $0xc0] sm:$0xf]
      %v2982 = vld [vmem:[%s7 + $0xc4] sm:$0xf]
      %v2983 = vld [vmem:[%s7 + $0xc8] sm:$0xf]
      %v2984 = vld [vmem:[%s7 + $0xcc] sm:$0xf]
      %v2985 = vld [vmem:[%s7 + $0xd0] sm:$0xf]
      %v2986 = vld [vmem:[%s7 + $0xd4] sm:$0xf]
      %v2987 = vld [vmem:[%s7 + $0xd8] sm:$0xf]
      %v2988 = vld [vmem:[%s7 + $0xdc] sm:$0xf]
      %v2989 = vld [vmem:[%s7 + $0xe0] sm:$0xf]
      %v2990 = vld [vmem:[%s7 + $0xe4] sm:$0xf]
      %v2991 = vld [vmem:[%s7 + $0xe8] sm:$0xf]
      %v2992 = vld [vmem:[%s7 + $0xec] sm:$0xf]
      %v2993 = vld [vmem:[%s7 + $0xf0] sm:$0xf]
      %v2994 = vld [vmem:[%s7 + $0xf4] sm:$0xf]
      %v2995 = vld [vmem:[%s7 + $0xf8] sm:$0xf]
      %v2996 = vld [vmem:[%s7 + $0xfc] sm:$0xf]
      %v2997 = vld [vmem:[%s8] sm:$0x1]
      %v3062 = vunpack.c.l.b16 %v2933
      %v3063 = vunpack.c.l.b16 %v2934
      %v3064 = vunpack.c.l.b16 %v2935
      %v3065 = vunpack.c.l.b16 %v2936
      %v3066 = vunpack.c.l.b16 %v2937
      %v3067 = vunpack.c.l.b16 %v2938
      %v3068 = vunpack.c.l.b16 %v2939
      %v3069 = vunpack.c.l.b16 %v2940
      %v3070 = vunpack.c.l.b16 %v2941
      %v3071 = vunpack.c.l.b16 %v2942
      %v3072 = vunpack.c.l.b16 %v2943
      %v3073 = vunpack.c.l.b16 %v2944
      %v3074 = vunpack.c.l.b16 %v2945
      %v3075 = vunpack.c.l.b16 %v2946
      %v3076 = vunpack.c.l.b16 %v2947
      %v3077 = vunpack.c.l.b16 %v2948
      %v3078 = vunpack.c.l.b16 %v2949
      %v3079 = vunpack.c.l.b16 %v2950
      %v3080 = vunpack.c.l.b16 %v2951
      %v3081 = vunpack.c.l.b16 %v2952
      %v3082 = vunpack.c.l.b16 %v2953
      %v3083 = vunpack.c.l.b16 %v2954
      %v3084 = vunpack.c.l.b16 %v2955
      %v3085 = vunpack.c.l.b16 %v2956
      %v3086 = vunpack.c.l.b16 %v2957
      %v3087 = vunpack.c.l.b16 %v2958
      %v3088 = vunpack.c.l.b16 %v2959
      %v3089 = vunpack.c.l.b16 %v2960
      %v3090 = vunpack.c.l.b16 %v2961
      %v3091 = vunpack.c.l.b16 %v2962
      %v3092 = vunpack.c.l.b16 %v2963
      %v3093 = vunpack.c.l.b16 %v2964
      %v3094 = vunpack.c.l.b16 %v2965
      %v3095 = vunpack.c.l.b16 %v2966
      %v3096 = vunpack.c.l.b16 %v2967
      %v3097 = vunpack.c.l.b16 %v2968
      %v3098 = vunpack.c.l.b16 %v2969
      %v3099 = vunpack.c.l.b16 %v2970
      %v3100 = vunpack.c.l.b16 %v2971
      %v3101 = vunpack.c.l.b16 %v2972
      %v3102 = vunpack.c.l.b16 %v2973
      %v3103 = vunpack.c.l.b16 %v2974
      %v3104 = vunpack.c.l.b16 %v2975
      %v3105 = vunpack.c.l.b16 %v2976
      %v3106 = vunpack.c.l.b16 %v2977
      %v3107 = vunpack.c.l.b16 %v2978
      %v3108 = vunpack.c.l.b16 %v2979
      %v3109 = vunpack.c.l.b16 %v2980
      %v3110 = vunpack.c.l.b16 %v2981
      %v3111 = vunpack.c.l.b16 %v2982
      %v3112 = vunpack.c.l.b16 %v2983
      %v3113 = vunpack.c.l.b16 %v2984
      %v3114 = vunpack.c.l.b16 %v2985
      %v3115 = vunpack.c.l.b16 %v2986
      %v3116 = vunpack.c.l.b16 %v2987
      %v3117 = vunpack.c.l.b16 %v2988
      %v3118 = vunpack.c.l.b16 %v2989
      %v3119 = vunpack.c.l.b16 %v2990
      %v3120 = vunpack.c.l.b16 %v2991
      %v3121 = vunpack.c.l.b16 %v2992
      %v3122 = vunpack.c.l.b16 %v2993
      %v3123 = vunpack.c.l.b16 %v2994
      %v3124 = vunpack.c.l.b16 %v2995
      %v3125 = vunpack.c.l.b16 %v2996
      %v3126 = vpack.c.b16 %v3063, %v3062
      %v3127 = vpack.c.b16 %v3065, %v3064
      %v3128 = vpack.c.b16 %v3067, %v3066
      %v3129 = vpack.c.b16 %v3069, %v3068
      %v3130 = vpack.c.b16 %v3071, %v3070
      %v3131 = vpack.c.b16 %v3073, %v3072
      %v3132 = vpack.c.b16 %v3075, %v3074
      %v3133 = vpack.c.b16 %v3077, %v3076
      %v3134 = vpack.c.b16 %v3079, %v3078
      %v3135 = vpack.c.b16 %v3081, %v3080
      %v3136 = vpack.c.b16 %v3083, %v3082
      %v3137 = vpack.c.b16 %v3085, %v3084
      %v3138 = vpack.c.b16 %v3087, %v3086
      %v3139 = vpack.c.b16 %v3089, %v3088
      %v3140 = vpack.c.b16 %v3091, %v3090
      %v3141 = vpack.c.b16 %v3093, %v3092
      %v3142 = vpack.c.b16 %v3095, %v3094
      %v3143 = vpack.c.b16 %v3097, %v3096
      %v3144 = vpack.c.b16 %v3099, %v3098
      %v3145 = vpack.c.b16 %v3101, %v3100
      %v3146 = vpack.c.b16 %v3103, %v3102
      %v3147 = vpack.c.b16 %v3105, %v3104
      %v3148 = vpack.c.b16 %v3107, %v3106
      %v3149 = vpack.c.b16 %v3109, %v3108
      %v3150 = vpack.c.b16 %v3111, %v3110
      %v3151 = vpack.c.b16 %v3113, %v3112
      %v3152 = vpack.c.b16 %v3115, %v3114
      %v3153 = vpack.c.b16 %v3117, %v3116
      %v3154 = vpack.c.b16 %v3119, %v3118
      %v3155 = vpack.c.b16 %v3121, %v3120
      %v3156 = vpack.c.b16 %v3123, %v3122
      %v3157 = vpack.c.b16 %v3125, %v3124
      %3190 = vmatprep.subr.bf16.mxu0 0
      %3191 = vmatpush1.bf16.msra.mxu0 %v3126
      %3192 = vmatprep.subr.bf16.mxu0 0
      %3193 = vmatpush1.bf16.msra.mxu0 %v3127
      %3194 = vmatprep.subr.bf16.mxu0 0
      %3195 = vmatpush1.bf16.msra.mxu0 %v3128
      %3196 = vmatprep.subr.bf16.mxu0 0
      %3197 = vmatpush1.bf16.msra.mxu0 %v3129
      %3198 = vmatprep.subr.bf16.mxu0 0
      %3199 = vmatpush1.bf16.msra.mxu0 %v3130
      %3200 = vmatprep.subr.bf16.mxu0 0
      %3201 = vmatpush1.bf16.msra.mxu0 %v3131
      %3202 = vmatprep.subr.bf16.mxu0 0
      %3203 = vmatpush1.bf16.msra.mxu0 %v3132
      %3204 = vmatprep.subr.bf16.mxu0 0
      %3205 = vmatpush1.bf16.msra.mxu0 %v3133
      %3206 = vmatprep.subr.bf16.mxu0 0
      %3207 = vmatpush1.bf16.msra.mxu0 %v3134
      %3208 = vmatprep.subr.bf16.mxu0 0
      %3209 = vmatpush1.bf16.msra.mxu0 %v3135
      %3210 = vmatprep.subr.bf16.mxu0 0
      %3211 = vmatpush1.bf16.msra.mxu0 %v3136
      %3212 = vmatprep.subr.bf16.mxu0 0
      %3213 = vmatpush1.bf16.msra.mxu0 %v3137
      %3214 = vmatprep.subr.bf16.mxu0 0
      %3215 = vmatpush1.bf16.msra.mxu0 %v3138
      %3216 = vmatprep.subr.bf16.mxu0 0
      %3217 = vmatpush1.bf16.msra.mxu0 %v3139
      %3218 = vmatprep.subr.bf16.mxu0 0
      %3219 = vmatpush1.bf16.msra.mxu0 %v3140
      %3220 = vmatprep.subr.bf16.mxu0 0
      %3221 = vmatpush1.bf16.msra.mxu0 %v3141
      %3222 = vmatprep.mubr.bf16.mxu0 %v2930
      %3223 = vmatmul.mubr.bf16.gmra.mrb[0].mxu0 %v2929
      %v3224 = vpop.f32.mrb[0].mxu0
      %v3225 = vadd.f32 %v2997, %v3224
      %v3226 = vpop.f32.mrb[0].mxu0
      %v3227 = vpop.f32.mrb[0].mxu0
      %v3228 = vpop.f32.mrb[0].mxu0
      %3229 = vdwg.mxu0
      %3230 = vmatprep.subr.bf16.mxu0 0
      %3231 = vmatpush1.bf16.msra.mxu0 %v3142
      %3232 = vmatprep.subr.bf16.mxu0 0
      %3233 = vmatpush1.bf16.msra.mxu0 %v3143
      %3234 = vmatprep.subr.bf16.mxu0 0
      %3235 = vmatpush1.bf16.msra.mxu0 %v3144
      %3236 = vmatprep.subr.bf16.mxu0 0
      %3237 = vmatpush1.bf16.msra.mxu0 %v3145
      %3238 = vmatprep.subr.bf16.mxu0 0
      %3239 = vmatpush1.bf16.msra.mxu0 %v3146
      %3240 = vmatprep.subr.bf16.mxu0 0
      %3241 = vmatpush1.bf16.msra.mxu0 %v3147
      %3242 = vmatprep.subr.bf16.mxu0 0
      %3243 = vmatpush1.bf16.msra.mxu0 %v3148
      %3244 = vmatprep.subr.bf16.mxu0 0
      %3245 = vmatpush1.bf16.msra.mxu0 %v3149
      %3246 = vmatprep.subr.bf16.mxu0 0
      %3247 = vmatpush1.bf16.msra.mxu0 %v3150
      %3248 = vmatprep.subr.bf16.mxu0 0
      %3249 = vmatpush1.bf16.msra.mxu0 %v3151
      %3250 = vmatprep.subr.bf16.mxu0 0
      %3251 = vmatpush1.bf16.msra.mxu0 %v3152
      %3252 = vmatprep.subr.bf16.mxu0 0
      %3253 = vmatpush1.bf16.msra.mxu0 %v3153
      %3254 = vmatprep.subr.bf16.mxu0 0
      %3255 = vmatpush1.bf16.msra.mxu0 %v3154
      %3256 = vmatprep.subr.bf16.mxu0 0
      %3257 = vmatpush1.bf16.msra.mxu0 %v3155
      %3258 = vmatprep.subr.bf16.mxu0 0
      %3259 = vmatpush1.bf16.msra.mxu0 %v3156
      %3260 = vmatprep.subr.bf16.mxu0 0
      %3261 = vmatpush1.bf16.msra.mxu0 %v3157
      %3262 = vmatprep.mubr.bf16.mxu0 %v2932
      %3263 = vmatmul.mubr.bf16.gmra.mrb[0].mxu0 %v2931
      %v3264 = vpop.f32.mrb[0].mxu0
      %v3265 = vadd.f32 %v3225, %v3264
      %v3266 = vpop.f32.mrb[0].mxu0
      %v3267 = vpop.f32.mrb[0].mxu0
      %v3268 = vpop.f32.mrb[0].mxu0
      %3269 = vdwg.mxu0
      %v3270 = vlaneseq
      %v3271 = vand.u32 %v3270, 127
      %vm3272 = vcmp.lt.s32.totalorder %v3271, 12
      %v3273 = vsel %vm3272, %v3265, 0.0
      %vm3274 = vcmask 1040384
      %v3275 = vsel %vm3274, %v3273, 0.0
      %3276 = vadd.xlane.f32.xlu0 %v3275
      %v3277 = vpop.xlane.xlu0 %3276
      %v3278 = vmul.f32 %v3277, 0.083333336
      %vm3279 = vcmp.eq.s32.totalorder %v3271, 12
      %v3280 = vsel %vm3279, %v3265, 0.0
      %v3281 = vsel %vm3274, %v3280, 0.0
      %3282 = vadd.xlane.f32.xlu0 %v3281
      %v3283 = vpop.xlane.xlu0 %3282
      %v3284 = vsub.f32 %v3283, %v3278
      %v3285 = vadd.f32 %v3265, %v3284
      %v3286 = vlaneseq
      %v3287 = vshrl.u32 %v3286, 7
      %v3288 = vsub.s32 0, %v3287
      %v3289 = vrot.slane %v3285, %v3288
      %3290 = vst [vmem:[%s330] sm:$0xff] %v3289
      %p3291 = scmp.lt.s32.totalorder %s20, 1
      %s3292 = scalar_select %p3291, %s20, 1
      %s3293 = smul.addr %s3292, 8
      %s3294 = scalar_lea.vmem %s9, %s3293
      // Predicated region
      $region57: #{_lambda_.1} parent=55 // pred_check
        %p3295 = pneg %p232
      $region58: #{_lambda_.1} parent=55 // pred_check_branch
        %3297 = sbr.rel (%p3295) target = $region60
      $region59: #{_lambda_.1} parent=55 // pred_region
        _
      $region60: #{_lambda_.1} parent=55 // pred_fallthru
        _
    $region56: #{_lambda_.1} parent=5 // pred_fallthru
      _
    %p3298 = scmp.le.s32.totalorder 2, %s15
    // Predicated region
    $region61: #{_lambda_.1} parent=5 // pred_check
      %p3299 = pneg %p3298
    $region62: #{_lambda_.1} parent=5 // pred_check_branch
      %3301 = sbr.rel (%p3299) target = $region64
    $region63: #{_lambda_.1} parent=5 // pred_region
      %s3302 = ssub.s32 %s15, 2
      // Predicated region
      $region65: #{_lambda_.1} parent=63 // pred_check
        %p3303 = pneg %p238
      $region66: #{_lambda_.1} parent=63 // pred_check_branch
        %3305 = sbr.rel (%p3303) target = $region68
      $region67: #{_lambda_.1} parent=63 // pred_region
        %p3306 = scmp.lt.s32.totalorder %s21, 1
        %s3307 = scalar_select %p3306, %s21, 1
        %s3308 = smul.addr %s3307, 8
        %s3309 = scalar_lea.vmem %s9, %s3308
      $region68: #{_lambda_.1} parent=63 // pred_fallthru
        _
    $region64: #{_lambda_.1} parent=5 // pred_fallthru
      _
  $region6: #{_lambda_.1} parent=0 // loop_footer
    %s19 = sadd.s32 1, %s15
  $region7: #{_lambda_.1} parent=0 // loop_footer_branch
    %14 = sbr.rel target = $region3
  $region8: #{_lambda_.1} parent=0 // loop_exit
    _

</llo_original>
